<compile_context>
chip_gen: v6e
topology: v6e:2x2x1
jax: 0.10.0
libtpu: 0.0.40
codegen_flags: <defaults>
</compile_context>

<pallas_src>
import functools

import jax
import jax.numpy as jnp
from jax.experimental import pallas as pl
from jax.experimental.pallas import tpu as pltpu

BN_EPS = 1e-5


# --------------------------------------------------------------------------- #
# Fused Pallas kernel: downsample (1x1 convs, BN folded) + channel-major
# flatten + 3-layer MLP, all in one VMEM-resident pass.  fc1's weight is
# DMA'd HBM->VMEM asynchronously and hidden under the downsample.
# --------------------------------------------------------------------------- #
def _fused_kernel(x_ref, w1, b1, w2, b2, wf1_hbm, bf1, wf2, bf2, wf3, bf3,
                  o_ref, feat_ref, wf1_vmem, dma_sem):
    # Kick off the dominant HBM transfer (fc1 weight, ~2 MiB bf16) immediately
    # so it overlaps with the downsample / flatten below.
    fc1_cp = pltpu.make_async_copy(wf1_hbm, wf1_vmem, dma_sem)
    fc1_cp.start()

    f32 = jnp.float32
    c_ds = w2.shape[0]                    # downsample output channels (16)
    n_batch = o_ref.shape[0]              # batch (2)
    blk = feat_ref.shape[1] // c_ds       # 128-lane block per channel

    # Downsample over the whole batch in one matmul pair.
    # x_ref is (c_in, N*128): channels on sublanes, (sample, padded-pixel) on
    # lanes.  Padded pixel lanes carry ReLU(bias) garbage; the matching fc1
    # weight rows are zero, so they never reach the output.
    a = jnp.dot(w1[...], x_ref[...], preferred_element_type=f32) + b1[...]
    a = jnp.maximum(a, 0.0)                                     # (32, N*128)
    z = jnp.dot(w2[...], a, preferred_element_type=f32) + b2[...]
    z = jnp.maximum(z, 0.0)                                     # (16, N*128)

    # Channel-major flatten (PyTorch x.view(N, -1) on NCHW): channel c of
    # sample n lands in lanes [c*128, (c+1)*128) of feature row n.  Every
    # store is a full 128-lane unmasked vst, and together they cover every
    # block of feat_ref, so no zero-fill is needed.
    for n in range(n_batch):
        for c in range(c_ds):
            feat_ref[n:n + 1, c * blk:(c + 1) * blk] = (
                z[c:c + 1, n * blk:(n + 1) * blk])

    feat = feat_ref[...].astype(jnp.bfloat16)                   # (N, 2048)

    # MLP: Linear(1936,512) -> ReLU -> Linear(512,128) -> ReLU -> Linear(128,·)
    fc1_cp.wait()                                               # weight landed
    h = jnp.dot(feat, wf1_vmem[...], preferred_element_type=f32) + bf1[...]
    h = jnp.maximum(h, 0.0)                                     # (N, 512)
    h = jnp.dot(h.astype(jnp.bfloat16), wf2[...],
                preferred_element_type=f32) + bf2[...]
    h = jnp.maximum(h, 0.0)                                     # (N, 128)
    o_ref[...] = jnp.dot(h.astype(jnp.bfloat16), wf3[...],
                         preferred_element_type=f32) + bf3[...]


# --------------------------------------------------------------------------- #
# Forward wrapper (single pallas_call, everything else is free glue)
# --------------------------------------------------------------------------- #
@functools.partial(jax.jit, static_argnames=("n_actions",))
def dqn_forward(x_nchw, pk, n_actions):
    n, c, h, w = x_nchw.shape
    hw = h * w
    blk = -(-hw // 128) * 128                 # lane-padded pixels per channel
    # NCHW -> (C, N*128): channels on sublanes, (sample, padded pixel) on
    # lanes.  Tiny (16 KiB) pad + transpose, fused by XLA.
    x2 = jnp.pad(x_nchw.reshape(n, c, hw).astype(jnp.float32),
                 ((0, 0), (0, 0), (0, blk - hw)))
    x2 = x2.transpose(1, 0, 2).reshape(c, n * blk)

    feat_cols = pk["w1fc"].shape[0]           # c_ds * 128 (padded flatten width)
    out_cols = pk["w3fc"].shape[1]            # 128 (padded action lanes)

    vmem = pltpu.MemorySpace.VMEM
    in_specs = [pl.BlockSpec(memory_space=vmem)] * 11
    in_specs[5] = pl.BlockSpec(memory_space=pl.ANY)   # w1fc stays in HBM

    out_pad = pl.pallas_call(
        _fused_kernel,
        out_shape=jax.ShapeDtypeStruct((n, out_cols), jnp.float32),
        in_specs=in_specs,
        out_specs=pl.BlockSpec(memory_space=vmem),
        scratch_shapes=[
            pltpu.VMEM((n, feat_cols), jnp.float32),            # flatten scratch
            pltpu.VMEM(pk["w1fc"].shape, pk["w1fc"].dtype),     # fc1 weight buf
            pltpu.SemaphoreType.DMA(()),                        # fc1 DMA sem
        ],
    )(x2, pk["w1f"], pk["b1f"], pk["w2f"], pk["b2f"],
      pk["w1fc"], pk["b1fc"], pk["w2fc"], pk["b2fc"], pk["w3fc"], pk["b3fc"])
    return out_pad[:, :n_actions]


# --------------------------------------------------------------------------- #
# Parameters (deterministic, synthetic, PyTorch-layout) + one-time prepack
# --------------------------------------------------------------------------- #
def init_params(key, in_channels=4, n_actions=14):
    c_in = in_channels * 4          # conv input channels = 16
    keys = jax.random.split(key, 20)
    f32 = jnp.float32

    def nrm(i, shape, scale):
        return (scale * jax.random.normal(keys[i], shape)).astype(f32)

    p = {}
    # Conv2d(16, 32, 1): weight (32, 16, 1, 1) stored squeezed as (32, 16)
    p["conv1_w"] = nrm(0, (32, c_in), 0.1)
    p["conv1_b"] = nrm(1, (32,), 0.1)
    p["bn1_g"] = (1.0 + 0.05 * jax.random.normal(keys[2], (32,))).astype(f32)
    p["bn1_b"] = nrm(3, (32,), 0.05)
    p["bn1_m"] = nrm(4, (32,), 0.05)
    p["bn1_v"] = (0.5 + jax.random.uniform(keys[5], (32,))).astype(f32)
    # Conv2d(32, 16, 1): weight (16, 32, 1, 1) stored squeezed as (16, 32)
    p["conv2_w"] = nrm(6, (16, 32), 0.1)
    p["conv2_b"] = nrm(7, (16,), 0.1)
    p["bn2_g"] = (1.0 + 0.05 * jax.random.normal(keys[8], (16,))).astype(f32)
    p["bn2_b"] = nrm(9, (16,), 0.05)
    p["bn2_m"] = nrm(10, (16,), 0.05)
    p["bn2_v"] = (0.5 + jax.random.uniform(keys[11], (16,))).astype(f32)
    # Linear layers: PyTorch stores weight as (out, in)
    p["fc1_w"] = nrm(12, (512, 11 * 11 * 16), 0.02)
    p["fc1_b"] = nrm(13, (512,), 0.02)
    p["fc2_w"] = nrm(14, (128, 512), 0.05)
    p["fc2_b"] = nrm(15, (128,), 0.05)
    p["fc3_w"] = nrm(16, (n_actions, 128), 0.05)
    p["fc3_b"] = nrm(17, (n_actions,), 0.05)
    return p


def prepack_params(p, n_actions):
    """One-time packing: fold eval-mode BN into convs, transpose / pad / cast
    MLP weights into the layouts the fused kernel consumes."""
    f32 = jnp.float32
    bf16 = jnp.bfloat16

    def fold_bn(w, b, g, beta, mean, var):
        s = g * jax.lax.rsqrt(var + BN_EPS)
        return (w * s[:, None]).astype(f32), ((b - mean) * s + beta).astype(f32)

    w1f, b1f = fold_bn(p["conv1_w"], p["conv1_b"],
                       p["bn1_g"], p["bn1_b"], p["bn1_m"], p["bn1_v"])
    w2f, b2f = fold_bn(p["conv2_w"], p["conv2_b"],
                       p["bn2_g"], p["bn2_b"], p["bn2_m"], p["bn2_v"])

    c_ds = w2f.shape[0]                               # 16
    hw = p["fc1_w"].shape[1] // c_ds                  # 121
    blk = -(-hw // 128) * 128                         # 128: per-channel lane block

    # fc1: (512, c_ds*hw) with input index c*hw + pix  ->  rows reordered to
    # (c, padded-pix) and zero-padded to the kernel's feature layout.  The
    # zero rows for padded pixels are what make dropping the in-kernel
    # zero-fill safe.
    w1fc = p["fc1_w"].T.reshape(c_ds, hw, -1)
    w1fc = jnp.pad(w1fc, ((0, 0), (0, blk - hw), (0, 0)))
    w1fc = w1fc.reshape(c_ds * blk, -1).astype(bf16)

    out_pad = -(-n_actions // 128) * 128              # 128: lane-dense final store
    w3fc = jnp.zeros((p["fc3_w"].shape[1], out_pad), f32)
    w3fc = w3fc.at[:, :n_actions].set(p["fc3_w"].T).astype(bf16)
    b3fc = jnp.zeros((1, out_pad), f32).at[0, :n_actions].set(p["fc3_b"])

    return {
        "w1f": w1f, "b1f": b1f.reshape(-1, 1),
        "w2f": w2f, "b2f": b2f.reshape(-1, 1),
        "w1fc": w1fc, "b1fc": p["fc1_b"].reshape(1, -1).astype(f32),
        "w2fc": p["fc2_w"].T.astype(bf16),
        "b2fc": p["fc2_b"].reshape(1, -1).astype(f32),
        "w3fc": w3fc, "b3fc": b3fc,
    }


# --------------------------------------------------------------------------- #
# Pure-JAX reference (eval-mode BN, unfolded).  fc weights/activations are
# rounded through bf16 exactly as the kernel does, so the 1e-3 check verifies
# the kernel rather than the quantization choice.
# --------------------------------------------------------------------------- #
def reference(x_nchw, p):
    def bn(x, g, b, m, v):
        return (x - m[None, :, None, None]) * jax.lax.rsqrt(
            v[None, :, None, None] + BN_EPS
        ) * g[None, :, None, None] + b[None, :, None, None]

    def bf(t):
        return t.astype(jnp.bfloat16).astype(jnp.float32)

    n = x_nchw.shape[0]
    x = jnp.einsum("nchw,oc->nohw", x_nchw, p["conv1_w"]) + p["conv1_b"][None, :, None, None]
    x = jnp.maximum(bn(x, p["bn1_g"], p["bn1_b"], p["bn1_m"], p["bn1_v"]), 0.0)
    x = jnp.einsum("nchw,oc->nohw", x, p["conv2_w"]) + p["conv2_b"][None, :, None, None]
    x = jnp.maximum(bn(x, p["bn2_g"], p["bn2_b"], p["bn2_m"], p["bn2_v"]), 0.0)
    feat = x.reshape(n, -1)
    h = jnp.maximum(bf(feat) @ bf(p["fc1_w"]).T + p["fc1_b"], 0.0)
    h = jnp.maximum(bf(h) @ bf(p["fc2_w"]).T + p["fc2_b"], 0.0)
    return bf(h) @ bf(p["fc3_w"]).T + p["fc3_b"]


# --------------------------------------------------------------------------- #
if __name__ == "__main__":
    key = jax.random.PRNGKey(0)
    k_x, k_p = jax.random.split(key)

    in_channels, n_actions = 4, 14
    # Conv input has in_channels * 4 = 16 channels; spatial must be 11x11
    # (required by Linear(11*11*16, 512)); batch = 2.
    x = jax.random.normal(k_x, (2, in_channels * 4, 11, 11), dtype=jnp.float32)
    raw_params = init_params(k_p, in_channels=in_channels, n_actions=n_actions)
    packed = prepack_params(raw_params, n_actions=n_actions)

    out = dqn_forward(x, packed, n_actions=n_actions)
    out = jax.block_until_ready(out)

    ref = reference(x, raw_params)
    assert out.shape == (2, n_actions), out.shape
    assert jnp.allclose(out, ref, rtol=1e-3, atol=1e-3), (
        f"max abs err {jnp.max(jnp.abs(out - ref))}"
    )
    print("KERNEL_OK")
</pallas_src>

<mosaic_0001>
module attributes {stable_mosaic.version = 11 : i64} {
  func.func @_fused_kernel(%arg0: memref<16x256xf32, #tpu.memory_space<vmem>>, %arg1: memref<32x16xf32, #tpu.memory_space<vmem>>, %arg2: memref<32x1xf32, #tpu.memory_space<vmem>>, %arg3: memref<16x32xf32, #tpu.memory_space<vmem>>, %arg4: memref<16x1xf32, #tpu.memory_space<vmem>>, %arg5: memref<2048x512xbf16, #tpu.memory_space<any>>, %arg6: memref<1x512xf32, #tpu.memory_space<vmem>>, %arg7: memref<512x128xbf16, #tpu.memory_space<vmem>>, %arg8: memref<1x128xf32, #tpu.memory_space<vmem>>, %arg9: memref<128x128xbf16, #tpu.memory_space<vmem>>, %arg10: memref<1x128xf32, #tpu.memory_space<vmem>>, %arg11: memref<2x128xf32, #tpu.memory_space<vmem>>, %arg12: memref<2x2048xf32, #tpu.memory_space<vmem>>, %arg13: memref<2048x512xbf16, #tpu.memory_space<vmem>>, %arg14: memref<!tpu.dma_semaphore, #tpu.memory_space<semaphore_mem>>) attributes {dimension_semantics = [], scalar_prefetch = 0 : i64, scratch_operands = 3 : i64, tpu.core_type = #tpu.core_type<tc>} {
    tpu.enqueue_dma source(%arg5 : memref<2048x512xbf16, #tpu.memory_space<any>>) target(%arg13 : memref<2048x512xbf16, #tpu.memory_space<vmem>>) target_semaphore(%arg14 : memref<!tpu.dma_semaphore, #tpu.memory_space<semaphore_mem>>)
    %c0 = arith.constant 0 : index
    %c0_0 = arith.constant 0 : index
    %0 = vector.load %arg1[%c0, %c0_0] : memref<32x16xf32, #tpu.memory_space<vmem>>, vector<32x16xf32>
    %c0_1 = arith.constant 0 : index
    %c0_2 = arith.constant 0 : index
    %1 = vector.load %arg0[%c0_1, %c0_2] : memref<16x256xf32, #tpu.memory_space<vmem>>, vector<16x256xf32>
    %cst = arith.constant dense<0.000000e+00> : vector<32x256xf32>
    %2 = tpu.matmul %0, %1, %cst {dimension_numbers = #tpu.dot_dimension_numbers<[1], [0], [0], [1], [0, 0, 1, 1], [], []>} : vector<32x16xf32>, vector<16x256xf32>, vector<32x256xf32> -> vector<32x256xf32>
    %c0_3 = arith.constant 0 : index
    %c0_4 = arith.constant 0 : index
    %3 = vector.load %arg2[%c0_3, %c0_4] : memref<32x1xf32, #tpu.memory_space<vmem>>, vector<32x1xf32>
    %4 = vector.broadcast %3 : vector<32x1xf32> to vector<32x256xf32>
    %5 = arith.addf %2, %4 : vector<32x256xf32>
    %cst_5 = arith.constant 0.000000e+00 : f32
    %6 = vector.broadcast %cst_5 : f32 to vector<32x256xf32>
    %7 = arith.maximumf %5, %6 : vector<32x256xf32>
    %c0_6 = arith.constant 0 : index
    %c0_7 = arith.constant 0 : index
    %8 = vector.load %arg3[%c0_6, %c0_7] : memref<16x32xf32, #tpu.memory_space<vmem>>, vector<16x32xf32>
    %cst_8 = arith.constant dense<0.000000e+00> : vector<16x256xf32>
    %9 = tpu.matmul %8, %7, %cst_8 {dimension_numbers = #tpu.dot_dimension_numbers<[1], [0], [0], [1], [0, 0, 1, 1], [], []>} : vector<16x32xf32>, vector<32x256xf32>, vector<16x256xf32> -> vector<16x256xf32>
    %c0_9 = arith.constant 0 : index
    %c0_10 = arith.constant 0 : index
    %10 = vector.load %arg4[%c0_9, %c0_10] : memref<16x1xf32, #tpu.memory_space<vmem>>, vector<16x1xf32>
    %11 = vector.broadcast %10 : vector<16x1xf32> to vector<16x256xf32>
    %12 = arith.addf %9, %11 : vector<16x256xf32>
    %cst_11 = arith.constant 0.000000e+00 : f32
    %13 = vector.broadcast %cst_11 : f32 to vector<16x256xf32>
    %14 = arith.maximumf %12, %13 : vector<16x256xf32>
    %15 = vector.extract_strided_slice %14 {offsets = [0, 0], sizes = [1, 128], strides = [1, 1]} : vector<16x256xf32> to vector<1x128xf32>
    %c0_12 = arith.constant 0 : index
    %c0_13 = arith.constant 0 : index
    %16 = vector.load %arg12[%c0_12, %c0_13] : memref<2x2048xf32, #tpu.memory_space<vmem>>, vector<1x128xf32>
    tpu.vector_store %arg12[%c0_12, %c0_13], %15 {strides = array<i32>} : memref<2x2048xf32, #tpu.memory_space<vmem>>, vector<1x128xf32>,
    %17 = vector.extract_strided_slice %14 {offsets = [1, 0], sizes = [1, 128], strides = [1, 1]} : vector<16x256xf32> to vector<1x128xf32>
    %c0_14 = arith.constant 0 : index
    %c128 = arith.constant 128 : index
    %18 = vector.load %arg12[%c0_14, %c128] : memref<2x2048xf32, #tpu.memory_space<vmem>>, vector<1x128xf32>
    tpu.vector_store %arg12[%c0_14, %c128], %17 {strides = array<i32>} : memref<2x2048xf32, #tpu.memory_space<vmem>>, vector<1x128xf32>,
    %19 = vector.extract_strided_slice %14 {offsets = [2, 0], sizes = [1, 128], strides = [1, 1]} : vector<16x256xf32> to vector<1x128xf32>
    %c0_15 = arith.constant 0 : index
    %c256 = arith.constant 256 : index
    %20 = vector.load %arg12[%c0_15, %c256] : memref<2x2048xf32, #tpu.memory_space<vmem>>, vector<1x128xf32>
    tpu.vector_store %arg12[%c0_15, %c256], %19 {strides = array<i32>} : memref<2x2048xf32, #tpu.memory_space<vmem>>, vector<1x128xf32>,
    %21 = vector.extract_strided_slice %14 {offsets = [3, 0], sizes = [1, 128], strides = [1, 1]} : vector<16x256xf32> to vector<1x128xf32>
    %c0_16 = arith.constant 0 : index
    %c384 = arith.constant 384 : index
    %22 = vector.load %arg12[%c0_16, %c384] : memref<2x2048xf32, #tpu.memory_space<vmem>>, vector<1x128xf32>
    tpu.vector_store %arg12[%c0_16, %c384], %21 {strides = array<i32>} : memref<2x2048xf32, #tpu.memory_space<vmem>>, vector<1x128xf32>,
    %23 = vector.extract_strided_slice %14 {offsets = [4, 0], sizes = [1, 128], strides = [1, 1]} : vector<16x256xf32> to vector<1x128xf32>
    %c0_17 = arith.constant 0 : index
    %c512 = arith.constant 512 : index
    %24 = vector.load %arg12[%c0_17, %c512] : memref<2x2048xf32, #tpu.memory_space<vmem>>, vector<1x128xf32>
    tpu.vector_store %arg12[%c0_17, %c512], %23 {strides = array<i32>} : memref<2x2048xf32, #tpu.memory_space<vmem>>, vector<1x128xf32>,
    %25 = vector.extract_strided_slice %14 {offsets = [5, 0], sizes = [1, 128], strides = [1, 1]} : vector<16x256xf32> to vector<1x128xf32>
    %c0_18 = arith.constant 0 : index
    %c640 = arith.constant 640 : index
    %26 = vector.load %arg12[%c0_18, %c640] : memref<2x2048xf32, #tpu.memory_space<vmem>>, vector<1x128xf32>
    tpu.vector_store %arg12[%c0_18, %c640], %25 {strides = array<i32>} : memref<2x2048xf32, #tpu.memory_space<vmem>>, vector<1x128xf32>,
    %27 = vector.extract_strided_slice %14 {offsets = [6, 0], sizes = [1, 128], strides = [1, 1]} : vector<16x256xf32> to vector<1x128xf32>
    %c0_19 = arith.constant 0 : index
    %c768 = arith.constant 768 : index
    %28 = vector.load %arg12[%c0_19, %c768] : memref<2x2048xf32, #tpu.memory_space<vmem>>, vector<1x128xf32>
    tpu.vector_store %arg12[%c0_19, %c768], %27 {strides = array<i32>} : memref<2x2048xf32, #tpu.memory_space<vmem>>, vector<1x128xf32>,
    %29 = vector.extract_strided_slice %14 {offsets = [7, 0], sizes = [1, 128], strides = [1, 1]} : vector<16x256xf32> to vector<1x128xf32>
    %c0_20 = arith.constant 0 : index
    %c896 = arith.constant 896 : index
    %30 = vector.load %arg12[%c0_20, %c896] : memref<2x2048xf32, #tpu.memory_space<vmem>>, vector<1x128xf32>
    tpu.vector_store %arg12[%c0_20, %c896], %29 {strides = array<i32>} : memref<2x2048xf32, #tpu.memory_space<vmem>>, vector<1x128xf32>,
    %31 = vector.extract_strided_slice %14 {offsets = [8, 0], sizes = [1, 128], strides = [1, 1]} : vector<16x256xf32> to vector<1x128xf32>
    %c0_21 = arith.constant 0 : index
    %c1024 = arith.constant 1024 : index
    %32 = vector.load %arg12[%c0_21, %c1024] : memref<2x2048xf32, #tpu.memory_space<vmem>>, vector<1x128xf32>
    tpu.vector_store %arg12[%c0_21, %c1024], %31 {strides = array<i32>} : memref<2x2048xf32, #tpu.memory_space<vmem>>, vector<1x128xf32>,
    %33 = vector.extract_strided_slice %14 {offsets = [9, 0], sizes = [1, 128], strides = [1, 1]} : vector<16x256xf32> to vector<1x128xf32>
    %c0_22 = arith.constant 0 : index
    %c1152 = arith.constant 1152 : index
    %34 = vector.load %arg12[%c0_22, %c1152] : memref<2x2048xf32, #tpu.memory_space<vmem>>, vector<1x128xf32>
    tpu.vector_store %arg12[%c0_22, %c1152], %33 {strides = array<i32>} : memref<2x2048xf32, #tpu.memory_space<vmem>>, vector<1x128xf32>,
    %35 = vector.extract_strided_slice %14 {offsets = [10, 0], sizes = [1, 128], strides = [1, 1]} : vector<16x256xf32> to vector<1x128xf32>
    %c0_23 = arith.constant 0 : index
    %c1280 = arith.constant 1280 : index
    %36 = vector.load %arg12[%c0_23, %c1280] : memref<2x2048xf32, #tpu.memory_space<vmem>>, vector<1x128xf32>
    tpu.vector_store %arg12[%c0_23, %c1280], %35 {strides = array<i32>} : memref<2x2048xf32, #tpu.memory_space<vmem>>, vector<1x128xf32>,
    %37 = vector.extract_strided_slice %14 {offsets = [11, 0], sizes = [1, 128], strides = [1, 1]} : vector<16x256xf32> to vector<1x128xf32>
    %c0_24 = arith.constant 0 : index
    %c1408 = arith.constant 1408 : index
    %38 = vector.load %arg12[%c0_24, %c1408] : memref<2x2048xf32, #tpu.memory_space<vmem>>, vector<1x128xf32>
    tpu.vector_store %arg12[%c0_24, %c1408], %37 {strides = array<i32>} : memref<2x2048xf32, #tpu.memory_space<vmem>>, vector<1x128xf32>,
    %39 = vector.extract_strided_slice %14 {offsets = [12, 0], sizes = [1, 128], strides = [1, 1]} : vector<16x256xf32> to vector<1x128xf32>
    %c0_25 = arith.constant 0 : index
    %c1536 = arith.constant 1536 : index
    %40 = vector.load %arg12[%c0_25, %c1536] : memref<2x2048xf32, #tpu.memory_space<vmem>>, vector<1x128xf32>
    tpu.vector_store %arg12[%c0_25, %c1536], %39 {strides = array<i32>} : memref<2x2048xf32, #tpu.memory_space<vmem>>, vector<1x128xf32>,
    %41 = vector.extract_strided_slice %14 {offsets = [13, 0], sizes = [1, 128], strides = [1, 1]} : vector<16x256xf32> to vector<1x128xf32>
    %c0_26 = arith.constant 0 : index
    %c1664 = arith.constant 1664 : index
    %42 = vector.load %arg12[%c0_26, %c1664] : memref<2x2048xf32, #tpu.memory_space<vmem>>, vector<1x128xf32>
    tpu.vector_store %arg12[%c0_26, %c1664], %41 {strides = array<i32>} : memref<2x2048xf32, #tpu.memory_space<vmem>>, vector<1x128xf32>,
    %43 = vector.extract_strided_slice %14 {offsets = [14, 0], sizes = [1, 128], strides = [1, 1]} : vector<16x256xf32> to vector<1x128xf32>
    %c0_27 = arith.constant 0 : index
    %c1792 = arith.constant 1792 : index
    %44 = vector.load %arg12[%c0_27, %c1792] : memref<2x2048xf32, #tpu.memory_space<vmem>>, vector<1x128xf32>
    tpu.vector_store %arg12[%c0_27, %c1792], %43 {strides = array<i32>} : memref<2x2048xf32, #tpu.memory_space<vmem>>, vector<1x128xf32>,
    %45 = vector.extract_strided_slice %14 {offsets = [15, 0], sizes = [1, 128], strides = [1, 1]} : vector<16x256xf32> to vector<1x128xf32>
    %c0_28 = arith.constant 0 : index
    %c1920 = arith.constant 1920 : index
    %46 = vector.load %arg12[%c0_28, %c1920] : memref<2x2048xf32, #tpu.memory_space<vmem>>, vector<1x128xf32>
    tpu.vector_store %arg12[%c0_28, %c1920], %45 {strides = array<i32>} : memref<2x2048xf32, #tpu.memory_space<vmem>>, vector<1x128xf32>,
    %47 = vector.extract_strided_slice %14 {offsets = [0, 128], sizes = [1, 128], strides = [1, 1]} : vector<16x256xf32> to vector<1x128xf32>
    %c1 = arith.constant 1 : index
    %c0_29 = arith.constant 0 : index
    %48 = vector.load %arg12[%c1, %c0_29] : memref<2x2048xf32, #tpu.memory_space<vmem>>, vector<1x128xf32>
    tpu.vector_store %arg12[%c1, %c0_29], %47 {strides = array<i32>} : memref<2x2048xf32, #tpu.memory_space<vmem>>, vector<1x128xf32>,
    %49 = vector.extract_strided_slice %14 {offsets = [1, 128], sizes = [1, 128], strides = [1, 1]} : vector<16x256xf32> to vector<1x128xf32>
    %c1_30 = arith.constant 1 : index
    %c128_31 = arith.constant 128 : index
    %50 = vector.load %arg12[%c1_30, %c128_31] : memref<2x2048xf32, #tpu.memory_space<vmem>>, vector<1x128xf32>
    tpu.vector_store %arg12[%c1_30, %c128_31], %49 {strides = array<i32>} : memref<2x2048xf32, #tpu.memory_space<vmem>>, vector<1x128xf32>,
    %51 = vector.extract_strided_slice %14 {offsets = [2, 128], sizes = [1, 128], strides = [1, 1]} : vector<16x256xf32> to vector<1x128xf32>
    %c1_32 = arith.constant 1 : index
    %c256_33 = arith.constant 256 : index
    %52 = vector.load %arg12[%c1_32, %c256_33] : memref<2x2048xf32, #tpu.memory_space<vmem>>, vector<1x128xf32>
    tpu.vector_store %arg12[%c1_32, %c256_33], %51 {strides = array<i32>} : memref<2x2048xf32, #tpu.memory_space<vmem>>, vector<1x128xf32>,
    %53 = vector.extract_strided_slice %14 {offsets = [3, 128], sizes = [1, 128], strides = [1, 1]} : vector<16x256xf32> to vector<1x128xf32>
    %c1_34 = arith.constant 1 : index
    %c384_35 = arith.constant 384 : index
    %54 = vector.load %arg12[%c1_34, %c384_35] : memref<2x2048xf32, #tpu.memory_space<vmem>>, vector<1x128xf32>
    tpu.vector_store %arg12[%c1_34, %c384_35], %53 {strides = array<i32>} : memref<2x2048xf32, #tpu.memory_space<vmem>>, vector<1x128xf32>,
    %55 = vector.extract_strided_slice %14 {offsets = [4, 128], sizes = [1, 128], strides = [1, 1]} : vector<16x256xf32> to vector<1x128xf32>
    %c1_36 = arith.constant 1 : index
    %c512_37 = arith.constant 512 : index
    %56 = vector.load %arg12[%c1_36, %c512_37] : memref<2x2048xf32, #tpu.memory_space<vmem>>, vector<1x128xf32>
    tpu.vector_store %arg12[%c1_36, %c512_37], %55 {strides = array<i32>} : memref<2x2048xf32, #tpu.memory_space<vmem>>, vector<1x128xf32>,
    %57 = vector.extract_strided_slice %14 {offsets = [5, 128], sizes = [1, 128], strides = [1, 1]} : vector<16x256xf32> to vector<1x128xf32>
    %c1_38 = arith.constant 1 : index
    %c640_39 = arith.constant 640 : index
    %58 = vector.load %arg12[%c1_38, %c640_39] : memref<2x2048xf32, #tpu.memory_space<vmem>>, vector<1x128xf32>
    tpu.vector_store %arg12[%c1_38, %c640_39], %57 {strides = array<i32>} : memref<2x2048xf32, #tpu.memory_space<vmem>>, vector<1x128xf32>,
    %59 = vector.extract_strided_slice %14 {offsets = [6, 128], sizes = [1, 128], strides = [1, 1]} : vector<16x256xf32> to vector<1x128xf32>
    %c1_40 = arith.constant 1 : index
    %c768_41 = arith.constant 768 : index
    %60 = vector.load %arg12[%c1_40, %c768_41] : memref<2x2048xf32, #tpu.memory_space<vmem>>, vector<1x128xf32>
    tpu.vector_store %arg12[%c1_40, %c768_41], %59 {strides = array<i32>} : memref<2x2048xf32, #tpu.memory_space<vmem>>, vector<1x128xf32>,
    %61 = vector.extract_strided_slice %14 {offsets = [7, 128], sizes = [1, 128], strides = [1, 1]} : vector<16x256xf32> to vector<1x128xf32>
    %c1_42 = arith.constant 1 : index
    %c896_43 = arith.constant 896 : index
    %62 = vector.load %arg12[%c1_42, %c896_43] : memref<2x2048xf32, #tpu.memory_space<vmem>>, vector<1x128xf32>
    tpu.vector_store %arg12[%c1_42, %c896_43], %61 {strides = array<i32>} : memref<2x2048xf32, #tpu.memory_space<vmem>>, vector<1x128xf32>,
    %63 = vector.extract_strided_slice %14 {offsets = [8, 128], sizes = [1, 128], strides = [1, 1]} : vector<16x256xf32> to vector<1x128xf32>
    %c1_44 = arith.constant 1 : index
    %c1024_45 = arith.constant 1024 : index
    %64 = vector.load %arg12[%c1_44, %c1024_45] : memref<2x2048xf32, #tpu.memory_space<vmem>>, vector<1x128xf32>
    tpu.vector_store %arg12[%c1_44, %c1024_45], %63 {strides = array<i32>} : memref<2x2048xf32, #tpu.memory_space<vmem>>, vector<1x128xf32>,
    %65 = vector.extract_strided_slice %14 {offsets = [9, 128], sizes = [1, 128], strides = [1, 1]} : vector<16x256xf32> to vector<1x128xf32>
    %c1_46 = arith.constant 1 : index
    %c1152_47 = arith.constant 1152 : index
    %66 = vector.load %arg12[%c1_46, %c1152_47] : memref<2x2048xf32, #tpu.memory_space<vmem>>, vector<1x128xf32>
    tpu.vector_store %arg12[%c1_46, %c1152_47], %65 {strides = array<i32>} : memref<2x2048xf32, #tpu.memory_space<vmem>>, vector<1x128xf32>,
    %67 = vector.extract_strided_slice %14 {offsets = [10, 128], sizes = [1, 128], strides = [1, 1]} : vector<16x256xf32> to vector<1x128xf32>
    %c1_48 = arith.constant 1 : index
    %c1280_49 = arith.constant 1280 : index
    %68 = vector.load %arg12[%c1_48, %c1280_49] : memref<2x2048xf32, #tpu.memory_space<vmem>>, vector<1x128xf32>
    tpu.vector_store %arg12[%c1_48, %c1280_49], %67 {strides = array<i32>} : memref<2x2048xf32, #tpu.memory_space<vmem>>, vector<1x128xf32>,
    %69 = vector.extract_strided_slice %14 {offsets = [11, 128], sizes = [1, 128], strides = [1, 1]} : vector<16x256xf32> to vector<1x128xf32>
    %c1_50 = arith.constant 1 : index
    %c1408_51 = arith.constant 1408 : index
    %70 = vector.load %arg12[%c1_50, %c1408_51] : memref<2x2048xf32, #tpu.memory_space<vmem>>, vector<1x128xf32>
    tpu.vector_store %arg12[%c1_50, %c1408_51], %69 {strides = array<i32>} : memref<2x2048xf32, #tpu.memory_space<vmem>>, vector<1x128xf32>,
    %71 = vector.extract_strided_slice %14 {offsets = [12, 128], sizes = [1, 128], strides = [1, 1]} : vector<16x256xf32> to vector<1x128xf32>
    %c1_52 = arith.constant 1 : index
    %c1536_53 = arith.constant 1536 : index
    %72 = vector.load %arg12[%c1_52, %c1536_53] : memref<2x2048xf32, #tpu.memory_space<vmem>>, vector<1x128xf32>
    tpu.vector_store %arg12[%c1_52, %c1536_53], %71 {strides = array<i32>} : memref<2x2048xf32, #tpu.memory_space<vmem>>, vector<1x128xf32>,
    %73 = vector.extract_strided_slice %14 {offsets = [13, 128], sizes = [1, 128], strides = [1, 1]} : vector<16x256xf32> to vector<1x128xf32>
    %c1_54 = arith.constant 1 : index
    %c1664_55 = arith.constant 1664 : index
    %74 = vector.load %arg12[%c1_54, %c1664_55] : memref<2x2048xf32, #tpu.memory_space<vmem>>, vector<1x128xf32>
    tpu.vector_store %arg12[%c1_54, %c1664_55], %73 {strides = array<i32>} : memref<2x2048xf32, #tpu.memory_space<vmem>>, vector<1x128xf32>,
    %75 = vector.extract_strided_slice %14 {offsets = [14, 128], sizes = [1, 128], strides = [1, 1]} : vector<16x256xf32> to vector<1x128xf32>
    %c1_56 = arith.constant 1 : index
    %c1792_57 = arith.constant 1792 : index
    %76 = vector.load %arg12[%c1_56, %c1792_57] : memref<2x2048xf32, #tpu.memory_space<vmem>>, vector<1x128xf32>
    tpu.vector_store %arg12[%c1_56, %c1792_57], %75 {strides = array<i32>} : memref<2x2048xf32, #tpu.memory_space<vmem>>, vector<1x128xf32>,
    %77 = vector.extract_strided_slice %14 {offsets = [15, 128], sizes = [1, 128], strides = [1, 1]} : vector<16x256xf32> to vector<1x128xf32>
    %c1_58 = arith.constant 1 : index
    %c1920_59 = arith.constant 1920 : index
    %78 = vector.load %arg12[%c1_58, %c1920_59] : memref<2x2048xf32, #tpu.memory_space<vmem>>, vector<1x128xf32>
    tpu.vector_store %arg12[%c1_58, %c1920_59], %77 {strides = array<i32>} : memref<2x2048xf32, #tpu.memory_space<vmem>>, vector<1x128xf32>,
    %c0_60 = arith.constant 0 : index
    %c0_61 = arith.constant 0 : index
    %79 = vector.load %arg12[%c0_60, %c0_61] : memref<2x2048xf32, #tpu.memory_space<vmem>>, vector<2x2048xf32>
    %80 = arith.truncf %79 : vector<2x2048xf32> to vector<2x2048xbf16>
    tpu.wait_dma2 semaphore(%arg14 : memref<!tpu.dma_semaphore, #tpu.memory_space<semaphore_mem>>) src(%arg5 : memref<2048x512xbf16, #tpu.memory_space<any>>) dst(%arg13 : memref<2048x512xbf16, #tpu.memory_space<vmem>>)
    %c0_62 = arith.constant 0 : index
    %c0_63 = arith.constant 0 : index
    %81 = vector.load %arg13[%c0_62, %c0_63] : memref<2048x512xbf16, #tpu.memory_space<vmem>>, vector<2048x512xbf16>
    %cst_64 = arith.constant dense<0.000000e+00> : vector<2x512xf32>
    %82 = tpu.matmul %80, %81, %cst_64 {dimension_numbers = #tpu.dot_dimension_numbers<[1], [0], [0], [1], [0, 0, 1, 1], [], []>} : vector<2x2048xbf16>, vector<2048x512xbf16>, vector<2x512xf32> -> vector<2x512xf32>
    %c0_65 = arith.constant 0 : index
    %c0_66 = arith.constant 0 : index
    %83 = vector.load %arg6[%c0_65, %c0_66] : memref<1x512xf32, #tpu.memory_space<vmem>>, vector<1x512xf32>
    %84 = vector.broadcast %83 : vector<1x512xf32> to vector<2x512xf32>
    %85 = arith.addf %82, %84 : vector<2x512xf32>
    %cst_67 = arith.constant 0.000000e+00 : f32
    %86 = vector.broadcast %cst_67 : f32 to vector<2x512xf32>
    %87 = arith.maximumf %85, %86 : vector<2x512xf32>
    %88 = arith.truncf %87 : vector<2x512xf32> to vector<2x512xbf16>
    %c0_68 = arith.constant 0 : index
    %c0_69 = arith.constant 0 : index
    %89 = vector.load %arg7[%c0_68, %c0_69] : memref<512x128xbf16, #tpu.memory_space<vmem>>, vector<512x128xbf16>
    %cst_70 = arith.constant dense<0.000000e+00> : vector<2x128xf32>
    %90 = tpu.matmul %88, %89, %cst_70 {dimension_numbers = #tpu.dot_dimension_numbers<[1], [0], [0], [1], [0, 0, 1, 1], [], []>} : vector<2x512xbf16>, vector<512x128xbf16>, vector<2x128xf32> -> vector<2x128xf32>
    %c0_71 = arith.constant 0 : index
    %c0_72 = arith.constant 0 : index
    %91 = vector.load %arg8[%c0_71, %c0_72] : memref<1x128xf32, #tpu.memory_space<vmem>>, vector<1x128xf32>
    %92 = vector.broadcast %91 : vector<1x128xf32> to vector<2x128xf32>
    %93 = arith.addf %90, %92 : vector<2x128xf32>
    %cst_73 = arith.constant 0.000000e+00 : f32
    %94 = vector.broadcast %cst_73 : f32 to vector<2x128xf32>
    %95 = arith.maximumf %93, %94 : vector<2x128xf32>
    %96 = arith.truncf %95 : vector<2x128xf32> to vector<2x128xbf16>
    %c0_74 = arith.constant 0 : index
    %c0_75 = arith.constant 0 : index
    %97 = vector.load %arg9[%c0_74, %c0_75] : memref<128x128xbf16, #tpu.memory_space<vmem>>, vector<128x128xbf16>
    %cst_76 = arith.constant dense<0.000000e+00> : vector<2x128xf32>
    %98 = tpu.matmul %96, %97, %cst_76 {dimension_numbers = #tpu.dot_dimension_numbers<[1], [0], [0], [1], [0, 0, 1, 1], [], []>} : vector<2x128xbf16>, vector<128x128xbf16>, vector<2x128xf32> -> vector<2x128xf32>
    %c0_77 = arith.constant 0 : index
    %c0_78 = arith.constant 0 : index
    %99 = vector.load %arg10[%c0_77, %c0_78] : memref<1x128xf32, #tpu.memory_space<vmem>>, vector<1x128xf32>
    %100 = vector.broadcast %99 : vector<1x128xf32> to vector<2x128xf32>
    %101 = arith.addf %98, %100 : vector<2x128xf32>
    %c0_79 = arith.constant 0 : index
    %c0_80 = arith.constant 0 : index
    %102 = vector.load %arg11[%c0_79, %c0_80] : memref<2x128xf32, #tpu.memory_space<vmem>>, vector<2x128xf32>
    tpu.vector_store %arg11[%c0_79, %c0_80], %101 {strides = array<i32>} : memref<2x128xf32, #tpu.memory_space<vmem>>, vector<2x128xf32>,
    return
  }
}

</mosaic_0001>

<llo_original>
// kernel: dqn_forward.1
$region0: #{dqn_forward.1}
  #allocation0 [shape = 'u32[]', space=smem, size = 0x4, offset = 0x4, fixed_abs, tag = 'smem constant byte address 0x4 - core index']
  #allocation1 [shape = 'u32[144,128]{1,0:T(1,128)}', space=vmem, size = 0x12000, scoped, tag = 'internal scratch']
  #allocation2 [shape = 'f32[2,2048]{1,0:T(2,128)}', space=vmem, size = 0x4000, scoped, tag = 'scratch operand']
  #allocation3 [shape = 'bf16[2048,512]{1,0:T(8,128)(2,1)}', space=vmem, size = 0x200000, scoped, tag = 'scratch operand']
  #allocation4 [shape = 's32[1]{0}', space=sflag, size = 0x4, scoped, tag = 'scratch operand']
  #allocation17 [shape = 's32[]', space=sflag, size = 0x4, offset = 0, fixed_abs, tag = 'sflag constant byte address 0x0 - dummy sync flag']
  #allocation18 [shape = 's32[]', space=sflag, size = 0x4, offset = 0, fixed_abs, tag = 'sflag constant byte address 0x0 - dummy sync flag']
  #allocation19 [shape = 'u32[]', space=smem, size = 0x4, offset = 0x44, fixed_abs, tag = 'smem constant byte address 0x44 - assertion arg 0']
  #allocation20 [shape = 'u32[]', space=smem, size = 0x4, offset = 0x48, fixed_abs, tag = 'smem constant byte address 0x48 - assertion arg 1']
  %s0 = inlined_call_operand.vmem [shape: f32[16,256], index: 0, kind: input, shape index: {}]
  %s1 = inlined_call_operand.vmem [shape: f32[32,16], index: 1, kind: input, shape index: {}]
  %s2 = inlined_call_operand.vmem [shape: f32[32,1], index: 2, kind: input, shape index: {}]
  %s3 = inlined_call_operand.hbm [shape: f32[16,32], index: 3, kind: input, shape index: {}]
  %s4 = inlined_call_operand.vmem [shape: f32[16,1], index: 4, kind: input, shape index: {}]
  %s5 = inlined_call_operand.hbm [shape: bf16[2048,512], index: 5, kind: input, shape index: {}]
  %s6 = inlined_call_operand.hbm [shape: f32[1,512], index: 6, kind: input, shape index: {}]
  %s7 = inlined_call_operand.hbm [shape: bf16[512,128], index: 7, kind: input, shape index: {}]
  %s8 = inlined_call_operand.hbm [shape: f32[1,128], index: 8, kind: input, shape index: {}]
  %s9 = inlined_call_operand.hbm [shape: bf16[128,128], index: 9, kind: input, shape index: {}]
  %s10 = inlined_call_operand.hbm [shape: f32[1,128], index: 10, kind: input, shape index: {}]
  %s11 = inlined_call_operand.hbm [shape: f32[2,128], index: 11, kind: output, shape index: {}]
  %s12 = sld [smem:[#allocation0]]
  $region78: #{dqn_forward.1} parent=0
    _
  %s14 = ssub.s32 1, %s12
  %s15 = scalar_select 0, %s14, %s12
  $region1: #{dqn_forward.1} parent=0
    #allocation5 [shape = 'u8[8192]{0}', space=vmem, size = 0x2000, scoped, tag = 'input window, operand 3, single buffered']
    #allocation6 [shape = 's32[1]{0}', space=sflag, size = 0x4, scoped, tag = 'scoped memory for dqn_forward.1']
    #allocation7 [shape = 's32[1]{0}', space=sflag, size = 0x4, scoped, tag = 'scoped memory for dqn_forward.1']
    #allocation8 [shape = 'u8[2048]{0}', space=vmem, size = 0x800, scoped, tag = 'input window, operand 6, single buffered']
    #allocation9 [shape = 's32[1]{0}', space=sflag, size = 0x4, scoped, tag = 'scoped memory for dqn_forward.1']
    #allocation10 [shape = 'u8[131072]{0}', space=vmem, size = 0x20000, scoped, tag = 'input window, operand 7, single buffered']
    #allocation11 [shape = 'u8[512]{0}', space=vmem, size = 0x400, scoped, tag = 'input window, operand 8, single buffered']
    #allocation12 [shape = 's32[1]{0}', space=sflag, size = 0x4, scoped, tag = 'scoped memory for dqn_forward.1']
    #allocation13 [shape = 'u8[32768]{0}', space=vmem, size = 0x8000, scoped, tag = 'input window, operand 9, single buffered']
    #allocation14 [shape = 'u8[512]{0}', space=vmem, size = 0x400, scoped, tag = 'input window, operand 10, single buffered']
    #allocation15 [shape = 's32[1]{0}', space=sflag, size = 0x4, scoped, tag = 'scoped memory for dqn_forward.1']
    #allocation16 [shape = 'u8[1024]{0}', space=vmem, size = 0x400, scoped, tag = 'output window, operand 0, single buffered']
    %16 = vsyncpa [#allocation6], 0
    %17 = vsyncpa [#allocation9], 0
    %18 = vsyncpa [#allocation12], 0
    %19 = vsyncpa [#allocation15], 0
    %20 = vsyncpa [#allocation7], 0
    // Predicated region
    $region2: #{dqn_forward.1} parent=1 // pred_check
      _
    $region3: #{dqn_forward.1} parent=1 // pred_check_branch
      %22 = sbr.rel (0) target = $region5
    $region4: #{dqn_forward.1} parent=1 // pred_region
      _
    $region5: #{dqn_forward.1} parent=1 // pred_fallthru
      _
    // Predicated region
    $region6: #{dqn_forward.1} parent=1 // pred_check
      _
    $region7: #{dqn_forward.1} parent=1 // pred_check_branch
      %24 = sbr.rel (0) target = $region9
    $region8: #{dqn_forward.1} parent=1 // pred_region
      _
    $region9: #{dqn_forward.1} parent=1 // pred_fallthru
      _
    // Predicated region
    $region10: #{dqn_forward.1} parent=1 // pred_check
      _
    $region11: #{dqn_forward.1} parent=1 // pred_check_branch
      %26 = sbr.rel (0) target = $region13
    $region12: #{dqn_forward.1} parent=1 // pred_region
      _
    $region13: #{dqn_forward.1} parent=1 // pred_fallthru
      _
    // Predicated region
    $region14: #{dqn_forward.1} parent=1 // pred_check
      _
    $region15: #{dqn_forward.1} parent=1 // pred_check_branch
      %28 = sbr.rel (0) target = $region17
    $region16: #{dqn_forward.1} parent=1 // pred_region
      %s30 = ssub.s32 256, 256
      %31 = vsyncadd [#allocation6], %s30
      %s32 = sshll.u32 [#allocation5], 4
      %s33 = int_to_ptr.vmem [resolvable:$true] %s32
      %38 = dma.hbm_to_vmem [thread:$0]  %s3, 256, %s33, [#allocation6], 128, 128, 8
    $region17: #{dqn_forward.1} parent=1 // pred_fallthru
      _
    // Predicated region
    $region18: #{dqn_forward.1} parent=1 // pred_check
      _
    $region19: #{dqn_forward.1} parent=1 // pred_check_branch
      %40 = sbr.rel (0) target = $region21
    $region20: #{dqn_forward.1} parent=1 // pred_region
      _
    $region21: #{dqn_forward.1} parent=1 // pred_fallthru
      _
    // Predicated region
    $region22: #{dqn_forward.1} parent=1 // pred_check
      _
    $region23: #{dqn_forward.1} parent=1 // pred_check_branch
      %42 = sbr.rel (0) target = $region25
    $region24: #{dqn_forward.1} parent=1 // pred_region
      %s44 = ssub.s32 64, 64
      %45 = vsyncadd [#allocation9], %s44
      %s47 = sshll.u32 [#allocation8], 4
      %s48 = int_to_ptr.vmem [resolvable:$true] %s47
      %50 = dma.hbm_to_vmem [thread:$0]  %s6, 64, %s48, [#allocation9]
    $region25: #{dqn_forward.1} parent=1 // pred_fallthru
      _
    // Predicated region
    $region26: #{dqn_forward.1} parent=1 // pred_check
      _
    $region27: #{dqn_forward.1} parent=1 // pred_check_branch
      %52 = sbr.rel (0) target = $region29
    $region28: #{dqn_forward.1} parent=1 // pred_region
      %s54 = ssub.s32 4096, 4096
      %55 = vsyncadd [#allocation9], %s54
      %s56 = sshll.u32 [#allocation10], 4
      %s57 = int_to_ptr.vmem [resolvable:$true] %s56
      %62 = dma.hbm_to_vmem [thread:$0]  %s7, 4096, %s57, [#allocation9], 64, 64, 4
    $region29: #{dqn_forward.1} parent=1 // pred_fallthru
      _
    // Predicated region
    $region30: #{dqn_forward.1} parent=1 // pred_check
      _
    $region31: #{dqn_forward.1} parent=1 // pred_check_branch
      %64 = sbr.rel (0) target = $region33
    $region32: #{dqn_forward.1} parent=1 // pred_region
      %s66 = ssub.s32 16, 16
      %67 = vsyncadd [#allocation12], %s66
      %s69 = sshll.u32 [#allocation11], 4
      %s70 = int_to_ptr.vmem [resolvable:$true] %s69
      %72 = dma.hbm_to_vmem [thread:$0]  %s8, 16, %s70, [#allocation12]
    $region33: #{dqn_forward.1} parent=1 // pred_fallthru
      _
    // Predicated region
    $region34: #{dqn_forward.1} parent=1 // pred_check
      _
    $region35: #{dqn_forward.1} parent=1 // pred_check_branch
      %74 = sbr.rel (0) target = $region37
    $region36: #{dqn_forward.1} parent=1 // pred_region
      %s76 = ssub.s32 1024, 1024
      %77 = vsyncadd [#allocation12], %s76
      %s78 = sshll.u32 [#allocation13], 4
      %s79 = int_to_ptr.vmem [resolvable:$true] %s78
      %84 = dma.hbm_to_vmem [thread:$0]  %s9, 1024, %s79, [#allocation12], 64, 64, 4
    $region37: #{dqn_forward.1} parent=1 // pred_fallthru
      _
    // Predicated region
    $region38: #{dqn_forward.1} parent=1 // pred_check
      _
    $region39: #{dqn_forward.1} parent=1 // pred_check_branch
      %86 = sbr.rel (0) target = $region41
    $region40: #{dqn_forward.1} parent=1 // pred_region
      %s88 = ssub.s32 16, 16
      %89 = vsyncadd [#allocation15], %s88
      %s91 = sshll.u32 [#allocation14], 4
      %s92 = int_to_ptr.vmem [resolvable:$true] %s91
      %94 = dma.hbm_to_vmem [thread:$0]  %s10, 16, %s92, [#allocation15]
    $region41: #{dqn_forward.1} parent=1 // pred_fallthru
      _
    // Predicated region
    $region42: #{dqn_forward.1} parent=1 // pred_check
      _
    $region43: #{dqn_forward.1} parent=1 // pred_check_branch
      %96 = sbr.rel (0) target = $region45
    $region44: #{dqn_forward.1} parent=1 // pred_region
      %97 = dma.done [#allocation6], 256
    $region45: #{dqn_forward.1} parent=1 // pred_fallthru
      _
    // Predicated region
    $region46: #{dqn_forward.1} parent=1 // pred_check
      _
    $region47: #{dqn_forward.1} parent=1 // pred_check_branch
      %99 = sbr.rel (0) target = $region49
    $region48: #{dqn_forward.1} parent=1 // pred_region
      %100 = dma.done [#allocation9], 64
    $region49: #{dqn_forward.1} parent=1 // pred_fallthru
      _
    // Predicated region
    $region50: #{dqn_forward.1} parent=1 // pred_check
      _
    $region51: #{dqn_forward.1} parent=1 // pred_check_branch
      %102 = sbr.rel (0) target = $region53
    $region52: #{dqn_forward.1} parent=1 // pred_region
      %103 = dma.done [#allocation9], 4096
    $region53: #{dqn_forward.1} parent=1 // pred_fallthru
      _
    // Predicated region
    $region54: #{dqn_forward.1} parent=1 // pred_check
      _
    $region55: #{dqn_forward.1} parent=1 // pred_check_branch
      %105 = sbr.rel (0) target = $region57
    $region56: #{dqn_forward.1} parent=1 // pred_region
      %106 = dma.done [#allocation12], 16
    $region57: #{dqn_forward.1} parent=1 // pred_fallthru
      _
    // Predicated region
    $region58: #{dqn_forward.1} parent=1 // pred_check
      _
    $region59: #{dqn_forward.1} parent=1 // pred_check_branch
      %108 = sbr.rel (0) target = $region61
    $region60: #{dqn_forward.1} parent=1 // pred_region
      %109 = dma.done [#allocation12], 1024
    $region61: #{dqn_forward.1} parent=1 // pred_fallthru
      _
    // Predicated region
    $region62: #{dqn_forward.1} parent=1 // pred_check
      _
    $region63: #{dqn_forward.1} parent=1 // pred_check_branch
      %111 = sbr.rel (0) target = $region65
    $region64: #{dqn_forward.1} parent=1 // pred_region
      %112 = dma.done [#allocation15], 16
    $region65: #{dqn_forward.1} parent=1 // pred_fallthru
      _
    // Predicated region
    $region66: #{dqn_forward.1} parent=1 // pred_check
      _
    $region67: #{dqn_forward.1} parent=1 // pred_check_branch
      %115 = sbr.rel target = $region69
    $region68: #{dqn_forward.1} parent=1 // pred_region
      %116 = sst [smem:[#allocation19]] [#allocation18]
      %117 = sst [smem:[#allocation20]] [#allocation17]
    $region69: #{dqn_forward.1} parent=1 // pred_fallthru
      _
    %119 = shalt.err (0)
    %s121 = sshll.u32 [#allocation3], 4
    %s122 = int_to_ptr.vmem [resolvable:$true] %s121
    %124 = dma.hbm_to_vmem [thread:$0]  %s5, 65536, %s122, [#allocation4]
    %v125 = vld [vmem:[%s1] sm:$0xff]
    %v126 = vld [vmem:[%s1 + $0x8] sm:$0xff]
    %v127 = vld [vmem:[%s1 + $0x10] sm:$0xff]
    %v128 = vld [vmem:[%s1 + $0x18] sm:$0xff]
    %v129 = vld [vmem:[%s0] sm:$0xff]
    %v130 = vld [vmem:[%s0 + $0x8] sm:$0xff]
    %v131 = vld [vmem:[%s0 + $0x10] sm:$0xff]
    %v132 = vld [vmem:[%s0 + $0x18] sm:$0xff]
    %v133 = vld [vmem:[%s2] sm:$0xff]
    %v134 = vld [vmem:[%s2 + $0x8] sm:$0xff]
    %v135 = vld [vmem:[%s2 + $0x10] sm:$0xff]
    %v136 = vld [vmem:[%s2 + $0x18] sm:$0xff]
    %138 = vset.pattern.permute.xlu0 0
    %139 = vperm.xlu0 %138, %v133
    %v140 = vpop.permute.xlu0 %139
    %143 = vset.pattern.permute.xlu0 0
    %144 = vperm.xlu0 %143, %v134
    %v145 = vpop.permute.xlu0 %144
    %148 = vset.pattern.permute.xlu0 0
    %149 = vperm.xlu0 %148, %v135
    %v150 = vpop.permute.xlu0 %149
    %153 = vset.pattern.permute.xlu0 0
    %154 = vperm.xlu0 %153, %v136
    %v155 = vpop.permute.xlu0 %154
    %vm157 = vcmask 130048
    %v159 = vsel %vm157, %v125, 0
    %v162 = vsel %vm157, %v126, 0
    %v165 = vsel %vm157, %v127, 0
    %v168 = vsel %vm157, %v128, 0
    %170 = vmatprep.subr.mxu0 0.0
    %171 = vmatpush1.msra.mxu0 0.0
    %172 = vmatprep.subr.mxu0 0.0
    %173 = vmatpush1.msra.mxu0 0.0
    %174 = vmatprep.subr.mxu0 0.0
    %175 = vmatpush1.msra.mxu0 0.0
    %176 = vmatprep.subr.mxu0 0.0
    %177 = vmatpush1.msra.mxu0 0.0
    %178 = vmatprep.subr.mxu0 0.0
    %179 = vmatpush1.msra.mxu0 0.0
    %180 = vmatprep.subr.mxu0 0.0
    %181 = vmatpush1.msra.mxu0 0.0
    %182 = vmatprep.subr.mxu0 0.0
    %183 = vmatpush1.msra.mxu0 0.0
    %184 = vmatprep.subr.mxu0 0.0
    %185 = vmatpush1.msra.mxu0 0.0
    %186 = vmatprep.subr.mxu0 0.0
    %187 = vmatpush1.msra.mxu0 0.0
    %188 = vmatprep.subr.mxu0 0.0
    %189 = vmatpush1.msra.mxu0 0.0
    %190 = vmatprep.subr.mxu0 0.0
    %191 = vmatpush1.msra.mxu0 0.0
    %192 = vmatprep.subr.mxu0 0.0
    %193 = vmatpush1.msra.mxu0 0.0
    %194 = vmatprep.subr.mxu0 0.0
    %195 = vmatpush1.msra.mxu0 0.0
    %196 = vmatprep.subr.mxu0 0.0
    %197 = vmatpush1.msra.mxu0 0.0
    %198 = vmatprep.subr.mxu0 %v132
    %199 = vmatpush1.msra.mxu0 %v131
    %200 = vmatprep.subr.mxu0 %v130
    %201 = vmatpush1.msra.mxu0 %v129
    %202 = vmatprep.subr.mxu0 0.0
    %203 = vmatpush2.msra.mxu0 0.0
    %204 = vmatprep.subr.mxu0 0.0
    %205 = vmatpush2.msra.mxu0 0.0
    %206 = vmatprep.subr.mxu0 0.0
    %207 = vmatpush2.msra.mxu0 0.0
    %208 = vmatprep.subr.mxu0 0.0
    %209 = vmatpush2.msra.mxu0 0.0
    %210 = vmatprep.subr.mxu0 0.0
    %211 = vmatpush2.msra.mxu0 0.0
    %212 = vmatprep.subr.mxu0 0.0
    %213 = vmatpush2.msra.mxu0 0.0
    %214 = vmatprep.subr.mxu0 0.0
    %215 = vmatpush2.msra.mxu0 0.0
    %216 = vmatprep.subr.mxu0 0.0
    %217 = vmatpush2.msra.mxu0 0.0
    %218 = vmatprep.subr.mxu0 0.0
    %219 = vmatpush2.msra.mxu0 0.0
    %220 = vmatprep.subr.mxu0 0.0
    %221 = vmatpush2.msra.mxu0 0.0
    %222 = vmatprep.subr.mxu0 0.0
    %223 = vmatpush2.msra.mxu0 0.0
    %224 = vmatprep.subr.mxu0 0.0
    %225 = vmatpush2.msra.mxu0 0.0
    %226 = vmatprep.subr.mxu0 0.0
    %227 = vmatpush2.msra.mxu0 0.0
    %228 = vmatprep.subr.mxu0 0.0
    %229 = vmatpush2.msra.mxu0 0.0
    %230 = vmatprep.subr.mxu0 0.0
    %231 = vmatpush2.msra.mxu0 0.0
    %232 = vmatprep.subr.mxu0 0.0
    %233 = vmatpush2.msra.mxu0 0.0
    %234 = vmatprep.mubr.f32.mxu0 0.0
    %235 = vmatmul.mubr.f32.gmra.mxu0 %v159
    %v236 = vpop.f32.mrf.mxu0
    %v237 = vadd.f32 %v140, %v236
    %v238 = vpop.f32.mrf.mxu0
    %v239 = vadd.f32 %v140, %v238
    %240 = vmatprep.mubr.f32.mxu0 0.0
    %241 = vmatmul.mubr.f32.gmra.mxu0 %v162
    %v242 = vpop.f32.mrf.mxu0
    %v243 = vadd.f32 %v145, %v242
    %v244 = vpop.f32.mrf.mxu0
    %v245 = vadd.f32 %v145, %v244
    %246 = vmatprep.mubr.f32.mxu0 0.0
    %247 = vmatmul.mubr.f32.gmra.mxu0 %v165
    %v248 = vpop.f32.mrf.mxu0
    %v249 = vadd.f32 %v150, %v248
    %v250 = vpop.f32.mrf.mxu0
    %v251 = vadd.f32 %v150, %v250
    %252 = vmatprep.mubr.f32.mxu0 0.0
    %253 = vmatmul.mubr.f32.gmra.mxu0 %v168
    %v254 = vpop.f32.mrf.mxu0
    %v255 = vadd.f32 %v155, %v254
    %v256 = vpop.f32.mrf.mxu0
    %v257 = vadd.f32 %v155, %v256
    %258 = vdwg.mxu0
    %v259 = vmax.f32 %v237, 0.0
    %v260 = vmax.f32 %v239, 0.0
    %v261 = vmax.f32 %v243, 0.0
    %v262 = vmax.f32 %v245, 0.0
    %v263 = vmax.f32 %v249, 0.0
    %v264 = vmax.f32 %v251, 0.0
    %v265 = vmax.f32 %v255, 0.0
    %v266 = vmax.f32 %v257, 0.0
    %v267 = vld [vmem:[#allocation5] sm:$0xff]
    %v268 = vld [vmem:[#allocation5 + $0x8] sm:$0xff]
    %v269 = vld [vmem:[%s4] sm:$0xff]
    %v270 = vld [vmem:[%s4 + $0x8] sm:$0xff]
    %272 = vset.pattern.permute.xlu0 0
    %273 = vperm.xlu0 %272, %v269
    %v274 = vpop.permute.xlu0 %273
    %277 = vset.pattern.permute.xlu0 0
    %278 = vperm.xlu0 %277, %v270
    %v279 = vpop.permute.xlu0 %278
    %vm281 = vcmask 261120
    %v283 = vsel %vm281, %v267, 0
    %v286 = vsel %vm281, %v268, 0
    %288 = vmatprep.subr.mxu0 0.0
    %289 = vmatpush1.msra.mxu0 0.0
    %290 = vmatprep.subr.mxu0 0.0
    %291 = vmatpush1.msra.mxu0 0.0
    %292 = vmatprep.subr.mxu0 0.0
    %293 = vmatpush1.msra.mxu0 0.0
    %294 = vmatprep.subr.mxu0 0.0
    %295 = vmatpush1.msra.mxu0 0.0
    %296 = vmatprep.subr.mxu0 0.0
    %297 = vmatpush1.msra.mxu0 0.0
    %298 = vmatprep.subr.mxu0 0.0
    %299 = vmatpush1.msra.mxu0 0.0
    %300 = vmatprep.subr.mxu0 0.0
    %301 = vmatpush1.msra.mxu0 0.0
    %302 = vmatprep.subr.mxu0 0.0
    %303 = vmatpush1.msra.mxu0 0.0
    %304 = vmatprep.subr.mxu0 0.0
    %305 = vmatpush1.msra.mxu0 0.0
    %306 = vmatprep.subr.mxu0 0.0
    %307 = vmatpush1.msra.mxu0 0.0
    %308 = vmatprep.subr.mxu0 0.0
    %309 = vmatpush1.msra.mxu0 0.0
    %310 = vmatprep.subr.mxu0 0.0
    %311 = vmatpush1.msra.mxu0 0.0
    %312 = vmatprep.subr.mxu0 %v266
    %313 = vmatpush1.msra.mxu0 %v265
    %314 = vmatprep.subr.mxu0 %v264
    %315 = vmatpush1.msra.mxu0 %v263
    %316 = vmatprep.subr.mxu0 %v262
    %317 = vmatpush1.msra.mxu0 %v261
    %318 = vmatprep.subr.mxu0 %v260
    %319 = vmatpush1.msra.mxu0 %v259
    %320 = vmatprep.subr.mxu0 0.0
    %321 = vmatpush2.msra.mxu0 0.0
    %322 = vmatprep.subr.mxu0 0.0
    %323 = vmatpush2.msra.mxu0 0.0
    %324 = vmatprep.subr.mxu0 0.0
    %325 = vmatpush2.msra.mxu0 0.0
    %326 = vmatprep.subr.mxu0 0.0
    %327 = vmatpush2.msra.mxu0 0.0
    %328 = vmatprep.subr.mxu0 0.0
    %329 = vmatpush2.msra.mxu0 0.0
    %330 = vmatprep.subr.mxu0 0.0
    %331 = vmatpush2.msra.mxu0 0.0
    %332 = vmatprep.subr.mxu0 0.0
    %333 = vmatpush2.msra.mxu0 0.0
    %334 = vmatprep.subr.mxu0 0.0
    %335 = vmatpush2.msra.mxu0 0.0
    %336 = vmatprep.subr.mxu0 0.0
    %337 = vmatpush2.msra.mxu0 0.0
    %338 = vmatprep.subr.mxu0 0.0
    %339 = vmatpush2.msra.mxu0 0.0
    %340 = vmatprep.subr.mxu0 0.0
    %341 = vmatpush2.msra.mxu0 0.0
    %342 = vmatprep.subr.mxu0 0.0
    %343 = vmatpush2.msra.mxu0 0.0
    %344 = vmatprep.subr.mxu0 0.0
    %345 = vmatpush2.msra.mxu0 0.0
    %346 = vmatprep.subr.mxu0 0.0
    %347 = vmatpush2.msra.mxu0 0.0
    %348 = vmatprep.subr.mxu0 0.0
    %349 = vmatpush2.msra.mxu0 0.0
    %350 = vmatprep.subr.mxu0 0.0
    %351 = vmatpush2.msra.mxu0 0.0
    %352 = vmatprep.mubr.f32.mxu0 0.0
    %353 = vmatmul.mubr.f32.gmra.mxu0 %v283
    %v354 = vpop.f32.mrf.mxu0
    %v355 = vadd.f32 %v274, %v354
    %v356 = vpop.f32.mrf.mxu0
    %v357 = vadd.f32 %v274, %v356
    %358 = vmatprep.mubr.f32.mxu0 0.0
    %359 = vmatmul.mubr.f32.gmra.mxu0 %v286
    %v360 = vpop.f32.mrf.mxu0
    %v361 = vadd.f32 %v279, %v360
    %v362 = vpop.f32.mrf.mxu0
    %v363 = vadd.f32 %v279, %v362
    %364 = vdwg.mxu0
    %v365 = vmax.f32 %v355, 0.0
    %v366 = vmax.f32 %v357, 0.0
    %v367 = vmax.f32 %v361, 0.0
    %v368 = vmax.f32 %v363, 0.0
    %369 = vst [vmem:[#allocation2] sm:$0x1] %v365
    %v372 = vunpack.c.l.s4 1983009808
    %v373 = vunpack.c.0.s8 %v372
    %v374 = vlaneseq
    %v375 = vshrl.u32 %v374, 7
    %v376 = vsub.s32 %v373, %v375
    %v377 = vrot.slane %v365, %v376
    %v378 = vrot.slane %v377, 7
    %v379 = vrot.slane %v378, 2
    %381 = vst [vmem:[#allocation2 + $0x2] sm:$0x1] %v379
    %v382 = vcombine.high %v377, %v377
    %384 = vst [vmem:[#allocation2 + $0x4] sm:$0x1] %v382
    %v385 = vrot.slane %v382, 7
    %v386 = vrot.slane %v385, 2
    %388 = vst [vmem:[#allocation2 + $0x6] sm:$0x1] %v386
    %v389 = vcombine.high %v365, %v365
    %v391 = vunpack.c.l.s4 1983009808
    %v392 = vunpack.c.0.s8 %v391
    %v393 = vlaneseq
    %v394 = vshrl.u32 %v393, 7
    %v395 = vsub.s32 %v392, %v394
    %v396 = vrot.slane %v389, %v395
    %398 = vst [vmem:[#allocation2 + $0x8] sm:$0x1] %v396
    %v399 = vrot.slane %v396, 7
    %v400 = vrot.slane %v399, 2
    %402 = vst [vmem:[#allocation2 + $0xa] sm:$0x1] %v400
    %v403 = vcombine.high %v396, %v396
    %405 = vst [vmem:[#allocation2 + $0xc] sm:$0x1] %v403
    %v406 = vrot.slane %v403, 7
    %v407 = vrot.slane %v406, 2
    %409 = vst [vmem:[#allocation2 + $0xe] sm:$0x1] %v407
    %410 = vst [vmem:[#allocation2 + $0x10] sm:$0x1] %v367
    %v413 = vunpack.c.l.s4 1983009808
    %v414 = vunpack.c.0.s8 %v413
    %v415 = vlaneseq
    %v416 = vshrl.u32 %v415, 7
    %v417 = vsub.s32 %v414, %v416
    %v418 = vrot.slane %v367, %v417
    %v419 = vrot.slane %v418, 7
    %v420 = vrot.slane %v419, 2
    %422 = vst [vmem:[#allocation2 + $0x12] sm:$0x1] %v420
    %v423 = vcombine.high %v418, %v418
    %425 = vst [vmem:[#allocation2 + $0x14] sm:$0x1] %v423
    %v426 = vrot.slane %v423, 7
    %v427 = vrot.slane %v426, 2
    %429 = vst [vmem:[#allocation2 + $0x16] sm:$0x1] %v427
    %v430 = vcombine.high %v367, %v367
    %v432 = vunpack.c.l.s4 1983009808
    %v433 = vunpack.c.0.s8 %v432
    %v434 = vlaneseq
    %v435 = vshrl.u32 %v434, 7
    %v436 = vsub.s32 %v433, %v435
    %v437 = vrot.slane %v430, %v436
    %439 = vst [vmem:[#allocation2 + $0x18] sm:$0x1] %v437
    %v440 = vrot.slane %v437, 7
    %v441 = vrot.slane %v440, 2
    %443 = vst [vmem:[#allocation2 + $0x1a] sm:$0x1] %v441
    %v444 = vcombine.high %v437, %v437
    %446 = vst [vmem:[#allocation2 + $0x1c] sm:$0x1] %v444
    %v447 = vrot.slane %v444, 7
    %v448 = vrot.slane %v447, 2
    %450 = vst [vmem:[#allocation2 + $0x1e] sm:$0x1] %v448
    %451 = vst [vmem:[#allocation2 + $0x1] sm:$0x1] %v366
    %v454 = vunpack.c.l.s4 1983009808
    %v455 = vunpack.c.0.s8 %v454
    %v456 = vlaneseq
    %v457 = vshrl.u32 %v456, 7
    %v458 = vsub.s32 %v455, %v457
    %v459 = vrot.slane %v366, %v458
    %v460 = vrot.slane %v459, 7
    %v461 = vrot.slane %v460, 2
    %463 = vst [vmem:[#allocation2 + $0x3] sm:$0x1] %v461
    %v464 = vcombine.high %v459, %v459
    %466 = vst [vmem:[#allocation2 + $0x5] sm:$0x1] %v464
    %v467 = vrot.slane %v464, 7
    %v468 = vrot.slane %v467, 2
    %470 = vst [vmem:[#allocation2 + $0x7] sm:$0x1] %v468
    %v471 = vcombine.high %v366, %v366
    %v473 = vunpack.c.l.s4 1983009808
    %v474 = vunpack.c.0.s8 %v473
    %v475 = vlaneseq
    %v476 = vshrl.u32 %v475, 7
    %v477 = vsub.s32 %v474, %v476
    %v478 = vrot.slane %v471, %v477
    %480 = vst [vmem:[#allocation2 + $0x9] sm:$0x1] %v478
    %v481 = vrot.slane %v478, 7
    %v482 = vrot.slane %v481, 2
    %484 = vst [vmem:[#allocation2 + $0xb] sm:$0x1] %v482
    %v485 = vcombine.high %v478, %v478
    %487 = vst [vmem:[#allocation2 + $0xd] sm:$0x1] %v485
    %v488 = vrot.slane %v485, 7
    %v489 = vrot.slane %v488, 2
    %491 = vst [vmem:[#allocation2 + $0xf] sm:$0x1] %v489
    %492 = vst [vmem:[#allocation2 + $0x11] sm:$0x1] %v368
    %v495 = vunpack.c.l.s4 1983009808
    %v496 = vunpack.c.0.s8 %v495
    %v497 = vlaneseq
    %v498 = vshrl.u32 %v497, 7
    %v499 = vsub.s32 %v496, %v498
    %v500 = vrot.slane %v368, %v499
    %v501 = vrot.slane %v500, 7
    %v502 = vrot.slane %v501, 2
    %504 = vst [vmem:[#allocation2 + $0x13] sm:$0x1] %v502
    %v505 = vcombine.high %v500, %v500
    %507 = vst [vmem:[#allocation2 + $0x15] sm:$0x1] %v505
    %v508 = vrot.slane %v505, 7
    %v509 = vrot.slane %v508, 2
    %511 = vst [vmem:[#allocation2 + $0x17] sm:$0x1] %v509
    %v512 = vcombine.high %v368, %v368
    %v514 = vunpack.c.l.s4 1983009808
    %v515 = vunpack.c.0.s8 %v514
    %v516 = vlaneseq
    %v517 = vshrl.u32 %v516, 7
    %v518 = vsub.s32 %v515, %v517
    %v519 = vrot.slane %v512, %v518
    %521 = vst [vmem:[#allocation2 + $0x19] sm:$0x1] %v519
    %v522 = vrot.slane %v519, 7
    %v523 = vrot.slane %v522, 2
    %525 = vst [vmem:[#allocation2 + $0x1b] sm:$0x1] %v523
    %v526 = vcombine.high %v519, %v519
    %528 = vst [vmem:[#allocation2 + $0x1d] sm:$0x1] %v526
    %v529 = vrot.slane %v526, 7
    %v530 = vrot.slane %v529, 2
    %532 = vst [vmem:[#allocation2 + $0x1f] sm:$0x1] %v530
    %v533 = vld [vmem:[#allocation2] sm:$0xff]
    %v534 = vld [vmem:[#allocation2 + $0x8] sm:$0xff]
    %v535 = vld [vmem:[#allocation2 + $0x10] sm:$0xff]
    %v536 = vld [vmem:[#allocation2 + $0x18] sm:$0xff]
    %v541 = vcombine.high %v533, %v533
    %v543 = vunpack.c.l.s4 1983009808
    %v544 = vunpack.c.0.s8 %v543
    %v545 = vlaneseq
    %v546 = vshrl.u32 %v545, 7
    %v547 = vsub.s32 %v544, %v546
    %v548 = vrot.slane %v533, %v547
    %v550 = vunpack.c.l.s4 1983009808
    %v551 = vunpack.c.0.s8 %v550
    %v552 = vlaneseq
    %v553 = vshrl.u32 %v552, 7
    %v554 = vsub.s32 %v551, %v553
    %v555 = vrot.slane %v541, %v554
    %v556 = vcombine.high %v548, %v548
    %v557 = vcombine.high %v555, %v555
    %v558 = vcombine.high %v534, %v534
    %v560 = vunpack.c.l.s4 1983009808
    %v561 = vunpack.c.0.s8 %v560
    %v562 = vlaneseq
    %v563 = vshrl.u32 %v562, 7
    %v564 = vsub.s32 %v561, %v563
    %v565 = vrot.slane %v534, %v564
    %v567 = vunpack.c.l.s4 1983009808
    %v568 = vunpack.c.0.s8 %v567
    %v569 = vlaneseq
    %v570 = vshrl.u32 %v569, 7
    %v571 = vsub.s32 %v568, %v570
    %v572 = vrot.slane %v558, %v571
    %v573 = vcombine.high %v565, %v565
    %v574 = vcombine.high %v572, %v572
    %v575 = vcombine.high %v535, %v535
    %v577 = vunpack.c.l.s4 1983009808
    %v578 = vunpack.c.0.s8 %v577
    %v579 = vlaneseq
    %v580 = vshrl.u32 %v579, 7
    %v581 = vsub.s32 %v578, %v580
    %v582 = vrot.slane %v535, %v581
    %v584 = vunpack.c.l.s4 1983009808
    %v585 = vunpack.c.0.s8 %v584
    %v586 = vlaneseq
    %v587 = vshrl.u32 %v586, 7
    %v588 = vsub.s32 %v585, %v587
    %v589 = vrot.slane %v575, %v588
    %v590 = vcombine.high %v582, %v582
    %v591 = vcombine.high %v589, %v589
    %v592 = vcombine.high %v536, %v536
    %v594 = vunpack.c.l.s4 1983009808
    %v595 = vunpack.c.0.s8 %v594
    %v596 = vlaneseq
    %v597 = vshrl.u32 %v596, 7
    %v598 = vsub.s32 %v595, %v597
    %v599 = vrot.slane %v536, %v598
    %v601 = vunpack.c.l.s4 1983009808
    %v602 = vunpack.c.0.s8 %v601
    %v603 = vlaneseq
    %v604 = vshrl.u32 %v603, 7
    %v605 = vsub.s32 %v602, %v604
    %v606 = vrot.slane %v592, %v605
    %v607 = vcombine.high %v599, %v599
    %v608 = vcombine.high %v606, %v606
    %v625 = vpack.c.bf16 %v548, %v548
    %v626 = vpack.c.bf16 %v556, %v556
    %v627 = vpack.c.bf16 %v555, %v555
    %v628 = vpack.c.bf16 %v557, %v557
    %v629 = vpack.c.bf16 %v565, %v565
    %v630 = vpack.c.bf16 %v573, %v573
    %v631 = vpack.c.bf16 %v572, %v572
    %v632 = vpack.c.bf16 %v574, %v574
    %v633 = vpack.c.bf16 %v582, %v582
    %v634 = vpack.c.bf16 %v590, %v590
    %v635 = vpack.c.bf16 %v589, %v589
    %v636 = vpack.c.bf16 %v591, %v591
    %v637 = vpack.c.bf16 %v599, %v599
    %v638 = vpack.c.bf16 %v607, %v607
    %v639 = vpack.c.bf16 %v606, %v606
    %v640 = vpack.c.bf16 %v608, %v608
    %s641 = smul.u32 4, 256
    %s642 = smul.u32 %s641, 4
    %s643 = sshll.u32 %s642, 4
    %644 = dma.done [#allocation4], %s643
    %v645 = vld [vmem:[#allocation3] sm:$0xff]
    %v646 = vld [vmem:[#allocation3 + $0x8] sm:$0xff]
    %v647 = vld [vmem:[#allocation3 + $0x10] sm:$0xff]
    %v648 = vld [vmem:[#allocation3 + $0x18] sm:$0xff]
    %v649 = vld [vmem:[#allocation3 + $0x20] sm:$0xff]
    %v650 = vld [vmem:[#allocation3 + $0x28] sm:$0xff]
    %v651 = vld [vmem:[#allocation3 + $0x30] sm:$0xff]
    %v652 = vld [vmem:[#allocation3 + $0x38] sm:$0xff]
    %v653 = vld [vmem:[#allocation3 + $0x40] sm:$0xff]
    %v654 = vld [vmem:[#allocation3 + $0x48] sm:$0xff]
    %v655 = vld [vmem:[#allocation3 + $0x50] sm:$0xff]
    %v656 = vld [vmem:[#allocation3 + $0x58] sm:$0xff]
    %v657 = vld [vmem:[#allocation3 + $0x60] sm:$0xff]
    %v658 = vld [vmem:[#allocation3 + $0x68] sm:$0xff]
    %v659 = vld [vmem:[#allocation3 + $0x70] sm:$0xff]
    %v660 = vld [vmem:[#allocation3 + $0x78] sm:$0xff]
    %v661 = vld [vmem:[#allocation3 + $0x80] sm:$0xff]
    %v662 = vld [vmem:[#allocation3 + $0x88] sm:$0xff]
    %v663 = vld [vmem:[#allocation3 + $0x90] sm:$0xff]
    %v664 = vld [vmem:[#allocation3 + $0x98] sm:$0xff]
    %v665 = vld [vmem:[#allocation3 + $0xa0] sm:$0xff]
    %v666 = vld [vmem:[#allocation3 + $0xa8] sm:$0xff]
    %v667 = vld [vmem:[#allocation3 + $0xb0] sm:$0xff]
    %v668 = vld [vmem:[#allocation3 + $0xb8] sm:$0xff]
    %v669 = vld [vmem:[#allocation3 + $0xc0] sm:$0xff]
    %v670 = vld [vmem:[#allocation3 + $0xc8] sm:$0xff]
    %v671 = vld [vmem:[#allocation3 + $0xd0] sm:$0xff]
    %v672 = vld [vmem:[#allocation3 + $0xd8] sm:$0xff]
    %v673 = vld [vmem:[#allocation3 + $0xe0] sm:$0xff]
    %v674 = vld [vmem:[#allocation3 + $0xe8] sm:$0xff]
    %v675 = vld [vmem:[#allocation3 + $0xf0] sm:$0xff]
    %v676 = vld [vmem:[#allocation3 + $0xf8] sm:$0xff]
    %v677 = vld [vmem:[#allocation3 + $0x100] sm:$0xff]
    %v678 = vld [vmem:[#allocation3 + $0x108] sm:$0xff]
    %v679 = vld [vmem:[#allocation3 + $0x110] sm:$0xff]
    %v680 = vld [vmem:[#allocation3 + $0x118] sm:$0xff]
    %v681 = vld [vmem:[#allocation3 + $0x120] sm:$0xff]
    %v682 = vld [vmem:[#allocation3 + $0x128] sm:$0xff]
    %v683 = vld [vmem:[#allocation3 + $0x130] sm:$0xff]
    %v684 = vld [vmem:[#allocation3 + $0x138] sm:$0xff]
    %v685 = vld [vmem:[#allocation3 + $0x140] sm:$0xff]
    %v686 = vld [vmem:[#allocation3 + $0x148] sm:$0xff]
    %v687 = vld [vmem:[#allocation3 + $0x150] sm:$0xff]
    %v688 = vld [vmem:[#allocation3 + $0x158] sm:$0xff]
    %v689 = vld [vmem:[#allocation3 + $0x160] sm:$0xff]
    %v690 = vld [vmem:[#allocation3 + $0x168] sm:$0xff]
    %v691 = vld [vmem:[#allocation3 + $0x170] sm:$0xff]
    %v692 = vld [vmem:[#allocation3 + $0x178] sm:$0xff]
    %v693 = vld [vmem:[#allocation3 + $0x180] sm:$0xff]
    %v694 = vld [vmem:[#allocation3 + $0x188] sm:$0xff]
    %v695 = vld [vmem:[#allocation3 + $0x190] sm:$0xff]
    %v696 = vld [vmem:[#allocation3 + $0x198] sm:$0xff]
    %v697 = vld [vmem:[#allocation3 + $0x1a0] sm:$0xff]
    %v698 = vld [vmem:[#allocation3 + $0x1a8] sm:$0xff]
    %v699 = vld [vmem:[#allocation3 + $0x1b0] sm:$0xff]
    %v700 = vld [vmem:[#allocation3 + $0x1b8] sm:$0xff]
    %v701 = vld [vmem:[#allocation3 + $0x1c0] sm:$0xff]
    %v702 = vld [vmem:[#allocation3 + $0x1c8] sm:$0xff]
    %v703 = vld [vmem:[#allocation3 + $0x1d0] sm:$0xff]
    %v704 = vld [vmem:[#allocation3 + $0x1d8] sm:$0xff]
    %v705 = vld [vmem:[#allocation3 + $0x1e0] sm:$0xff]
    %v706 = vld [vmem:[#allocation3 + $0x1e8] sm:$0xff]
    %v707 = vld [vmem:[#allocation3 + $0x1f0] sm:$0xff]
    %v708 = vld [vmem:[#allocation3 + $0x1f8] sm:$0xff]
    %v709 = vld [vmem:[#allocation3 + $0x200] sm:$0xff]
    %v710 = vld [vmem:[#allocation3 + $0x208] sm:$0xff]
    %v711 = vld [vmem:[#allocation3 + $0x210] sm:$0xff]
    %v712 = vld [vmem:[#allocation3 + $0x218] sm:$0xff]
    %v713 = vld [vmem:[#allocation3 + $0x220] sm:$0xff]
    %v714 = vld [vmem:[#allocation3 + $0x228] sm:$0xff]
    %v715 = vld [vmem:[#allocation3 + $0x230] sm:$0xff]
    %v716 = vld [vmem:[#allocation3 + $0x238] sm:$0xff]
    %v717 = vld [vmem:[#allocation3 + $0x240] sm:$0xff]
    %v718 = vld [vmem:[#allocation3 + $0x248] sm:$0xff]
    %v719 = vld [vmem:[#allocation3 + $0x250] sm:$0xff]
    %v720 = vld [vmem:[#allocation3 + $0x258] sm:$0xff]
    %v721 = vld [vmem:[#allocation3 + $0x260] sm:$0xff]
    %v722 = vld [vmem:[#allocation3 + $0x268] sm:$0xff]
    %v723 = vld [vmem:[#allocation3 + $0x270] sm:$0xff]
    %v724 = vld [vmem:[#allocation3 + $0x278] sm:$0xff]
    %v725 = vld [vmem:[#allocation3 + $0x280] sm:$0xff]
    %v726 = vld [vmem:[#allocation3 + $0x288] sm:$0xff]
    %v727 = vld [vmem:[#allocation3 + $0x290] sm:$0xff]
    %v728 = vld [vmem:[#allocation3 + $0x298] sm:$0xff]
    %v729 = vld [vmem:[#allocation3 + $0x2a0] sm:$0xff]
    %v730 = vld [vmem:[#allocation3 + $0x2a8] sm:$0xff]
    %v731 = vld [vmem:[#allocation3 + $0x2b0] sm:$0xff]
    %v732 = vld [vmem:[#allocation3 + $0x2b8] sm:$0xff]
    %v733 = vld [vmem:[#allocation3 + $0x2c0] sm:$0xff]
    %v734 = vld [vmem:[#allocation3 + $0x2c8] sm:$0xff]
    %v735 = vld [vmem:[#allocation3 + $0x2d0] sm:$0xff]
    %v736 = vld [vmem:[#allocation3 + $0x2d8] sm:$0xff]
    %v737 = vld [vmem:[#allocation3 + $0x2e0] sm:$0xff]
    %v738 = vld [vmem:[#allocation3 + $0x2e8] sm:$0xff]
    %v739 = vld [vmem:[#allocation3 + $0x2f0] sm:$0xff]
    %v740 = vld [vmem:[#allocation3 + $0x2f8] sm:$0xff]
    %v741 = vld [vmem:[#allocation3 + $0x300] sm:$0xff]
    %v742 = vld [vmem:[#allocation3 + $0x308] sm:$0xff]
    %v743 = vld [vmem:[#allocation3 + $0x310] sm:$0xff]
    %v744 = vld [vmem:[#allocation3 + $0x318] sm:$0xff]
    %v745 = vld [vmem:[#allocation3 + $0x320] sm:$0xff]
    %v746 = vld [vmem:[#allocation3 + $0x328] sm:$0xff]
    %v747 = vld [vmem:[#allocation3 + $0x330] sm:$0xff]
    %v748 = vld [vmem:[#allocation3 + $0x338] sm:$0xff]
    %v749 = vld [vmem:[#allocation3 + $0x340] sm:$0xff]
    %v750 = vld [vmem:[#allocation3 + $0x348] sm:$0xff]
    %v751 = vld [vmem:[#allocation3 + $0x350] sm:$0xff]
    %v752 = vld [vmem:[#allocation3 + $0x358] sm:$0xff]
    %v753 = vld [vmem:[#allocation3 + $0x360] sm:$0xff]
    %v754 = vld [vmem:[#allocation3 + $0x368] sm:$0xff]
    %v755 = vld [vmem:[#allocation3 + $0x370] sm:$0xff]
    %v756 = vld [vmem:[#allocation3 + $0x378] sm:$0xff]
    %v757 = vld [vmem:[#allocation3 + $0x380] sm:$0xff]
    %v758 = vld [vmem:[#allocation3 + $0x388] sm:$0xff]
    %v759 = vld [vmem:[#allocation3 + $0x390] sm:$0xff]
    %v760 = vld [vmem:[#allocation3 + $0x398] sm:$0xff]
    %v761 = vld [vmem:[#allocation3 + $0x3a0] sm:$0xff]
    %v762 = vld [vmem:[#allocation3 + $0x3a8] sm:$0xff]
    %v763 = vld [vmem:[#allocation3 + $0x3b0] sm:$0xff]
    %v764 = vld [vmem:[#allocation3 + $0x3b8] sm:$0xff]
    %v765 = vld [vmem:[#allocation3 + $0x3c0] sm:$0xff]
    %v766 = vld [vmem:[#allocation3 + $0x3c8] sm:$0xff]
    %v767 = vld [vmem:[#allocation3 + $0x3d0] sm:$0xff]
    %v768 = vld [vmem:[#allocation3 + $0x3d8] sm:$0xff]
    %v769 = vld [vmem:[#allocation3 + $0x3e0] sm:$0xff]
    %v770 = vld [vmem:[#allocation3 + $0x3e8] sm:$0xff]
    %v771 = vld [vmem:[#allocation3 + $0x3f0] sm:$0xff]
    %v772 = vld [vmem:[#allocation3 + $0x3f8] sm:$0xff]
    %v773 = vld [vmem:[#allocation3 + $0x400] sm:$0xff]
    %v774 = vld [vmem:[#allocation3 + $0x408] sm:$0xff]
    %v775 = vld [vmem:[#allocation3 + $0x410] sm:$0xff]
    %v776 = vld [vmem:[#allocation3 + $0x418] sm:$0xff]
    %v777 = vld [vmem:[#allocation3 + $0x420] sm:$0xff]
    %v778 = vld [vmem:[#allocation3 + $0x428] sm:$0xff]
    %v779 = vld [vmem:[#allocation3 + $0x430] sm:$0xff]
    %v780 = vld [vmem:[#allocation3 + $0x438] sm:$0xff]
    %v781 = vld [vmem:[#allocation3 + $0x440] sm:$0xff]
    %v782 = vld [vmem:[#allocation3 + $0x448] sm:$0xff]
    %v783 = vld [vmem:[#allocation3 + $0x450] sm:$0xff]
    %v784 = vld [vmem:[#allocation3 + $0x458] sm:$0xff]
    %v785 = vld [vmem:[#allocation3 + $0x460] sm:$0xff]
    %v786 = vld [vmem:[#allocation3 + $0x468] sm:$0xff]
    %v787 = vld [vmem:[#allocation3 + $0x470] sm:$0xff]
    %v788 = vld [vmem:[#allocation3 + $0x478] sm:$0xff]
    %v789 = vld [vmem:[#allocation3 + $0x480] sm:$0xff]
    %v790 = vld [vmem:[#allocation3 + $0x488] sm:$0xff]
    %v791 = vld [vmem:[#allocation3 + $0x490] sm:$0xff]
    %v792 = vld [vmem:[#allocation3 + $0x498] sm:$0xff]
    %v793 = vld [vmem:[#allocation3 + $0x4a0] sm:$0xff]
    %v794 = vld [vmem:[#allocation3 + $0x4a8] sm:$0xff]
    %v795 = vld [vmem:[#allocation3 + $0x4b0] sm:$0xff]
    %v796 = vld [vmem:[#allocation3 + $0x4b8] sm:$0xff]
    %v797 = vld [vmem:[#allocation3 + $0x4c0] sm:$0xff]
    %v798 = vld [vmem:[#allocation3 + $0x4c8] sm:$0xff]
    %v799 = vld [vmem:[#allocation3 + $0x4d0] sm:$0xff]
    %v800 = vld [vmem:[#allocation3 + $0x4d8] sm:$0xff]
    %v801 = vld [vmem:[#allocation3 + $0x4e0] sm:$0xff]
    %v802 = vld [vmem:[#allocation3 + $0x4e8] sm:$0xff]
    %v803 = vld [vmem:[#allocation3 + $0x4f0] sm:$0xff]
    %v804 = vld [vmem:[#allocation3 + $0x4f8] sm:$0xff]
    %v805 = vld [vmem:[#allocation3 + $0x500] sm:$0xff]
    %v806 = vld [vmem:[#allocation3 + $0x508] sm:$0xff]
    %v807 = vld [vmem:[#allocation3 + $0x510] sm:$0xff]
    %v808 = vld [vmem:[#allocation3 + $0x518] sm:$0xff]
    %v809 = vld [vmem:[#allocation3 + $0x520] sm:$0xff]
    %v810 = vld [vmem:[#allocation3 + $0x528] sm:$0xff]
    %v811 = vld [vmem:[#allocation3 + $0x530] sm:$0xff]
    %v812 = vld [vmem:[#allocation3 + $0x538] sm:$0xff]
    %v813 = vld [vmem:[#allocation3 + $0x540] sm:$0xff]
    %v814 = vld [vmem:[#allocation3 + $0x548] sm:$0xff]
    %v815 = vld [vmem:[#allocation3 + $0x550] sm:$0xff]
    %v816 = vld [vmem:[#allocation3 + $0x558] sm:$0xff]
    %v817 = vld [vmem:[#allocation3 + $0x560] sm:$0xff]
    %v818 = vld [vmem:[#allocation3 + $0x568] sm:$0xff]
    %v819 = vld [vmem:[#allocation3 + $0x570] sm:$0xff]
    %v820 = vld [vmem:[#allocation3 + $0x578] sm:$0xff]
    %v821 = vld [vmem:[#allocation3 + $0x580] sm:$0xff]
    %v822 = vld [vmem:[#allocation3 + $0x588] sm:$0xff]
    %v823 = vld [vmem:[#allocation3 + $0x590] sm:$0xff]
    %v824 = vld [vmem:[#allocation3 + $0x598] sm:$0xff]
    %v825 = vld [vmem:[#allocation3 + $0x5a0] sm:$0xff]
    %v826 = vld [vmem:[#allocation3 + $0x5a8] sm:$0xff]
    %v827 = vld [vmem:[#allocation3 + $0x5b0] sm:$0xff]
    %v828 = vld [vmem:[#allocation3 + $0x5b8] sm:$0xff]
    %v829 = vld [vmem:[#allocation3 + $0x5c0] sm:$0xff]
    %v830 = vld [vmem:[#allocation3 + $0x5c8] sm:$0xff]
    %v831 = vld [vmem:[#allocation3 + $0x5d0] sm:$0xff]
    %v832 = vld [vmem:[#allocation3 + $0x5d8] sm:$0xff]
    %v833 = vld [vmem:[#allocation3 + $0x5e0] sm:$0xff]
    %v834 = vld [vmem:[#allocation3 + $0x5e8] sm:$0xff]
    %v835 = vld [vmem:[#allocation3 + $0x5f0] sm:$0xff]
    %v836 = vld [vmem:[#allocation3 + $0x5f8] sm:$0xff]
    %v837 = vld [vmem:[#allocation3 + $0x600] sm:$0xff]
    %v838 = vld [vmem:[#allocation3 + $0x608] sm:$0xff]
    %v839 = vld [vmem:[#allocation3 + $0x610] sm:$0xff]
    %v840 = vld [vmem:[#allocation3 + $0x618] sm:$0xff]
    %v841 = vld [vmem:[#allocation3 + $0x620] sm:$0xff]
    %v842 = vld [vmem:[#allocation3 + $0x628] sm:$0xff]
    %v843 = vld [vmem:[#allocation3 + $0x630] sm:$0xff]
    %v844 = vld [vmem:[#allocation3 + $0x638] sm:$0xff]
    %v845 = vld [vmem:[#allocation3 + $0x640] sm:$0xff]
    %v846 = vld [vmem:[#allocation3 + $0x648] sm:$0xff]
    %v847 = vld [vmem:[#allocation3 + $0x650] sm:$0xff]
    %v848 = vld [vmem:[#allocation3 + $0x658] sm:$0xff]
    %v849 = vld [vmem:[#allocation3 + $0x660] sm:$0xff]
    %v850 = vld [vmem:[#allocation3 + $0x668] sm:$0xff]
    %v851 = vld [vmem:[#allocation3 + $0x670] sm:$0xff]
    %v852 = vld [vmem:[#allocation3 + $0x678] sm:$0xff]
    %v853 = vld [vmem:[#allocation3 + $0x680] sm:$0xff]
    %v854 = vld [vmem:[#allocation3 + $0x688] sm:$0xff]
    %v855 = vld [vmem:[#allocation3 + $0x690] sm:$0xff]
    %v856 = vld [vmem:[#allocation3 + $0x698] sm:$0xff]
    %v857 = vld [vmem:[#allocation3 + $0x6a0] sm:$0xff]
    %v858 = vld [vmem:[#allocation3 + $0x6a8] sm:$0xff]
    %v859 = vld [vmem:[#allocation3 + $0x6b0] sm:$0xff]
    %v860 = vld [vmem:[#allocation3 + $0x6b8] sm:$0xff]
    %v861 = vld [vmem:[#allocation3 + $0x6c0] sm:$0xff]
    %v862 = vld [vmem:[#allocation3 + $0x6c8] sm:$0xff]
    %v863 = vld [vmem:[#allocation3 + $0x6d0] sm:$0xff]
    %v864 = vld [vmem:[#allocation3 + $0x6d8] sm:$0xff]
    %v865 = vld [vmem:[#allocation3 + $0x6e0] sm:$0xff]
    %v866 = vld [vmem:[#allocation3 + $0x6e8] sm:$0xff]
    %v867 = vld [vmem:[#allocation3 + $0x6f0] sm:$0xff]
    %v868 = vld [vmem:[#allocation3 + $0x6f8] sm:$0xff]
    %v869 = vld [vmem:[#allocation3 + $0x700] sm:$0xff]
    %v870 = vld [vmem:[#allocation3 + $0x708] sm:$0xff]
    %v871 = vld [vmem:[#allocation3 + $0x710] sm:$0xff]
    %v872 = vld [vmem:[#allocation3 + $0x718] sm:$0xff]
    %v873 = vld [vmem:[#allocation3 + $0x720] sm:$0xff]
    %v874 = vld [vmem:[#allocation3 + $0x728] sm:$0xff]
    %v875 = vld [vmem:[#allocation3 + $0x730] sm:$0xff]
    %v876 = vld [vmem:[#allocation3 + $0x738] sm:$0xff]
    %v877 = vld [vmem:[#allocation3 + $0x740] sm:$0xff]
    %v878 = vld [vmem:[#allocation3 + $0x748] sm:$0xff]
    %v879 = vld [vmem:[#allocation3 + $0x750] sm:$0xff]
    %v880 = vld [vmem:[#allocation3 + $0x758] sm:$0xff]
    %v881 = vld [vmem:[#allocation3 + $0x760] sm:$0xff]
    %v882 = vld [vmem:[#allocation3 + $0x768] sm:$0xff]
    %v883 = vld [vmem:[#allocation3 + $0x770] sm:$0xff]
    %v884 = vld [vmem:[#allocation3 + $0x778] sm:$0xff]
    %v885 = vld [vmem:[#allocation3 + $0x780] sm:$0xff]
    %v886 = vld [vmem:[#allocation3 + $0x788] sm:$0xff]
    %v887 = vld [vmem:[#allocation3 + $0x790] sm:$0xff]
    %v888 = vld [vmem:[#allocation3 + $0x798] sm:$0xff]
    %v889 = vld [vmem:[#allocation3 + $0x7a0] sm:$0xff]
    %v890 = vld [vmem:[#allocation3 + $0x7a8] sm:$0xff]
    %v891 = vld [vmem:[#allocation3 + $0x7b0] sm:$0xff]
    %v892 = vld [vmem:[#allocation3 + $0x7b8] sm:$0xff]
    %v893 = vld [vmem:[#allocation3 + $0x7c0] sm:$0xff]
    %v894 = vld [vmem:[#allocation3 + $0x7c8] sm:$0xff]
    %v895 = vld [vmem:[#allocation3 + $0x7d0] sm:$0xff]
    %v896 = vld [vmem:[#allocation3 + $0x7d8] sm:$0xff]
    %v897 = vld [vmem:[#allocation3 + $0x7e0] sm:$0xff]
    %v898 = vld [vmem:[#allocation3 + $0x7e8] sm:$0xff]
    %v899 = vld [vmem:[#allocation3 + $0x7f0] sm:$0xff]
    %v900 = vld [vmem:[#allocation3 + $0x7f8] sm:$0xff]
    %v901 = vld [vmem:[#allocation3 + $0x800] sm:$0xff]
    %v902 = vld [vmem:[#allocation3 + $0x808] sm:$0xff]
    %v903 = vld [vmem:[#allocation3 + $0x810] sm:$0xff]
    %v904 = vld [vmem:[#allocation3 + $0x818] sm:$0xff]
    %v905 = vld [vmem:[#allocation3 + $0x820] sm:$0xff]
    %v906 = vld [vmem:[#allocation3 + $0x828] sm:$0xff]
    %v907 = vld [vmem:[#allocation3 + $0x830] sm:$0xff]
    %v908 = vld [vmem:[#allocation3 + $0x838] sm:$0xff]
    %v909 = vld [vmem:[#allocation3 + $0x840] sm:$0xff]
    %v910 = vld [vmem:[#allocation3 + $0x848] sm:$0xff]
    %v911 = vld [vmem:[#allocation3 + $0x850] sm:$0xff]
    %v912 = vld [vmem:[#allocation3 + $0x858] sm:$0xff]
    %v913 = vld [vmem:[#allocation3 + $0x860] sm:$0xff]
    %v914 = vld [vmem:[#allocation3 + $0x868] sm:$0xff]
    %v915 = vld [vmem:[#allocation3 + $0x870] sm:$0xff]
    %v916 = vld [vmem:[#allocation3 + $0x878] sm:$0xff]
    %v917 = vld [vmem:[#allocation3 + $0x880] sm:$0xff]
    %v918 = vld [vmem:[#allocation3 + $0x888] sm:$0xff]
    %v919 = vld [vmem:[#allocation3 + $0x890] sm:$0xff]
    %v920 = vld [vmem:[#allocation3 + $0x898] sm:$0xff]
    %v921 = vld [vmem:[#allocation3 + $0x8a0] sm:$0xff]
    %v922 = vld [vmem:[#allocation3 + $0x8a8] sm:$0xff]
    %v923 = vld [vmem:[#allocation3 + $0x8b0] sm:$0xff]
    %v924 = vld [vmem:[#allocation3 + $0x8b8] sm:$0xff]
    %v925 = vld [vmem:[#allocation3 + $0x8c0] sm:$0xff]
    %v926 = vld [vmem:[#allocation3 + $0x8c8] sm:$0xff]
    %v927 = vld [vmem:[#allocation3 + $0x8d0] sm:$0xff]
    %v928 = vld [vmem:[#allocation3 + $0x8d8] sm:$0xff]
    %v929 = vld [vmem:[#allocation3 + $0x8e0] sm:$0xff]
    %v930 = vld [vmem:[#allocation3 + $0x8e8] sm:$0xff]
    %v931 = vld [vmem:[#allocation3 + $0x8f0] sm:$0xff]
    %v932 = vld [vmem:[#allocation3 + $0x8f8] sm:$0xff]
    %v933 = vld [vmem:[#allocation3 + $0x900] sm:$0xff]
    %v934 = vld [vmem:[#allocation3 + $0x908] sm:$0xff]
    %v935 = vld [vmem:[#allocation3 + $0x910] sm:$0xff]
    %v936 = vld [vmem:[#allocation3 + $0x918] sm:$0xff]
    %v937 = vld [vmem:[#allocation3 + $0x920] sm:$0xff]
    %v938 = vld [vmem:[#allocation3 + $0x928] sm:$0xff]
    %v939 = vld [vmem:[#allocation3 + $0x930] sm:$0xff]
    %v940 = vld [vmem:[#allocation3 + $0x938] sm:$0xff]
    %v941 = vld [vmem:[#allocation3 + $0x940] sm:$0xff]
    %v942 = vld [vmem:[#allocation3 + $0x948] sm:$0xff]
    %v943 = vld [vmem:[#allocation3 + $0x950] sm:$0xff]
    %v944 = vld [vmem:[#allocation3 + $0x958] sm:$0xff]
    %v945 = vld [vmem:[#allocation3 + $0x960] sm:$0xff]
    %v946 = vld [vmem:[#allocation3 + $0x968] sm:$0xff]
    %v947 = vld [vmem:[#allocation3 + $0x970] sm:$0xff]
    %v948 = vld [vmem:[#allocation3 + $0x978] sm:$0xff]
    %v949 = vld [vmem:[#allocation3 + $0x980] sm:$0xff]
    %v950 = vld [vmem:[#allocation3 + $0x988] sm:$0xff]
    %v951 = vld [vmem:[#allocation3 + $0x990] sm:$0xff]
    %v952 = vld [vmem:[#allocation3 + $0x998] sm:$0xff]
    %v953 = vld [vmem:[#allocation3 + $0x9a0] sm:$0xff]
    %v954 = vld [vmem:[#allocation3 + $0x9a8] sm:$0xff]
    %v955 = vld [vmem:[#allocation3 + $0x9b0] sm:$0xff]
    %v956 = vld [vmem:[#allocation3 + $0x9b8] sm:$0xff]
    %v957 = vld [vmem:[#allocation3 + $0x9c0] sm:$0xff]
    %v958 = vld [vmem:[#allocation3 + $0x9c8] sm:$0xff]
    %v959 = vld [vmem:[#allocation3 + $0x9d0] sm:$0xff]
    %v960 = vld [vmem:[#allocation3 + $0x9d8] sm:$0xff]
    %v961 = vld [vmem:[#allocation3 + $0x9e0] sm:$0xff]
    %v962 = vld [vmem:[#allocation3 + $0x9e8] sm:$0xff]
    %v963 = vld [vmem:[#allocation3 + $0x9f0] sm:$0xff]
    %v964 = vld [vmem:[#allocation3 + $0x9f8] sm:$0xff]
    %v965 = vld [vmem:[#allocation3 + $0xa00] sm:$0xff]
    %v966 = vld [vmem:[#allocation3 + $0xa08] sm:$0xff]
    %v967 = vld [vmem:[#allocation3 + $0xa10] sm:$0xff]
    %v968 = vld [vmem:[#allocation3 + $0xa18] sm:$0xff]
    %v969 = vld [vmem:[#allocation3 + $0xa20] sm:$0xff]
    %v970 = vld [vmem:[#allocation3 + $0xa28] sm:$0xff]
    %v971 = vld [vmem:[#allocation3 + $0xa30] sm:$0xff]
    %v972 = vld [vmem:[#allocation3 + $0xa38] sm:$0xff]
    %v973 = vld [vmem:[#allocation3 + $0xa40] sm:$0xff]
    %v974 = vld [vmem:[#allocation3 + $0xa48] sm:$0xff]
    %v975 = vld [vmem:[#allocation3 + $0xa50] sm:$0xff]
    %v976 = vld [vmem:[#allocation3 + $0xa58] sm:$0xff]
    %v977 = vld [vmem:[#allocation3 + $0xa60] sm:$0xff]
    %v978 = vld [vmem:[#allocation3 + $0xa68] sm:$0xff]
    %v979 = vld [vmem:[#allocation3 + $0xa70] sm:$0xff]
    %v980 = vld [vmem:[#allocation3 + $0xa78] sm:$0xff]
    %v981 = vld [vmem:[#allocation3 + $0xa80] sm:$0xff]
    %v982 = vld [vmem:[#allocation3 + $0xa88] sm:$0xff]
    %v983 = vld [vmem:[#allocation3 + $0xa90] sm:$0xff]
    %v984 = vld [vmem:[#allocation3 + $0xa98] sm:$0xff]
    %v985 = vld [vmem:[#allocation3 + $0xaa0] sm:$0xff]
    %v986 = vld [vmem:[#allocation3 + $0xaa8] sm:$0xff]
    %v987 = vld [vmem:[#allocation3 + $0xab0] sm:$0xff]
    %v988 = vld [vmem:[#allocation3 + $0xab8] sm:$0xff]
    %v989 = vld [vmem:[#allocation3 + $0xac0] sm:$0xff]
    %v990 = vld [vmem:[#allocation3 + $0xac8] sm:$0xff]
    %v991 = vld [vmem:[#allocation3 + $0xad0] sm:$0xff]
    %v992 = vld [vmem:[#allocation3 + $0xad8] sm:$0xff]
    %v993 = vld [vmem:[#allocation3 + $0xae0] sm:$0xff]
    %v994 = vld [vmem:[#allocation3 + $0xae8] sm:$0xff]
    %v995 = vld [vmem:[#allocation3 + $0xaf0] sm:$0xff]
    %v996 = vld [vmem:[#allocation3 + $0xaf8] sm:$0xff]
    %v997 = vld [vmem:[#allocation3 + $0xb00] sm:$0xff]
    %v998 = vld [vmem:[#allocation3 + $0xb08] sm:$0xff]
    %v999 = vld [vmem:[#allocation3 + $0xb10] sm:$0xff]
    %v1000 = vld [vmem:[#allocation3 + $0xb18] sm:$0xff]
    %v1001 = vld [vmem:[#allocation3 + $0xb20] sm:$0xff]
    %v1002 = vld [vmem:[#allocation3 + $0xb28] sm:$0xff]
    %v1003 = vld [vmem:[#allocation3 + $0xb30] sm:$0xff]
    %v1004 = vld [vmem:[#allocation3 + $0xb38] sm:$0xff]
    %v1005 = vld [vmem:[#allocation3 + $0xb40] sm:$0xff]
    %v1006 = vld [vmem:[#allocation3 + $0xb48] sm:$0xff]
    %v1007 = vld [vmem:[#allocation3 + $0xb50] sm:$0xff]
    %v1008 = vld [vmem:[#allocation3 + $0xb58] sm:$0xff]
    %v1009 = vld [vmem:[#allocation3 + $0xb60] sm:$0xff]
    %v1010 = vld [vmem:[#allocation3 + $0xb68] sm:$0xff]
    %v1011 = vld [vmem:[#allocation3 + $0xb70] sm:$0xff]
    %v1012 = vld [vmem:[#allocation3 + $0xb78] sm:$0xff]
    %v1013 = vld [vmem:[#allocation3 + $0xb80] sm:$0xff]
    %v1014 = vld [vmem:[#allocation3 + $0xb88] sm:$0xff]
    %v1015 = vld [vmem:[#allocation3 + $0xb90] sm:$0xff]
    %v1016 = vld [vmem:[#allocation3 + $0xb98] sm:$0xff]
    %v1017 = vld [vmem:[#allocation3 + $0xba0] sm:$0xff]
    %v1018 = vld [vmem:[#allocation3 + $0xba8] sm:$0xff]
    %v1019 = vld [vmem:[#allocation3 + $0xbb0] sm:$0xff]
    %v1020 = vld [vmem:[#allocation3 + $0xbb8] sm:$0xff]
    %v1021 = vld [vmem:[#allocation3 + $0xbc0] sm:$0xff]
    %v1022 = vld [vmem:[#allocation3 + $0xbc8] sm:$0xff]
    %v1023 = vld [vmem:[#allocation3 + $0xbd0] sm:$0xff]
    %v1024 = vld [vmem:[#allocation3 + $0xbd8] sm:$0xff]
    %v1025 = vld [vmem:[#allocation3 + $0xbe0] sm:$0xff]
    %v1026 = vld [vmem:[#allocation3 + $0xbe8] sm:$0xff]
    %v1027 = vld [vmem:[#allocation3 + $0xbf0] sm:$0xff]
    %v1028 = vld [vmem:[#allocation3 + $0xbf8] sm:$0xff]
    %v1029 = vld [vmem:[#allocation3 + $0xc00] sm:$0xff]
    %v1030 = vld [vmem:[#allocation3 + $0xc08] sm:$0xff]
    %v1031 = vld [vmem:[#allocation3 + $0xc10] sm:$0xff]
    %v1032 = vld [vmem:[#allocation3 + $0xc18] sm:$0xff]
    %v1033 = vld [vmem:[#allocation3 + $0xc20] sm:$0xff]
    %v1034 = vld [vmem:[#allocation3 + $0xc28] sm:$0xff]
    %v1035 = vld [vmem:[#allocation3 + $0xc30] sm:$0xff]
    %v1036 = vld [vmem:[#allocation3 + $0xc38] sm:$0xff]
    %v1037 = vld [vmem:[#allocation3 + $0xc40] sm:$0xff]
    %v1038 = vld [vmem:[#allocation3 + $0xc48] sm:$0xff]
    %v1039 = vld [vmem:[#allocation3 + $0xc50] sm:$0xff]
    %v1040 = vld [vmem:[#allocation3 + $0xc58] sm:$0xff]
    %v1041 = vld [vmem:[#allocation3 + $0xc60] sm:$0xff]
    %v1042 = vld [vmem:[#allocation3 + $0xc68] sm:$0xff]
    %v1043 = vld [vmem:[#allocation3 + $0xc70] sm:$0xff]
    %v1044 = vld [vmem:[#allocation3 + $0xc78] sm:$0xff]
    %v1045 = vld [vmem:[#allocation3 + $0xc80] sm:$0xff]
    %v1046 = vld [vmem:[#allocation3 + $0xc88] sm:$0xff]
    %v1047 = vld [vmem:[#allocation3 + $0xc90] sm:$0xff]
    %v1048 = vld [vmem:[#allocation3 + $0xc98] sm:$0xff]
    %v1049 = vld [vmem:[#allocation3 + $0xca0] sm:$0xff]
    %v1050 = vld [vmem:[#allocation3 + $0xca8] sm:$0xff]
    %v1051 = vld [vmem:[#allocation3 + $0xcb0] sm:$0xff]
    %v1052 = vld [vmem:[#allocation3 + $0xcb8] sm:$0xff]
    %v1053 = vld [vmem:[#allocation3 + $0xcc0] sm:$0xff]
    %v1054 = vld [vmem:[#allocation3 + $0xcc8] sm:$0xff]
    %v1055 = vld [vmem:[#allocation3 + $0xcd0] sm:$0xff]
    %v1056 = vld [vmem:[#allocation3 + $0xcd8] sm:$0xff]
    %v1057 = vld [vmem:[#allocation3 + $0xce0] sm:$0xff]
    %v1058 = vld [vmem:[#allocation3 + $0xce8] sm:$0xff]
    %v1059 = vld [vmem:[#allocation3 + $0xcf0] sm:$0xff]
    %v1060 = vld [vmem:[#allocation3 + $0xcf8] sm:$0xff]
    %v1061 = vld [vmem:[#allocation3 + $0xd00] sm:$0xff]
    %v1062 = vld [vmem:[#allocation3 + $0xd08] sm:$0xff]
    %v1063 = vld [vmem:[#allocation3 + $0xd10] sm:$0xff]
    %v1064 = vld [vmem:[#allocation3 + $0xd18] sm:$0xff]
    %v1065 = vld [vmem:[#allocation3 + $0xd20] sm:$0xff]
    %v1066 = vld [vmem:[#allocation3 + $0xd28] sm:$0xff]
    %v1067 = vld [vmem:[#allocation3 + $0xd30] sm:$0xff]
    %v1068 = vld [vmem:[#allocation3 + $0xd38] sm:$0xff]
    %v1069 = vld [vmem:[#allocation3 + $0xd40] sm:$0xff]
    %v1070 = vld [vmem:[#allocation3 + $0xd48] sm:$0xff]
    %v1071 = vld [vmem:[#allocation3 + $0xd50] sm:$0xff]
    %v1072 = vld [vmem:[#allocation3 + $0xd58] sm:$0xff]
    %v1073 = vld [vmem:[#allocation3 + $0xd60] sm:$0xff]
    %v1074 = vld [vmem:[#allocation3 + $0xd68] sm:$0xff]
    %v1075 = vld [vmem:[#allocation3 + $0xd70] sm:$0xff]
    %v1076 = vld [vmem:[#allocation3 + $0xd78] sm:$0xff]
    %v1077 = vld [vmem:[#allocation3 + $0xd80] sm:$0xff]
    %v1078 = vld [vmem:[#allocation3 + $0xd88] sm:$0xff]
    %v1079 = vld [vmem:[#allocation3 + $0xd90] sm:$0xff]
    %v1080 = vld [vmem:[#allocation3 + $0xd98] sm:$0xff]
    %v1081 = vld [vmem:[#allocation3 + $0xda0] sm:$0xff]
    %v1082 = vld [vmem:[#allocation3 + $0xda8] sm:$0xff]
    %v1083 = vld [vmem:[#allocation3 + $0xdb0] sm:$0xff]
    %v1084 = vld [vmem:[#allocation3 + $0xdb8] sm:$0xff]
    %v1085 = vld [vmem:[#allocation3 + $0xdc0] sm:$0xff]
    %v1086 = vld [vmem:[#allocation3 + $0xdc8] sm:$0xff]
    %v1087 = vld [vmem:[#allocation3 + $0xdd0] sm:$0xff]
    %v1088 = vld [vmem:[#allocation3 + $0xdd8] sm:$0xff]
    %v1089 = vld [vmem:[#allocation3 + $0xde0] sm:$0xff]
    %v1090 = vld [vmem:[#allocation3 + $0xde8] sm:$0xff]
    %v1091 = vld [vmem:[#allocation3 + $0xdf0] sm:$0xff]
    %v1092 = vld [vmem:[#allocation3 + $0xdf8] sm:$0xff]
    %v1093 = vld [vmem:[#allocation3 + $0xe00] sm:$0xff]
    %v1094 = vld [vmem:[#allocation3 + $0xe08] sm:$0xff]
    %v1095 = vld [vmem:[#allocation3 + $0xe10] sm:$0xff]
    %v1096 = vld [vmem:[#allocation3 + $0xe18] sm:$0xff]
    %v1097 = vld [vmem:[#allocation3 + $0xe20] sm:$0xff]
    %v1098 = vld [vmem:[#allocation3 + $0xe28] sm:$0xff]
    %v1099 = vld [vmem:[#allocation3 + $0xe30] sm:$0xff]
    %v1100 = vld [vmem:[#allocation3 + $0xe38] sm:$0xff]
    %v1101 = vld [vmem:[#allocation3 + $0xe40] sm:$0xff]
    %v1102 = vld [vmem:[#allocation3 + $0xe48] sm:$0xff]
    %v1103 = vld [vmem:[#allocation3 + $0xe50] sm:$0xff]
    %v1104 = vld [vmem:[#allocation3 + $0xe58] sm:$0xff]
    %v1105 = vld [vmem:[#allocation3 + $0xe60] sm:$0xff]
    %v1106 = vld [vmem:[#allocation3 + $0xe68] sm:$0xff]
    %v1107 = vld [vmem:[#allocation3 + $0xe70] sm:$0xff]
    %v1108 = vld [vmem:[#allocation3 + $0xe78] sm:$0xff]
    %v1109 = vld [vmem:[#allocation3 + $0xe80] sm:$0xff]
    %v1110 = vld [vmem:[#allocation3 + $0xe88] sm:$0xff]
    %v1111 = vld [vmem:[#allocation3 + $0xe90] sm:$0xff]
    %v1112 = vld [vmem:[#allocation3 + $0xe98] sm:$0xff]
    %v1113 = vld [vmem:[#allocation3 + $0xea0] sm:$0xff]
    %v1114 = vld [vmem:[#allocation3 + $0xea8] sm:$0xff]
    %v1115 = vld [vmem:[#allocation3 + $0xeb0] sm:$0xff]
    %v1116 = vld [vmem:[#allocation3 + $0xeb8] sm:$0xff]
    %v1117 = vld [vmem:[#allocation3 + $0xec0] sm:$0xff]
    %v1118 = vld [vmem:[#allocation3 + $0xec8] sm:$0xff]
    %v1119 = vld [vmem:[#allocation3 + $0xed0] sm:$0xff]
    %v1120 = vld [vmem:[#allocation3 + $0xed8] sm:$0xff]
    %v1121 = vld [vmem:[#allocation3 + $0xee0] sm:$0xff]
    %v1122 = vld [vmem:[#allocation3 + $0xee8] sm:$0xff]
    %v1123 = vld [vmem:[#allocation3 + $0xef0] sm:$0xff]
    %v1124 = vld [vmem:[#allocation3 + $0xef8] sm:$0xff]
    %v1125 = vld [vmem:[#allocation3 + $0xf00] sm:$0xff]
    %v1126 = vld [vmem:[#allocation3 + $0xf08] sm:$0xff]
    %v1127 = vld [vmem:[#allocation3 + $0xf10] sm:$0xff]
    %v1128 = vld [vmem:[#allocation3 + $0xf18] sm:$0xff]
    %v1129 = vld [vmem:[#allocation3 + $0xf20] sm:$0xff]
    %v1130 = vld [vmem:[#allocation3 + $0xf28] sm:$0xff]
    %v1131 = vld [vmem:[#allocation3 + $0xf30] sm:$0xff]
    %v1132 = vld [vmem:[#allocation3 + $0xf38] sm:$0xff]
    %v1133 = vld [vmem:[#allocation3 + $0xf40] sm:$0xff]
    %v1134 = vld [vmem:[#allocation3 + $0xf48] sm:$0xff]
    %v1135 = vld [vmem:[#allocation3 + $0xf50] sm:$0xff]
    %v1136 = vld [vmem:[#allocation3 + $0xf58] sm:$0xff]
    %v1137 = vld [vmem:[#allocation3 + $0xf60] sm:$0xff]
    %v1138 = vld [vmem:[#allocation3 + $0xf68] sm:$0xff]
    %v1139 = vld [vmem:[#allocation3 + $0xf70] sm:$0xff]
    %v1140 = vld [vmem:[#allocation3 + $0xf78] sm:$0xff]
    %v1141 = vld [vmem:[#allocation3 + $0xf80] sm:$0xff]
    %v1142 = vld [vmem:[#allocation3 + $0xf88] sm:$0xff]
    %v1143 = vld [vmem:[#allocation3 + $0xf90] sm:$0xff]
    %v1144 = vld [vmem:[#allocation3 + $0xf98] sm:$0xff]
    %v1145 = vld [vmem:[#allocation3 + $0xfa0] sm:$0xff]
    %v1146 = vld [vmem:[#allocation3 + $0xfa8] sm:$0xff]
    %v1147 = vld [vmem:[#allocation3 + $0xfb0] sm:$0xff]
    %v1148 = vld [vmem:[#allocation3 + $0xfb8] sm:$0xff]
    %v1149 = vld [vmem:[#allocation3 + $0xfc0] sm:$0xff]
    %v1150 = vld [vmem:[#allocation3 + $0xfc8] sm:$0xff]
    %v1151 = vld [vmem:[#allocation3 + $0xfd0] sm:$0xff]
    %v1152 = vld [vmem:[#allocation3 + $0xfd8] sm:$0xff]
    %v1153 = vld [vmem:[#allocation3 + $0xfe0] sm:$0xff]
    %v1154 = vld [vmem:[#allocation3 + $0xfe8] sm:$0xff]
    %v1155 = vld [vmem:[#allocation3 + $0xff0] sm:$0xff]
    %v1156 = vld [vmem:[#allocation3 + $0xff8] sm:$0xff]
    %v1157 = vld [vmem:[#allocation8] sm:$0xf]
    %v1159 = vlaneseq
    %v1160 = vshrl.u32 %v1159, 7
    %v1161 = vsub.s32 0, %v1160
    %v1162 = vrot.slane %v1157, %v1161
    %v1163 = vlaneseq
    %v1164 = vshrl.u32 %v1163, 7
    %v1165 = vsub.s32 1, %v1164
    %v1166 = vrot.slane %v1157, %v1165
    %v1167 = vlaneseq
    %v1168 = vshrl.u32 %v1167, 7
    %v1169 = vsub.s32 2, %v1168
    %v1170 = vrot.slane %v1157, %v1169
    %v1171 = vlaneseq
    %v1172 = vshrl.u32 %v1171, 7
    %v1173 = vsub.s32 3, %v1172
    %v1174 = vrot.slane %v1157, %v1173
    %v1691 = vunpack.c.l.b16 %v645
    %v1692 = vunpack.c.h.b16 %v645
    %v1693 = vunpack.c.l.b16 %v646
    %v1694 = vunpack.c.h.b16 %v646
    %v1695 = vunpack.c.l.b16 %v647
    %v1696 = vunpack.c.h.b16 %v647
    %v1697 = vunpack.c.l.b16 %v648
    %v1698 = vunpack.c.h.b16 %v648
    %v1699 = vunpack.c.l.b16 %v649
    %v1700 = vunpack.c.h.b16 %v649
    %v1701 = vunpack.c.l.b16 %v650
    %v1702 = vunpack.c.h.b16 %v650
    %v1703 = vunpack.c.l.b16 %v651
    %v1704 = vunpack.c.h.b16 %v651
    %v1705 = vunpack.c.l.b16 %v652
    %v1706 = vunpack.c.h.b16 %v652
    %v1707 = vunpack.c.l.b16 %v653
    %v1708 = vunpack.c.h.b16 %v653
    %v1709 = vunpack.c.l.b16 %v654
    %v1710 = vunpack.c.h.b16 %v654
    %v1711 = vunpack.c.l.b16 %v655
    %v1712 = vunpack.c.h.b16 %v655
    %v1713 = vunpack.c.l.b16 %v656
    %v1714 = vunpack.c.h.b16 %v656
    %v1715 = vunpack.c.l.b16 %v657
    %v1716 = vunpack.c.h.b16 %v657
    %v1717 = vunpack.c.l.b16 %v658
    %v1718 = vunpack.c.h.b16 %v658
    %v1719 = vunpack.c.l.b16 %v659
    %v1720 = vunpack.c.h.b16 %v659
    %v1721 = vunpack.c.l.b16 %v660
    %v1722 = vunpack.c.h.b16 %v660
    %v1723 = vunpack.c.l.b16 %v661
    %v1724 = vunpack.c.h.b16 %v661
    %v1725 = vunpack.c.l.b16 %v662
    %v1726 = vunpack.c.h.b16 %v662
    %v1727 = vunpack.c.l.b16 %v663
    %v1728 = vunpack.c.h.b16 %v663
    %v1729 = vunpack.c.l.b16 %v664
    %v1730 = vunpack.c.h.b16 %v664
    %v1731 = vunpack.c.l.b16 %v665
    %v1732 = vunpack.c.h.b16 %v665
    %v1733 = vunpack.c.l.b16 %v666
    %v1734 = vunpack.c.h.b16 %v666
    %v1735 = vunpack.c.l.b16 %v667
    %v1736 = vunpack.c.h.b16 %v667
    %v1737 = vunpack.c.l.b16 %v668
    %v1738 = vunpack.c.h.b16 %v668
    %v1739 = vunpack.c.l.b16 %v669
    %v1740 = vunpack.c.h.b16 %v669
    %v1741 = vunpack.c.l.b16 %v670
    %v1742 = vunpack.c.h.b16 %v670
    %v1743 = vunpack.c.l.b16 %v671
    %v1744 = vunpack.c.h.b16 %v671
    %v1745 = vunpack.c.l.b16 %v672
    %v1746 = vunpack.c.h.b16 %v672
    %v1747 = vunpack.c.l.b16 %v673
    %v1748 = vunpack.c.h.b16 %v673
    %v1749 = vunpack.c.l.b16 %v674
    %v1750 = vunpack.c.h.b16 %v674
    %v1751 = vunpack.c.l.b16 %v675
    %v1752 = vunpack.c.h.b16 %v675
    %v1753 = vunpack.c.l.b16 %v676
    %v1754 = vunpack.c.h.b16 %v676
    %v1755 = vunpack.c.l.b16 %v677
    %v1756 = vunpack.c.h.b16 %v677
    %v1757 = vunpack.c.l.b16 %v678
    %v1758 = vunpack.c.h.b16 %v678
    %v1759 = vunpack.c.l.b16 %v679
    %v1760 = vunpack.c.h.b16 %v679
    %v1761 = vunpack.c.l.b16 %v680
    %v1762 = vunpack.c.h.b16 %v680
    %v1763 = vunpack.c.l.b16 %v681
    %v1764 = vunpack.c.h.b16 %v681
    %v1765 = vunpack.c.l.b16 %v682
    %v1766 = vunpack.c.h.b16 %v682
    %v1767 = vunpack.c.l.b16 %v683
    %v1768 = vunpack.c.h.b16 %v683
    %v1769 = vunpack.c.l.b16 %v684
    %v1770 = vunpack.c.h.b16 %v684
    %v1771 = vunpack.c.l.b16 %v685
    %v1772 = vunpack.c.h.b16 %v685
    %v1773 = vunpack.c.l.b16 %v686
    %v1774 = vunpack.c.h.b16 %v686
    %v1775 = vunpack.c.l.b16 %v687
    %v1776 = vunpack.c.h.b16 %v687
    %v1777 = vunpack.c.l.b16 %v688
    %v1778 = vunpack.c.h.b16 %v688
    %v1779 = vunpack.c.l.b16 %v689
    %v1780 = vunpack.c.h.b16 %v689
    %v1781 = vunpack.c.l.b16 %v690
    %v1782 = vunpack.c.h.b16 %v690
    %v1783 = vunpack.c.l.b16 %v691
    %v1784 = vunpack.c.h.b16 %v691
    %v1785 = vunpack.c.l.b16 %v692
    %v1786 = vunpack.c.h.b16 %v692
    %v1787 = vunpack.c.l.b16 %v693
    %v1788 = vunpack.c.h.b16 %v693
    %v1789 = vunpack.c.l.b16 %v694
    %v1790 = vunpack.c.h.b16 %v694
    %v1791 = vunpack.c.l.b16 %v695
    %v1792 = vunpack.c.h.b16 %v695
    %v1793 = vunpack.c.l.b16 %v696
    %v1794 = vunpack.c.h.b16 %v696
    %v1795 = vunpack.c.l.b16 %v697
    %v1796 = vunpack.c.h.b16 %v697
    %v1797 = vunpack.c.l.b16 %v698
    %v1798 = vunpack.c.h.b16 %v698
    %v1799 = vunpack.c.l.b16 %v699
    %v1800 = vunpack.c.h.b16 %v699
    %v1801 = vunpack.c.l.b16 %v700
    %v1802 = vunpack.c.h.b16 %v700
    %v1803 = vunpack.c.l.b16 %v701
    %v1804 = vunpack.c.h.b16 %v701
    %v1805 = vunpack.c.l.b16 %v702
    %v1806 = vunpack.c.h.b16 %v702
    %v1807 = vunpack.c.l.b16 %v703
    %v1808 = vunpack.c.h.b16 %v703
    %v1809 = vunpack.c.l.b16 %v704
    %v1810 = vunpack.c.h.b16 %v704
    %v1811 = vunpack.c.l.b16 %v705
    %v1812 = vunpack.c.h.b16 %v705
    %v1813 = vunpack.c.l.b16 %v706
    %v1814 = vunpack.c.h.b16 %v706
    %v1815 = vunpack.c.l.b16 %v707
    %v1816 = vunpack.c.h.b16 %v707
    %v1817 = vunpack.c.l.b16 %v708
    %v1818 = vunpack.c.h.b16 %v708
    %v1819 = vunpack.c.l.b16 %v709
    %v1820 = vunpack.c.h.b16 %v709
    %v1821 = vunpack.c.l.b16 %v710
    %v1822 = vunpack.c.h.b16 %v710
    %v1823 = vunpack.c.l.b16 %v711
    %v1824 = vunpack.c.h.b16 %v711
    %v1825 = vunpack.c.l.b16 %v712
    %v1826 = vunpack.c.h.b16 %v712
    %v1827 = vunpack.c.l.b16 %v713
    %v1828 = vunpack.c.h.b16 %v713
    %v1829 = vunpack.c.l.b16 %v714
    %v1830 = vunpack.c.h.b16 %v714
    %v1831 = vunpack.c.l.b16 %v715
    %v1832 = vunpack.c.h.b16 %v715
    %v1833 = vunpack.c.l.b16 %v716
    %v1834 = vunpack.c.h.b16 %v716
    %v1835 = vunpack.c.l.b16 %v717
    %v1836 = vunpack.c.h.b16 %v717
    %v1837 = vunpack.c.l.b16 %v718
    %v1838 = vunpack.c.h.b16 %v718
    %v1839 = vunpack.c.l.b16 %v719
    %v1840 = vunpack.c.h.b16 %v719
    %v1841 = vunpack.c.l.b16 %v720
    %v1842 = vunpack.c.h.b16 %v720
    %v1843 = vunpack.c.l.b16 %v721
    %v1844 = vunpack.c.h.b16 %v721
    %v1845 = vunpack.c.l.b16 %v722
    %v1846 = vunpack.c.h.b16 %v722
    %v1847 = vunpack.c.l.b16 %v723
    %v1848 = vunpack.c.h.b16 %v723
    %v1849 = vunpack.c.l.b16 %v724
    %v1850 = vunpack.c.h.b16 %v724
    %v1851 = vunpack.c.l.b16 %v725
    %v1852 = vunpack.c.h.b16 %v725
    %v1853 = vunpack.c.l.b16 %v726
    %v1854 = vunpack.c.h.b16 %v726
    %v1855 = vunpack.c.l.b16 %v727
    %v1856 = vunpack.c.h.b16 %v727
    %v1857 = vunpack.c.l.b16 %v728
    %v1858 = vunpack.c.h.b16 %v728
    %v1859 = vunpack.c.l.b16 %v729
    %v1860 = vunpack.c.h.b16 %v729
    %v1861 = vunpack.c.l.b16 %v730
    %v1862 = vunpack.c.h.b16 %v730
    %v1863 = vunpack.c.l.b16 %v731
    %v1864 = vunpack.c.h.b16 %v731
    %v1865 = vunpack.c.l.b16 %v732
    %v1866 = vunpack.c.h.b16 %v732
    %v1867 = vunpack.c.l.b16 %v733
    %v1868 = vunpack.c.h.b16 %v733
    %v1869 = vunpack.c.l.b16 %v734
    %v1870 = vunpack.c.h.b16 %v734
    %v1871 = vunpack.c.l.b16 %v735
    %v1872 = vunpack.c.h.b16 %v735
    %v1873 = vunpack.c.l.b16 %v736
    %v1874 = vunpack.c.h.b16 %v736
    %v1875 = vunpack.c.l.b16 %v737
    %v1876 = vunpack.c.h.b16 %v737
    %v1877 = vunpack.c.l.b16 %v738
    %v1878 = vunpack.c.h.b16 %v738
    %v1879 = vunpack.c.l.b16 %v739
    %v1880 = vunpack.c.h.b16 %v739
    %v1881 = vunpack.c.l.b16 %v740
    %v1882 = vunpack.c.h.b16 %v740
    %v1883 = vunpack.c.l.b16 %v741
    %v1884 = vunpack.c.h.b16 %v741
    %v1885 = vunpack.c.l.b16 %v742
    %v1886 = vunpack.c.h.b16 %v742
    %v1887 = vunpack.c.l.b16 %v743
    %v1888 = vunpack.c.h.b16 %v743
    %v1889 = vunpack.c.l.b16 %v744
    %v1890 = vunpack.c.h.b16 %v744
    %v1891 = vunpack.c.l.b16 %v745
    %v1892 = vunpack.c.h.b16 %v745
    %v1893 = vunpack.c.l.b16 %v746
    %v1894 = vunpack.c.h.b16 %v746
    %v1895 = vunpack.c.l.b16 %v747
    %v1896 = vunpack.c.h.b16 %v747
    %v1897 = vunpack.c.l.b16 %v748
    %v1898 = vunpack.c.h.b16 %v748
    %v1899 = vunpack.c.l.b16 %v749
    %v1900 = vunpack.c.h.b16 %v749
    %v1901 = vunpack.c.l.b16 %v750
    %v1902 = vunpack.c.h.b16 %v750
    %v1903 = vunpack.c.l.b16 %v751
    %v1904 = vunpack.c.h.b16 %v751
    %v1905 = vunpack.c.l.b16 %v752
    %v1906 = vunpack.c.h.b16 %v752
    %v1907 = vunpack.c.l.b16 %v753
    %v1908 = vunpack.c.h.b16 %v753
    %v1909 = vunpack.c.l.b16 %v754
    %v1910 = vunpack.c.h.b16 %v754
    %v1911 = vunpack.c.l.b16 %v755
    %v1912 = vunpack.c.h.b16 %v755
    %v1913 = vunpack.c.l.b16 %v756
    %v1914 = vunpack.c.h.b16 %v756
    %v1915 = vunpack.c.l.b16 %v757
    %v1916 = vunpack.c.h.b16 %v757
    %v1917 = vunpack.c.l.b16 %v758
    %v1918 = vunpack.c.h.b16 %v758
    %v1919 = vunpack.c.l.b16 %v759
    %v1920 = vunpack.c.h.b16 %v759
    %v1921 = vunpack.c.l.b16 %v760
    %v1922 = vunpack.c.h.b16 %v760
    %v1923 = vunpack.c.l.b16 %v761
    %v1924 = vunpack.c.h.b16 %v761
    %v1925 = vunpack.c.l.b16 %v762
    %v1926 = vunpack.c.h.b16 %v762
    %v1927 = vunpack.c.l.b16 %v763
    %v1928 = vunpack.c.h.b16 %v763
    %v1929 = vunpack.c.l.b16 %v764
    %v1930 = vunpack.c.h.b16 %v764
    %v1931 = vunpack.c.l.b16 %v765
    %v1932 = vunpack.c.h.b16 %v765
    %v1933 = vunpack.c.l.b16 %v766
    %v1934 = vunpack.c.h.b16 %v766
    %v1935 = vunpack.c.l.b16 %v767
    %v1936 = vunpack.c.h.b16 %v767
    %v1937 = vunpack.c.l.b16 %v768
    %v1938 = vunpack.c.h.b16 %v768
    %v1939 = vunpack.c.l.b16 %v769
    %v1940 = vunpack.c.h.b16 %v769
    %v1941 = vunpack.c.l.b16 %v770
    %v1942 = vunpack.c.h.b16 %v770
    %v1943 = vunpack.c.l.b16 %v771
    %v1944 = vunpack.c.h.b16 %v771
    %v1945 = vunpack.c.l.b16 %v772
    %v1946 = vunpack.c.h.b16 %v772
    %v1947 = vunpack.c.l.b16 %v773
    %v1948 = vunpack.c.h.b16 %v773
    %v1949 = vunpack.c.l.b16 %v774
    %v1950 = vunpack.c.h.b16 %v774
    %v1951 = vunpack.c.l.b16 %v775
    %v1952 = vunpack.c.h.b16 %v775
    %v1953 = vunpack.c.l.b16 %v776
    %v1954 = vunpack.c.h.b16 %v776
    %v1955 = vunpack.c.l.b16 %v777
    %v1956 = vunpack.c.h.b16 %v777
    %v1957 = vunpack.c.l.b16 %v778
    %v1958 = vunpack.c.h.b16 %v778
    %v1959 = vunpack.c.l.b16 %v779
    %v1960 = vunpack.c.h.b16 %v779
    %v1961 = vunpack.c.l.b16 %v780
    %v1962 = vunpack.c.h.b16 %v780
    %v1963 = vunpack.c.l.b16 %v781
    %v1964 = vunpack.c.h.b16 %v781
    %v1965 = vunpack.c.l.b16 %v782
    %v1966 = vunpack.c.h.b16 %v782
    %v1967 = vunpack.c.l.b16 %v783
    %v1968 = vunpack.c.h.b16 %v783
    %v1969 = vunpack.c.l.b16 %v784
    %v1970 = vunpack.c.h.b16 %v784
    %v1971 = vunpack.c.l.b16 %v785
    %v1972 = vunpack.c.h.b16 %v785
    %v1973 = vunpack.c.l.b16 %v786
    %v1974 = vunpack.c.h.b16 %v786
    %v1975 = vunpack.c.l.b16 %v787
    %v1976 = vunpack.c.h.b16 %v787
    %v1977 = vunpack.c.l.b16 %v788
    %v1978 = vunpack.c.h.b16 %v788
    %v1979 = vunpack.c.l.b16 %v789
    %v1980 = vunpack.c.h.b16 %v789
    %v1981 = vunpack.c.l.b16 %v790
    %v1982 = vunpack.c.h.b16 %v790
    %v1983 = vunpack.c.l.b16 %v791
    %v1984 = vunpack.c.h.b16 %v791
    %v1985 = vunpack.c.l.b16 %v792
    %v1986 = vunpack.c.h.b16 %v792
    %v1987 = vunpack.c.l.b16 %v793
    %v1988 = vunpack.c.h.b16 %v793
    %v1989 = vunpack.c.l.b16 %v794
    %v1990 = vunpack.c.h.b16 %v794
    %v1991 = vunpack.c.l.b16 %v795
    %v1992 = vunpack.c.h.b16 %v795
    %v1993 = vunpack.c.l.b16 %v796
    %v1994 = vunpack.c.h.b16 %v796
    %v1995 = vunpack.c.l.b16 %v797
    %v1996 = vunpack.c.h.b16 %v797
    %v1997 = vunpack.c.l.b16 %v798
    %v1998 = vunpack.c.h.b16 %v798
    %v1999 = vunpack.c.l.b16 %v799
    %v2000 = vunpack.c.h.b16 %v799
    %v2001 = vunpack.c.l.b16 %v800
    %v2002 = vunpack.c.h.b16 %v800
    %v2003 = vunpack.c.l.b16 %v801
    %v2004 = vunpack.c.h.b16 %v801
    %v2005 = vunpack.c.l.b16 %v802
    %v2006 = vunpack.c.h.b16 %v802
    %v2007 = vunpack.c.l.b16 %v803
    %v2008 = vunpack.c.h.b16 %v803
    %v2009 = vunpack.c.l.b16 %v804
    %v2010 = vunpack.c.h.b16 %v804
    %v2011 = vunpack.c.l.b16 %v805
    %v2012 = vunpack.c.h.b16 %v805
    %v2013 = vunpack.c.l.b16 %v806
    %v2014 = vunpack.c.h.b16 %v806
    %v2015 = vunpack.c.l.b16 %v807
    %v2016 = vunpack.c.h.b16 %v807
    %v2017 = vunpack.c.l.b16 %v808
    %v2018 = vunpack.c.h.b16 %v808
    %v2019 = vunpack.c.l.b16 %v809
    %v2020 = vunpack.c.h.b16 %v809
    %v2021 = vunpack.c.l.b16 %v810
    %v2022 = vunpack.c.h.b16 %v810
    %v2023 = vunpack.c.l.b16 %v811
    %v2024 = vunpack.c.h.b16 %v811
    %v2025 = vunpack.c.l.b16 %v812
    %v2026 = vunpack.c.h.b16 %v812
    %v2027 = vunpack.c.l.b16 %v813
    %v2028 = vunpack.c.h.b16 %v813
    %v2029 = vunpack.c.l.b16 %v814
    %v2030 = vunpack.c.h.b16 %v814
    %v2031 = vunpack.c.l.b16 %v815
    %v2032 = vunpack.c.h.b16 %v815
    %v2033 = vunpack.c.l.b16 %v816
    %v2034 = vunpack.c.h.b16 %v816
    %v2035 = vunpack.c.l.b16 %v817
    %v2036 = vunpack.c.h.b16 %v817
    %v2037 = vunpack.c.l.b16 %v818
    %v2038 = vunpack.c.h.b16 %v818
    %v2039 = vunpack.c.l.b16 %v819
    %v2040 = vunpack.c.h.b16 %v819
    %v2041 = vunpack.c.l.b16 %v820
    %v2042 = vunpack.c.h.b16 %v820
    %v2043 = vunpack.c.l.b16 %v821
    %v2044 = vunpack.c.h.b16 %v821
    %v2045 = vunpack.c.l.b16 %v822
    %v2046 = vunpack.c.h.b16 %v822
    %v2047 = vunpack.c.l.b16 %v823
    %v2048 = vunpack.c.h.b16 %v823
    %v2049 = vunpack.c.l.b16 %v824
    %v2050 = vunpack.c.h.b16 %v824
    %v2051 = vunpack.c.l.b16 %v825
    %v2052 = vunpack.c.h.b16 %v825
    %v2053 = vunpack.c.l.b16 %v826
    %v2054 = vunpack.c.h.b16 %v826
    %v2055 = vunpack.c.l.b16 %v827
    %v2056 = vunpack.c.h.b16 %v827
    %v2057 = vunpack.c.l.b16 %v828
    %v2058 = vunpack.c.h.b16 %v828
    %v2059 = vunpack.c.l.b16 %v829
    %v2060 = vunpack.c.h.b16 %v829
    %v2061 = vunpack.c.l.b16 %v830
    %v2062 = vunpack.c.h.b16 %v830
    %v2063 = vunpack.c.l.b16 %v831
    %v2064 = vunpack.c.h.b16 %v831
    %v2065 = vunpack.c.l.b16 %v832
    %v2066 = vunpack.c.h.b16 %v832
    %v2067 = vunpack.c.l.b16 %v833
    %v2068 = vunpack.c.h.b16 %v833
    %v2069 = vunpack.c.l.b16 %v834
    %v2070 = vunpack.c.h.b16 %v834
    %v2071 = vunpack.c.l.b16 %v835
    %v2072 = vunpack.c.h.b16 %v835
    %v2073 = vunpack.c.l.b16 %v836
    %v2074 = vunpack.c.h.b16 %v836
    %v2075 = vunpack.c.l.b16 %v837
    %v2076 = vunpack.c.h.b16 %v837
    %v2077 = vunpack.c.l.b16 %v838
    %v2078 = vunpack.c.h.b16 %v838
    %v2079 = vunpack.c.l.b16 %v839
    %v2080 = vunpack.c.h.b16 %v839
    %v2081 = vunpack.c.l.b16 %v840
    %v2082 = vunpack.c.h.b16 %v840
    %v2083 = vunpack.c.l.b16 %v841
    %v2084 = vunpack.c.h.b16 %v841
    %v2085 = vunpack.c.l.b16 %v842
    %v2086 = vunpack.c.h.b16 %v842
    %v2087 = vunpack.c.l.b16 %v843
    %v2088 = vunpack.c.h.b16 %v843
    %v2089 = vunpack.c.l.b16 %v844
    %v2090 = vunpack.c.h.b16 %v844
    %v2091 = vunpack.c.l.b16 %v845
    %v2092 = vunpack.c.h.b16 %v845
    %v2093 = vunpack.c.l.b16 %v846
    %v2094 = vunpack.c.h.b16 %v846
    %v2095 = vunpack.c.l.b16 %v847
    %v2096 = vunpack.c.h.b16 %v847
    %v2097 = vunpack.c.l.b16 %v848
    %v2098 = vunpack.c.h.b16 %v848
    %v2099 = vunpack.c.l.b16 %v849
    %v2100 = vunpack.c.h.b16 %v849
    %v2101 = vunpack.c.l.b16 %v850
    %v2102 = vunpack.c.h.b16 %v850
    %v2103 = vunpack.c.l.b16 %v851
    %v2104 = vunpack.c.h.b16 %v851
    %v2105 = vunpack.c.l.b16 %v852
    %v2106 = vunpack.c.h.b16 %v852
    %v2107 = vunpack.c.l.b16 %v853
    %v2108 = vunpack.c.h.b16 %v853
    %v2109 = vunpack.c.l.b16 %v854
    %v2110 = vunpack.c.h.b16 %v854
    %v2111 = vunpack.c.l.b16 %v855
    %v2112 = vunpack.c.h.b16 %v855
    %v2113 = vunpack.c.l.b16 %v856
    %v2114 = vunpack.c.h.b16 %v856
    %v2115 = vunpack.c.l.b16 %v857
    %v2116 = vunpack.c.h.b16 %v857
    %v2117 = vunpack.c.l.b16 %v858
    %v2118 = vunpack.c.h.b16 %v858
    %v2119 = vunpack.c.l.b16 %v859
    %v2120 = vunpack.c.h.b16 %v859
    %v2121 = vunpack.c.l.b16 %v860
    %v2122 = vunpack.c.h.b16 %v860
    %v2123 = vunpack.c.l.b16 %v861
    %v2124 = vunpack.c.h.b16 %v861
    %v2125 = vunpack.c.l.b16 %v862
    %v2126 = vunpack.c.h.b16 %v862
    %v2127 = vunpack.c.l.b16 %v863
    %v2128 = vunpack.c.h.b16 %v863
    %v2129 = vunpack.c.l.b16 %v864
    %v2130 = vunpack.c.h.b16 %v864
    %v2131 = vunpack.c.l.b16 %v865
    %v2132 = vunpack.c.h.b16 %v865
    %v2133 = vunpack.c.l.b16 %v866
    %v2134 = vunpack.c.h.b16 %v866
    %v2135 = vunpack.c.l.b16 %v867
    %v2136 = vunpack.c.h.b16 %v867
    %v2137 = vunpack.c.l.b16 %v868
    %v2138 = vunpack.c.h.b16 %v868
    %v2139 = vunpack.c.l.b16 %v869
    %v2140 = vunpack.c.h.b16 %v869
    %v2141 = vunpack.c.l.b16 %v870
    %v2142 = vunpack.c.h.b16 %v870
    %v2143 = vunpack.c.l.b16 %v871
    %v2144 = vunpack.c.h.b16 %v871
    %v2145 = vunpack.c.l.b16 %v872
    %v2146 = vunpack.c.h.b16 %v872
    %v2147 = vunpack.c.l.b16 %v873
    %v2148 = vunpack.c.h.b16 %v873
    %v2149 = vunpack.c.l.b16 %v874
    %v2150 = vunpack.c.h.b16 %v874
    %v2151 = vunpack.c.l.b16 %v875
    %v2152 = vunpack.c.h.b16 %v875
    %v2153 = vunpack.c.l.b16 %v876
    %v2154 = vunpack.c.h.b16 %v876
    %v2155 = vunpack.c.l.b16 %v877
    %v2156 = vunpack.c.h.b16 %v877
    %v2157 = vunpack.c.l.b16 %v878
    %v2158 = vunpack.c.h.b16 %v878
    %v2159 = vunpack.c.l.b16 %v879
    %v2160 = vunpack.c.h.b16 %v879
    %v2161 = vunpack.c.l.b16 %v880
    %v2162 = vunpack.c.h.b16 %v880
    %v2163 = vunpack.c.l.b16 %v881
    %v2164 = vunpack.c.h.b16 %v881
    %v2165 = vunpack.c.l.b16 %v882
    %v2166 = vunpack.c.h.b16 %v882
    %v2167 = vunpack.c.l.b16 %v883
    %v2168 = vunpack.c.h.b16 %v883
    %v2169 = vunpack.c.l.b16 %v884
    %v2170 = vunpack.c.h.b16 %v884
    %v2171 = vunpack.c.l.b16 %v885
    %v2172 = vunpack.c.h.b16 %v885
    %v2173 = vunpack.c.l.b16 %v886
    %v2174 = vunpack.c.h.b16 %v886
    %v2175 = vunpack.c.l.b16 %v887
    %v2176 = vunpack.c.h.b16 %v887
    %v2177 = vunpack.c.l.b16 %v888
    %v2178 = vunpack.c.h.b16 %v888
    %v2179 = vunpack.c.l.b16 %v889
    %v2180 = vunpack.c.h.b16 %v889
    %v2181 = vunpack.c.l.b16 %v890
    %v2182 = vunpack.c.h.b16 %v890
    %v2183 = vunpack.c.l.b16 %v891
    %v2184 = vunpack.c.h.b16 %v891
    %v2185 = vunpack.c.l.b16 %v892
    %v2186 = vunpack.c.h.b16 %v892
    %v2187 = vunpack.c.l.b16 %v893
    %v2188 = vunpack.c.h.b16 %v893
    %v2189 = vunpack.c.l.b16 %v894
    %v2190 = vunpack.c.h.b16 %v894
    %v2191 = vunpack.c.l.b16 %v895
    %v2192 = vunpack.c.h.b16 %v895
    %v2193 = vunpack.c.l.b16 %v896
    %v2194 = vunpack.c.h.b16 %v896
    %v2195 = vunpack.c.l.b16 %v897
    %v2196 = vunpack.c.h.b16 %v897
    %v2197 = vunpack.c.l.b16 %v898
    %v2198 = vunpack.c.h.b16 %v898
    %v2199 = vunpack.c.l.b16 %v899
    %v2200 = vunpack.c.h.b16 %v899
    %v2201 = vunpack.c.l.b16 %v900
    %v2202 = vunpack.c.h.b16 %v900
    %v2203 = vunpack.c.l.b16 %v901
    %v2204 = vunpack.c.h.b16 %v901
    %v2205 = vunpack.c.l.b16 %v902
    %v2206 = vunpack.c.h.b16 %v902
    %v2207 = vunpack.c.l.b16 %v903
    %v2208 = vunpack.c.h.b16 %v903
    %v2209 = vunpack.c.l.b16 %v904
    %v2210 = vunpack.c.h.b16 %v904
    %v2211 = vunpack.c.l.b16 %v905
    %v2212 = vunpack.c.h.b16 %v905
    %v2213 = vunpack.c.l.b16 %v906
    %v2214 = vunpack.c.h.b16 %v906
    %v2215 = vunpack.c.l.b16 %v907
    %v2216 = vunpack.c.h.b16 %v907
    %v2217 = vunpack.c.l.b16 %v908
    %v2218 = vunpack.c.h.b16 %v908
    %v2219 = vunpack.c.l.b16 %v909
    %v2220 = vunpack.c.h.b16 %v909
    %v2221 = vunpack.c.l.b16 %v910
    %v2222 = vunpack.c.h.b16 %v910
    %v2223 = vunpack.c.l.b16 %v911
    %v2224 = vunpack.c.h.b16 %v911
    %v2225 = vunpack.c.l.b16 %v912
    %v2226 = vunpack.c.h.b16 %v912
    %v2227 = vunpack.c.l.b16 %v913
    %v2228 = vunpack.c.h.b16 %v913
    %v2229 = vunpack.c.l.b16 %v914
    %v2230 = vunpack.c.h.b16 %v914
    %v2231 = vunpack.c.l.b16 %v915
    %v2232 = vunpack.c.h.b16 %v915
    %v2233 = vunpack.c.l.b16 %v916
    %v2234 = vunpack.c.h.b16 %v916
    %v2235 = vunpack.c.l.b16 %v917
    %v2236 = vunpack.c.h.b16 %v917
    %v2237 = vunpack.c.l.b16 %v918
    %v2238 = vunpack.c.h.b16 %v918
    %v2239 = vunpack.c.l.b16 %v919
    %v2240 = vunpack.c.h.b16 %v919
    %v2241 = vunpack.c.l.b16 %v920
    %v2242 = vunpack.c.h.b16 %v920
    %v2243 = vunpack.c.l.b16 %v921
    %v2244 = vunpack.c.h.b16 %v921
    %v2245 = vunpack.c.l.b16 %v922
    %v2246 = vunpack.c.h.b16 %v922
    %v2247 = vunpack.c.l.b16 %v923
    %v2248 = vunpack.c.h.b16 %v923
    %v2249 = vunpack.c.l.b16 %v924
    %v2250 = vunpack.c.h.b16 %v924
    %v2251 = vunpack.c.l.b16 %v925
    %v2252 = vunpack.c.h.b16 %v925
    %v2253 = vunpack.c.l.b16 %v926
    %v2254 = vunpack.c.h.b16 %v926
    %v2255 = vunpack.c.l.b16 %v927
    %v2256 = vunpack.c.h.b16 %v927
    %v2257 = vunpack.c.l.b16 %v928
    %v2258 = vunpack.c.h.b16 %v928
    %v2259 = vunpack.c.l.b16 %v929
    %v2260 = vunpack.c.h.b16 %v929
    %v2261 = vunpack.c.l.b16 %v930
    %v2262 = vunpack.c.h.b16 %v930
    %v2263 = vunpack.c.l.b16 %v931
    %v2264 = vunpack.c.h.b16 %v931
    %v2265 = vunpack.c.l.b16 %v932
    %v2266 = vunpack.c.h.b16 %v932
    %v2267 = vunpack.c.l.b16 %v933
    %v2268 = vunpack.c.h.b16 %v933
    %v2269 = vunpack.c.l.b16 %v934
    %v2270 = vunpack.c.h.b16 %v934
    %v2271 = vunpack.c.l.b16 %v935
    %v2272 = vunpack.c.h.b16 %v935
    %v2273 = vunpack.c.l.b16 %v936
    %v2274 = vunpack.c.h.b16 %v936
    %v2275 = vunpack.c.l.b16 %v937
    %v2276 = vunpack.c.h.b16 %v937
    %v2277 = vunpack.c.l.b16 %v938
    %v2278 = vunpack.c.h.b16 %v938
    %v2279 = vunpack.c.l.b16 %v939
    %v2280 = vunpack.c.h.b16 %v939
    %v2281 = vunpack.c.l.b16 %v940
    %v2282 = vunpack.c.h.b16 %v940
    %v2283 = vunpack.c.l.b16 %v941
    %v2284 = vunpack.c.h.b16 %v941
    %v2285 = vunpack.c.l.b16 %v942
    %v2286 = vunpack.c.h.b16 %v942
    %v2287 = vunpack.c.l.b16 %v943
    %v2288 = vunpack.c.h.b16 %v943
    %v2289 = vunpack.c.l.b16 %v944
    %v2290 = vunpack.c.h.b16 %v944
    %v2291 = vunpack.c.l.b16 %v945
    %v2292 = vunpack.c.h.b16 %v945
    %v2293 = vunpack.c.l.b16 %v946
    %v2294 = vunpack.c.h.b16 %v946
    %v2295 = vunpack.c.l.b16 %v947
    %v2296 = vunpack.c.h.b16 %v947
    %v2297 = vunpack.c.l.b16 %v948
    %v2298 = vunpack.c.h.b16 %v948
    %v2299 = vunpack.c.l.b16 %v949
    %v2300 = vunpack.c.h.b16 %v949
    %v2301 = vunpack.c.l.b16 %v950
    %v2302 = vunpack.c.h.b16 %v950
    %v2303 = vunpack.c.l.b16 %v951
    %v2304 = vunpack.c.h.b16 %v951
    %v2305 = vunpack.c.l.b16 %v952
    %v2306 = vunpack.c.h.b16 %v952
    %v2307 = vunpack.c.l.b16 %v953
    %v2308 = vunpack.c.h.b16 %v953
    %v2309 = vunpack.c.l.b16 %v954
    %v2310 = vunpack.c.h.b16 %v954
    %v2311 = vunpack.c.l.b16 %v955
    %v2312 = vunpack.c.h.b16 %v955
    %v2313 = vunpack.c.l.b16 %v956
    %v2314 = vunpack.c.h.b16 %v956
    %v2315 = vunpack.c.l.b16 %v957
    %v2316 = vunpack.c.h.b16 %v957
    %v2317 = vunpack.c.l.b16 %v958
    %v2318 = vunpack.c.h.b16 %v958
    %v2319 = vunpack.c.l.b16 %v959
    %v2320 = vunpack.c.h.b16 %v959
    %v2321 = vunpack.c.l.b16 %v960
    %v2322 = vunpack.c.h.b16 %v960
    %v2323 = vunpack.c.l.b16 %v961
    %v2324 = vunpack.c.h.b16 %v961
    %v2325 = vunpack.c.l.b16 %v962
    %v2326 = vunpack.c.h.b16 %v962
    %v2327 = vunpack.c.l.b16 %v963
    %v2328 = vunpack.c.h.b16 %v963
    %v2329 = vunpack.c.l.b16 %v964
    %v2330 = vunpack.c.h.b16 %v964
    %v2331 = vunpack.c.l.b16 %v965
    %v2332 = vunpack.c.h.b16 %v965
    %v2333 = vunpack.c.l.b16 %v966
    %v2334 = vunpack.c.h.b16 %v966
    %v2335 = vunpack.c.l.b16 %v967
    %v2336 = vunpack.c.h.b16 %v967
    %v2337 = vunpack.c.l.b16 %v968
    %v2338 = vunpack.c.h.b16 %v968
    %v2339 = vunpack.c.l.b16 %v969
    %v2340 = vunpack.c.h.b16 %v969
    %v2341 = vunpack.c.l.b16 %v970
    %v2342 = vunpack.c.h.b16 %v970
    %v2343 = vunpack.c.l.b16 %v971
    %v2344 = vunpack.c.h.b16 %v971
    %v2345 = vunpack.c.l.b16 %v972
    %v2346 = vunpack.c.h.b16 %v972
    %v2347 = vunpack.c.l.b16 %v973
    %v2348 = vunpack.c.h.b16 %v973
    %v2349 = vunpack.c.l.b16 %v974
    %v2350 = vunpack.c.h.b16 %v974
    %v2351 = vunpack.c.l.b16 %v975
    %v2352 = vunpack.c.h.b16 %v975
    %v2353 = vunpack.c.l.b16 %v976
    %v2354 = vunpack.c.h.b16 %v976
    %v2355 = vunpack.c.l.b16 %v977
    %v2356 = vunpack.c.h.b16 %v977
    %v2357 = vunpack.c.l.b16 %v978
    %v2358 = vunpack.c.h.b16 %v978
    %v2359 = vunpack.c.l.b16 %v979
    %v2360 = vunpack.c.h.b16 %v979
    %v2361 = vunpack.c.l.b16 %v980
    %v2362 = vunpack.c.h.b16 %v980
    %v2363 = vunpack.c.l.b16 %v981
    %v2364 = vunpack.c.h.b16 %v981
    %v2365 = vunpack.c.l.b16 %v982
    %v2366 = vunpack.c.h.b16 %v982
    %v2367 = vunpack.c.l.b16 %v983
    %v2368 = vunpack.c.h.b16 %v983
    %v2369 = vunpack.c.l.b16 %v984
    %v2370 = vunpack.c.h.b16 %v984
    %v2371 = vunpack.c.l.b16 %v985
    %v2372 = vunpack.c.h.b16 %v985
    %v2373 = vunpack.c.l.b16 %v986
    %v2374 = vunpack.c.h.b16 %v986
    %v2375 = vunpack.c.l.b16 %v987
    %v2376 = vunpack.c.h.b16 %v987
    %v2377 = vunpack.c.l.b16 %v988
    %v2378 = vunpack.c.h.b16 %v988
    %v2379 = vunpack.c.l.b16 %v989
    %v2380 = vunpack.c.h.b16 %v989
    %v2381 = vunpack.c.l.b16 %v990
    %v2382 = vunpack.c.h.b16 %v990
    %v2383 = vunpack.c.l.b16 %v991
    %v2384 = vunpack.c.h.b16 %v991
    %v2385 = vunpack.c.l.b16 %v992
    %v2386 = vunpack.c.h.b16 %v992
    %v2387 = vunpack.c.l.b16 %v993
    %v2388 = vunpack.c.h.b16 %v993
    %v2389 = vunpack.c.l.b16 %v994
    %v2390 = vunpack.c.h.b16 %v994
    %v2391 = vunpack.c.l.b16 %v995
    %v2392 = vunpack.c.h.b16 %v995
    %v2393 = vunpack.c.l.b16 %v996
    %v2394 = vunpack.c.h.b16 %v996
    %v2395 = vunpack.c.l.b16 %v997
    %v2396 = vunpack.c.h.b16 %v997
    %v2397 = vunpack.c.l.b16 %v998
    %v2398 = vunpack.c.h.b16 %v998
    %v2399 = vunpack.c.l.b16 %v999
    %v2400 = vunpack.c.h.b16 %v999
    %v2401 = vunpack.c.l.b16 %v1000
    %v2402 = vunpack.c.h.b16 %v1000
    %v2403 = vunpack.c.l.b16 %v1001
    %v2404 = vunpack.c.h.b16 %v1001
    %v2405 = vunpack.c.l.b16 %v1002
    %v2406 = vunpack.c.h.b16 %v1002
    %v2407 = vunpack.c.l.b16 %v1003
    %v2408 = vunpack.c.h.b16 %v1003
    %v2409 = vunpack.c.l.b16 %v1004
    %v2410 = vunpack.c.h.b16 %v1004
    %v2411 = vunpack.c.l.b16 %v1005
    %v2412 = vunpack.c.h.b16 %v1005
    %v2413 = vunpack.c.l.b16 %v1006
    %v2414 = vunpack.c.h.b16 %v1006
    %v2415 = vunpack.c.l.b16 %v1007
    %v2416 = vunpack.c.h.b16 %v1007
    %v2417 = vunpack.c.l.b16 %v1008
    %v2418 = vunpack.c.h.b16 %v1008
    %v2419 = vunpack.c.l.b16 %v1009
    %v2420 = vunpack.c.h.b16 %v1009
    %v2421 = vunpack.c.l.b16 %v1010
    %v2422 = vunpack.c.h.b16 %v1010
    %v2423 = vunpack.c.l.b16 %v1011
    %v2424 = vunpack.c.h.b16 %v1011
    %v2425 = vunpack.c.l.b16 %v1012
    %v2426 = vunpack.c.h.b16 %v1012
    %v2427 = vunpack.c.l.b16 %v1013
    %v2428 = vunpack.c.h.b16 %v1013
    %v2429 = vunpack.c.l.b16 %v1014
    %v2430 = vunpack.c.h.b16 %v1014
    %v2431 = vunpack.c.l.b16 %v1015
    %v2432 = vunpack.c.h.b16 %v1015
    %v2433 = vunpack.c.l.b16 %v1016
    %v2434 = vunpack.c.h.b16 %v1016
    %v2435 = vunpack.c.l.b16 %v1017
    %v2436 = vunpack.c.h.b16 %v1017
    %v2437 = vunpack.c.l.b16 %v1018
    %v2438 = vunpack.c.h.b16 %v1018
    %v2439 = vunpack.c.l.b16 %v1019
    %v2440 = vunpack.c.h.b16 %v1019
    %v2441 = vunpack.c.l.b16 %v1020
    %v2442 = vunpack.c.h.b16 %v1020
    %v2443 = vunpack.c.l.b16 %v1021
    %v2444 = vunpack.c.h.b16 %v1021
    %v2445 = vunpack.c.l.b16 %v1022
    %v2446 = vunpack.c.h.b16 %v1022
    %v2447 = vunpack.c.l.b16 %v1023
    %v2448 = vunpack.c.h.b16 %v1023
    %v2449 = vunpack.c.l.b16 %v1024
    %v2450 = vunpack.c.h.b16 %v1024
    %v2451 = vunpack.c.l.b16 %v1025
    %v2452 = vunpack.c.h.b16 %v1025
    %v2453 = vunpack.c.l.b16 %v1026
    %v2454 = vunpack.c.h.b16 %v1026
    %v2455 = vunpack.c.l.b16 %v1027
    %v2456 = vunpack.c.h.b16 %v1027
    %v2457 = vunpack.c.l.b16 %v1028
    %v2458 = vunpack.c.h.b16 %v1028
    %v2459 = vunpack.c.l.b16 %v1029
    %v2460 = vunpack.c.h.b16 %v1029
    %v2461 = vunpack.c.l.b16 %v1030
    %v2462 = vunpack.c.h.b16 %v1030
    %v2463 = vunpack.c.l.b16 %v1031
    %v2464 = vunpack.c.h.b16 %v1031
    %v2465 = vunpack.c.l.b16 %v1032
    %v2466 = vunpack.c.h.b16 %v1032
    %v2467 = vunpack.c.l.b16 %v1033
    %v2468 = vunpack.c.h.b16 %v1033
    %v2469 = vunpack.c.l.b16 %v1034
    %v2470 = vunpack.c.h.b16 %v1034
    %v2471 = vunpack.c.l.b16 %v1035
    %v2472 = vunpack.c.h.b16 %v1035
    %v2473 = vunpack.c.l.b16 %v1036
    %v2474 = vunpack.c.h.b16 %v1036
    %v2475 = vunpack.c.l.b16 %v1037
    %v2476 = vunpack.c.h.b16 %v1037
    %v2477 = vunpack.c.l.b16 %v1038
    %v2478 = vunpack.c.h.b16 %v1038
    %v2479 = vunpack.c.l.b16 %v1039
    %v2480 = vunpack.c.h.b16 %v1039
    %v2481 = vunpack.c.l.b16 %v1040
    %v2482 = vunpack.c.h.b16 %v1040
    %v2483 = vunpack.c.l.b16 %v1041
    %v2484 = vunpack.c.h.b16 %v1041
    %v2485 = vunpack.c.l.b16 %v1042
    %v2486 = vunpack.c.h.b16 %v1042
    %v2487 = vunpack.c.l.b16 %v1043
    %v2488 = vunpack.c.h.b16 %v1043
    %v2489 = vunpack.c.l.b16 %v1044
    %v2490 = vunpack.c.h.b16 %v1044
    %v2491 = vunpack.c.l.b16 %v1045
    %v2492 = vunpack.c.h.b16 %v1045
    %v2493 = vunpack.c.l.b16 %v1046
    %v2494 = vunpack.c.h.b16 %v1046
    %v2495 = vunpack.c.l.b16 %v1047
    %v2496 = vunpack.c.h.b16 %v1047
    %v2497 = vunpack.c.l.b16 %v1048
    %v2498 = vunpack.c.h.b16 %v1048
    %v2499 = vunpack.c.l.b16 %v1049
    %v2500 = vunpack.c.h.b16 %v1049
    %v2501 = vunpack.c.l.b16 %v1050
    %v2502 = vunpack.c.h.b16 %v1050
    %v2503 = vunpack.c.l.b16 %v1051
    %v2504 = vunpack.c.h.b16 %v1051
    %v2505 = vunpack.c.l.b16 %v1052
    %v2506 = vunpack.c.h.b16 %v1052
    %v2507 = vunpack.c.l.b16 %v1053
    %v2508 = vunpack.c.h.b16 %v1053
    %v2509 = vunpack.c.l.b16 %v1054
    %v2510 = vunpack.c.h.b16 %v1054
    %v2511 = vunpack.c.l.b16 %v1055
    %v2512 = vunpack.c.h.b16 %v1055
    %v2513 = vunpack.c.l.b16 %v1056
    %v2514 = vunpack.c.h.b16 %v1056
    %v2515 = vunpack.c.l.b16 %v1057
    %v2516 = vunpack.c.h.b16 %v1057
    %v2517 = vunpack.c.l.b16 %v1058
    %v2518 = vunpack.c.h.b16 %v1058
    %v2519 = vunpack.c.l.b16 %v1059
    %v2520 = vunpack.c.h.b16 %v1059
    %v2521 = vunpack.c.l.b16 %v1060
    %v2522 = vunpack.c.h.b16 %v1060
    %v2523 = vunpack.c.l.b16 %v1061
    %v2524 = vunpack.c.h.b16 %v1061
    %v2525 = vunpack.c.l.b16 %v1062
    %v2526 = vunpack.c.h.b16 %v1062
    %v2527 = vunpack.c.l.b16 %v1063
    %v2528 = vunpack.c.h.b16 %v1063
    %v2529 = vunpack.c.l.b16 %v1064
    %v2530 = vunpack.c.h.b16 %v1064
    %v2531 = vunpack.c.l.b16 %v1065
    %v2532 = vunpack.c.h.b16 %v1065
    %v2533 = vunpack.c.l.b16 %v1066
    %v2534 = vunpack.c.h.b16 %v1066
    %v2535 = vunpack.c.l.b16 %v1067
    %v2536 = vunpack.c.h.b16 %v1067
    %v2537 = vunpack.c.l.b16 %v1068
    %v2538 = vunpack.c.h.b16 %v1068
    %v2539 = vunpack.c.l.b16 %v1069
    %v2540 = vunpack.c.h.b16 %v1069
    %v2541 = vunpack.c.l.b16 %v1070
    %v2542 = vunpack.c.h.b16 %v1070
    %v2543 = vunpack.c.l.b16 %v1071
    %v2544 = vunpack.c.h.b16 %v1071
    %v2545 = vunpack.c.l.b16 %v1072
    %v2546 = vunpack.c.h.b16 %v1072
    %v2547 = vunpack.c.l.b16 %v1073
    %v2548 = vunpack.c.h.b16 %v1073
    %v2549 = vunpack.c.l.b16 %v1074
    %v2550 = vunpack.c.h.b16 %v1074
    %v2551 = vunpack.c.l.b16 %v1075
    %v2552 = vunpack.c.h.b16 %v1075
    %v2553 = vunpack.c.l.b16 %v1076
    %v2554 = vunpack.c.h.b16 %v1076
    %v2555 = vunpack.c.l.b16 %v1077
    %v2556 = vunpack.c.h.b16 %v1077
    %v2557 = vunpack.c.l.b16 %v1078
    %v2558 = vunpack.c.h.b16 %v1078
    %v2559 = vunpack.c.l.b16 %v1079
    %v2560 = vunpack.c.h.b16 %v1079
    %v2561 = vunpack.c.l.b16 %v1080
    %v2562 = vunpack.c.h.b16 %v1080
    %v2563 = vunpack.c.l.b16 %v1081
    %v2564 = vunpack.c.h.b16 %v1081
    %v2565 = vunpack.c.l.b16 %v1082
    %v2566 = vunpack.c.h.b16 %v1082
    %v2567 = vunpack.c.l.b16 %v1083
    %v2568 = vunpack.c.h.b16 %v1083
    %v2569 = vunpack.c.l.b16 %v1084
    %v2570 = vunpack.c.h.b16 %v1084
    %v2571 = vunpack.c.l.b16 %v1085
    %v2572 = vunpack.c.h.b16 %v1085
    %v2573 = vunpack.c.l.b16 %v1086
    %v2574 = vunpack.c.h.b16 %v1086
    %v2575 = vunpack.c.l.b16 %v1087
    %v2576 = vunpack.c.h.b16 %v1087
    %v2577 = vunpack.c.l.b16 %v1088
    %v2578 = vunpack.c.h.b16 %v1088
    %v2579 = vunpack.c.l.b16 %v1089
    %v2580 = vunpack.c.h.b16 %v1089
    %v2581 = vunpack.c.l.b16 %v1090
    %v2582 = vunpack.c.h.b16 %v1090
    %v2583 = vunpack.c.l.b16 %v1091
    %v2584 = vunpack.c.h.b16 %v1091
    %v2585 = vunpack.c.l.b16 %v1092
    %v2586 = vunpack.c.h.b16 %v1092
    %v2587 = vunpack.c.l.b16 %v1093
    %v2588 = vunpack.c.h.b16 %v1093
    %v2589 = vunpack.c.l.b16 %v1094
    %v2590 = vunpack.c.h.b16 %v1094
    %v2591 = vunpack.c.l.b16 %v1095
    %v2592 = vunpack.c.h.b16 %v1095
    %v2593 = vunpack.c.l.b16 %v1096
    %v2594 = vunpack.c.h.b16 %v1096
    %v2595 = vunpack.c.l.b16 %v1097
    %v2596 = vunpack.c.h.b16 %v1097
    %v2597 = vunpack.c.l.b16 %v1098
    %v2598 = vunpack.c.h.b16 %v1098
    %v2599 = vunpack.c.l.b16 %v1099
    %v2600 = vunpack.c.h.b16 %v1099
    %v2601 = vunpack.c.l.b16 %v1100
    %v2602 = vunpack.c.h.b16 %v1100
    %v2603 = vunpack.c.l.b16 %v1101
    %v2604 = vunpack.c.h.b16 %v1101
    %v2605 = vunpack.c.l.b16 %v1102
    %v2606 = vunpack.c.h.b16 %v1102
    %v2607 = vunpack.c.l.b16 %v1103
    %v2608 = vunpack.c.h.b16 %v1103
    %v2609 = vunpack.c.l.b16 %v1104
    %v2610 = vunpack.c.h.b16 %v1104
    %v2611 = vunpack.c.l.b16 %v1105
    %v2612 = vunpack.c.h.b16 %v1105
    %v2613 = vunpack.c.l.b16 %v1106
    %v2614 = vunpack.c.h.b16 %v1106
    %v2615 = vunpack.c.l.b16 %v1107
    %v2616 = vunpack.c.h.b16 %v1107
    %v2617 = vunpack.c.l.b16 %v1108
    %v2618 = vunpack.c.h.b16 %v1108
    %v2619 = vunpack.c.l.b16 %v1109
    %v2620 = vunpack.c.h.b16 %v1109
    %v2621 = vunpack.c.l.b16 %v1110
    %v2622 = vunpack.c.h.b16 %v1110
    %v2623 = vunpack.c.l.b16 %v1111
    %v2624 = vunpack.c.h.b16 %v1111
    %v2625 = vunpack.c.l.b16 %v1112
    %v2626 = vunpack.c.h.b16 %v1112
    %v2627 = vunpack.c.l.b16 %v1113
    %v2628 = vunpack.c.h.b16 %v1113
    %v2629 = vunpack.c.l.b16 %v1114
    %v2630 = vunpack.c.h.b16 %v1114
    %v2631 = vunpack.c.l.b16 %v1115
    %v2632 = vunpack.c.h.b16 %v1115
    %v2633 = vunpack.c.l.b16 %v1116
    %v2634 = vunpack.c.h.b16 %v1116
    %v2635 = vunpack.c.l.b16 %v1117
    %v2636 = vunpack.c.h.b16 %v1117
    %v2637 = vunpack.c.l.b16 %v1118
    %v2638 = vunpack.c.h.b16 %v1118
    %v2639 = vunpack.c.l.b16 %v1119
    %v2640 = vunpack.c.h.b16 %v1119
    %v2641 = vunpack.c.l.b16 %v1120
    %v2642 = vunpack.c.h.b16 %v1120
    %v2643 = vunpack.c.l.b16 %v1121
    %v2644 = vunpack.c.h.b16 %v1121
    %v2645 = vunpack.c.l.b16 %v1122
    %v2646 = vunpack.c.h.b16 %v1122
    %v2647 = vunpack.c.l.b16 %v1123
    %v2648 = vunpack.c.h.b16 %v1123
    %v2649 = vunpack.c.l.b16 %v1124
    %v2650 = vunpack.c.h.b16 %v1124
    %v2651 = vunpack.c.l.b16 %v1125
    %v2652 = vunpack.c.h.b16 %v1125
    %v2653 = vunpack.c.l.b16 %v1126
    %v2654 = vunpack.c.h.b16 %v1126
    %v2655 = vunpack.c.l.b16 %v1127
    %v2656 = vunpack.c.h.b16 %v1127
    %v2657 = vunpack.c.l.b16 %v1128
    %v2658 = vunpack.c.h.b16 %v1128
    %v2659 = vunpack.c.l.b16 %v1129
    %v2660 = vunpack.c.h.b16 %v1129
    %v2661 = vunpack.c.l.b16 %v1130
    %v2662 = vunpack.c.h.b16 %v1130
    %v2663 = vunpack.c.l.b16 %v1131
    %v2664 = vunpack.c.h.b16 %v1131
    %v2665 = vunpack.c.l.b16 %v1132
    %v2666 = vunpack.c.h.b16 %v1132
    %v2667 = vunpack.c.l.b16 %v1133
    %v2668 = vunpack.c.h.b16 %v1133
    %v2669 = vunpack.c.l.b16 %v1134
    %v2670 = vunpack.c.h.b16 %v1134
    %v2671 = vunpack.c.l.b16 %v1135
    %v2672 = vunpack.c.h.b16 %v1135
    %v2673 = vunpack.c.l.b16 %v1136
    %v2674 = vunpack.c.h.b16 %v1136
    %v2675 = vunpack.c.l.b16 %v1137
    %v2676 = vunpack.c.h.b16 %v1137
    %v2677 = vunpack.c.l.b16 %v1138
    %v2678 = vunpack.c.h.b16 %v1138
    %v2679 = vunpack.c.l.b16 %v1139
    %v2680 = vunpack.c.h.b16 %v1139
    %v2681 = vunpack.c.l.b16 %v1140
    %v2682 = vunpack.c.h.b16 %v1140
    %v2683 = vunpack.c.l.b16 %v1141
    %v2684 = vunpack.c.h.b16 %v1141
    %v2685 = vunpack.c.l.b16 %v1142
    %v2686 = vunpack.c.h.b16 %v1142
    %v2687 = vunpack.c.l.b16 %v1143
    %v2688 = vunpack.c.h.b16 %v1143
    %v2689 = vunpack.c.l.b16 %v1144
    %v2690 = vunpack.c.h.b16 %v1144
    %v2691 = vunpack.c.l.b16 %v1145
    %v2692 = vunpack.c.h.b16 %v1145
    %v2693 = vunpack.c.l.b16 %v1146
    %v2694 = vunpack.c.h.b16 %v1146
    %v2695 = vunpack.c.l.b16 %v1147
    %v2696 = vunpack.c.h.b16 %v1147
    %v2697 = vunpack.c.l.b16 %v1148
    %v2698 = vunpack.c.h.b16 %v1148
    %v2699 = vunpack.c.l.b16 %v1149
    %v2700 = vunpack.c.h.b16 %v1149
    %v2701 = vunpack.c.l.b16 %v1150
    %v2702 = vunpack.c.h.b16 %v1150
    %v2703 = vunpack.c.l.b16 %v1151
    %v2704 = vunpack.c.h.b16 %v1151
    %v2705 = vunpack.c.l.b16 %v1152
    %v2706 = vunpack.c.h.b16 %v1152
    %v2707 = vunpack.c.l.b16 %v1153
    %v2708 = vunpack.c.h.b16 %v1153
    %v2709 = vunpack.c.l.b16 %v1154
    %v2710 = vunpack.c.h.b16 %v1154
    %v2711 = vunpack.c.l.b16 %v1155
    %v2712 = vunpack.c.h.b16 %v1155
    %v2713 = vunpack.c.l.b16 %v1156
    %v2714 = vunpack.c.h.b16 %v1156
    %v2715 = vpack.c.b16 %v1695, %v1691
    %v2716 = vpack.c.b16 %v1696, %v1692
    %v2717 = vpack.c.b16 %v1697, %v1693
    %v2718 = vpack.c.b16 %v1698, %v1694
    %v2719 = vpack.c.b16 %v1703, %v1699
    %v2720 = vpack.c.b16 %v1704, %v1700
    %v2721 = vpack.c.b16 %v1705, %v1701
    %v2722 = vpack.c.b16 %v1706, %v1702
    %v2723 = vpack.c.b16 %v1711, %v1707
    %v2724 = vpack.c.b16 %v1712, %v1708
    %v2725 = vpack.c.b16 %v1713, %v1709
    %v2726 = vpack.c.b16 %v1714, %v1710
    %v2727 = vpack.c.b16 %v1719, %v1715
    %v2728 = vpack.c.b16 %v1720, %v1716
    %v2729 = vpack.c.b16 %v1721, %v1717
    %v2730 = vpack.c.b16 %v1722, %v1718
    %v2731 = vpack.c.b16 %v1727, %v1723
    %v2732 = vpack.c.b16 %v1728, %v1724
    %v2733 = vpack.c.b16 %v1729, %v1725
    %v2734 = vpack.c.b16 %v1730, %v1726
    %v2735 = vpack.c.b16 %v1735, %v1731
    %v2736 = vpack.c.b16 %v1736, %v1732
    %v2737 = vpack.c.b16 %v1737, %v1733
    %v2738 = vpack.c.b16 %v1738, %v1734
    %v2739 = vpack.c.b16 %v1743, %v1739
    %v2740 = vpack.c.b16 %v1744, %v1740
    %v2741 = vpack.c.b16 %v1745, %v1741
    %v2742 = vpack.c.b16 %v1746, %v1742
    %v2743 = vpack.c.b16 %v1751, %v1747
    %v2744 = vpack.c.b16 %v1752, %v1748
    %v2745 = vpack.c.b16 %v1753, %v1749
    %v2746 = vpack.c.b16 %v1754, %v1750
    %v2747 = vpack.c.b16 %v1759, %v1755
    %v2748 = vpack.c.b16 %v1760, %v1756
    %v2749 = vpack.c.b16 %v1761, %v1757
    %v2750 = vpack.c.b16 %v1762, %v1758
    %v2751 = vpack.c.b16 %v1767, %v1763
    %v2752 = vpack.c.b16 %v1768, %v1764
    %v2753 = vpack.c.b16 %v1769, %v1765
    %v2754 = vpack.c.b16 %v1770, %v1766
    %v2755 = vpack.c.b16 %v1775, %v1771
    %v2756 = vpack.c.b16 %v1776, %v1772
    %v2757 = vpack.c.b16 %v1777, %v1773
    %v2758 = vpack.c.b16 %v1778, %v1774
    %v2759 = vpack.c.b16 %v1783, %v1779
    %v2760 = vpack.c.b16 %v1784, %v1780
    %v2761 = vpack.c.b16 %v1785, %v1781
    %v2762 = vpack.c.b16 %v1786, %v1782
    %v2763 = vpack.c.b16 %v1791, %v1787
    %v2764 = vpack.c.b16 %v1792, %v1788
    %v2765 = vpack.c.b16 %v1793, %v1789
    %v2766 = vpack.c.b16 %v1794, %v1790
    %v2767 = vpack.c.b16 %v1799, %v1795
    %v2768 = vpack.c.b16 %v1800, %v1796
    %v2769 = vpack.c.b16 %v1801, %v1797
    %v2770 = vpack.c.b16 %v1802, %v1798
    %v2771 = vpack.c.b16 %v1807, %v1803
    %v2772 = vpack.c.b16 %v1808, %v1804
    %v2773 = vpack.c.b16 %v1809, %v1805
    %v2774 = vpack.c.b16 %v1810, %v1806
    %v2775 = vpack.c.b16 %v1815, %v1811
    %v2776 = vpack.c.b16 %v1816, %v1812
    %v2777 = vpack.c.b16 %v1817, %v1813
    %v2778 = vpack.c.b16 %v1818, %v1814
    %v2779 = vpack.c.b16 %v1823, %v1819
    %v2780 = vpack.c.b16 %v1824, %v1820
    %v2781 = vpack.c.b16 %v1825, %v1821
    %v2782 = vpack.c.b16 %v1826, %v1822
    %v2783 = vpack.c.b16 %v1831, %v1827
    %v2784 = vpack.c.b16 %v1832, %v1828
    %v2785 = vpack.c.b16 %v1833, %v1829
    %v2786 = vpack.c.b16 %v1834, %v1830
    %v2787 = vpack.c.b16 %v1839, %v1835
    %v2788 = vpack.c.b16 %v1840, %v1836
    %v2789 = vpack.c.b16 %v1841, %v1837
    %v2790 = vpack.c.b16 %v1842, %v1838
    %v2791 = vpack.c.b16 %v1847, %v1843
    %v2792 = vpack.c.b16 %v1848, %v1844
    %v2793 = vpack.c.b16 %v1849, %v1845
    %v2794 = vpack.c.b16 %v1850, %v1846
    %v2795 = vpack.c.b16 %v1855, %v1851
    %v2796 = vpack.c.b16 %v1856, %v1852
    %v2797 = vpack.c.b16 %v1857, %v1853
    %v2798 = vpack.c.b16 %v1858, %v1854
    %v2799 = vpack.c.b16 %v1863, %v1859
    %v2800 = vpack.c.b16 %v1864, %v1860
    %v2801 = vpack.c.b16 %v1865, %v1861
    %v2802 = vpack.c.b16 %v1866, %v1862
    %v2803 = vpack.c.b16 %v1871, %v1867
    %v2804 = vpack.c.b16 %v1872, %v1868
    %v2805 = vpack.c.b16 %v1873, %v1869
    %v2806 = vpack.c.b16 %v1874, %v1870
    %v2807 = vpack.c.b16 %v1879, %v1875
    %v2808 = vpack.c.b16 %v1880, %v1876
    %v2809 = vpack.c.b16 %v1881, %v1877
    %v2810 = vpack.c.b16 %v1882, %v1878
    %v2811 = vpack.c.b16 %v1887, %v1883
    %v2812 = vpack.c.b16 %v1888, %v1884
    %v2813 = vpack.c.b16 %v1889, %v1885
    %v2814 = vpack.c.b16 %v1890, %v1886
    %v2815 = vpack.c.b16 %v1895, %v1891
    %v2816 = vpack.c.b16 %v1896, %v1892
    %v2817 = vpack.c.b16 %v1897, %v1893
    %v2818 = vpack.c.b16 %v1898, %v1894
    %v2819 = vpack.c.b16 %v1903, %v1899
    %v2820 = vpack.c.b16 %v1904, %v1900
    %v2821 = vpack.c.b16 %v1905, %v1901
    %v2822 = vpack.c.b16 %v1906, %v1902
    %v2823 = vpack.c.b16 %v1911, %v1907
    %v2824 = vpack.c.b16 %v1912, %v1908
    %v2825 = vpack.c.b16 %v1913, %v1909
    %v2826 = vpack.c.b16 %v1914, %v1910
    %v2827 = vpack.c.b16 %v1919, %v1915
    %v2828 = vpack.c.b16 %v1920, %v1916
    %v2829 = vpack.c.b16 %v1921, %v1917
    %v2830 = vpack.c.b16 %v1922, %v1918
    %v2831 = vpack.c.b16 %v1927, %v1923
    %v2832 = vpack.c.b16 %v1928, %v1924
    %v2833 = vpack.c.b16 %v1929, %v1925
    %v2834 = vpack.c.b16 %v1930, %v1926
    %v2835 = vpack.c.b16 %v1935, %v1931
    %v2836 = vpack.c.b16 %v1936, %v1932
    %v2837 = vpack.c.b16 %v1937, %v1933
    %v2838 = vpack.c.b16 %v1938, %v1934
    %v2839 = vpack.c.b16 %v1943, %v1939
    %v2840 = vpack.c.b16 %v1944, %v1940
    %v2841 = vpack.c.b16 %v1945, %v1941
    %v2842 = vpack.c.b16 %v1946, %v1942
    %v2843 = vpack.c.b16 %v1951, %v1947
    %v2844 = vpack.c.b16 %v1952, %v1948
    %v2845 = vpack.c.b16 %v1953, %v1949
    %v2846 = vpack.c.b16 %v1954, %v1950
    %v2847 = vpack.c.b16 %v1959, %v1955
    %v2848 = vpack.c.b16 %v1960, %v1956
    %v2849 = vpack.c.b16 %v1961, %v1957
    %v2850 = vpack.c.b16 %v1962, %v1958
    %v2851 = vpack.c.b16 %v1967, %v1963
    %v2852 = vpack.c.b16 %v1968, %v1964
    %v2853 = vpack.c.b16 %v1969, %v1965
    %v2854 = vpack.c.b16 %v1970, %v1966
    %v2855 = vpack.c.b16 %v1975, %v1971
    %v2856 = vpack.c.b16 %v1976, %v1972
    %v2857 = vpack.c.b16 %v1977, %v1973
    %v2858 = vpack.c.b16 %v1978, %v1974
    %v2859 = vpack.c.b16 %v1983, %v1979
    %v2860 = vpack.c.b16 %v1984, %v1980
    %v2861 = vpack.c.b16 %v1985, %v1981
    %v2862 = vpack.c.b16 %v1986, %v1982
    %v2863 = vpack.c.b16 %v1991, %v1987
    %v2864 = vpack.c.b16 %v1992, %v1988
    %v2865 = vpack.c.b16 %v1993, %v1989
    %v2866 = vpack.c.b16 %v1994, %v1990
    %v2867 = vpack.c.b16 %v1999, %v1995
    %v2868 = vpack.c.b16 %v2000, %v1996
    %v2869 = vpack.c.b16 %v2001, %v1997
    %v2870 = vpack.c.b16 %v2002, %v1998
    %v2871 = vpack.c.b16 %v2007, %v2003
    %v2872 = vpack.c.b16 %v2008, %v2004
    %v2873 = vpack.c.b16 %v2009, %v2005
    %v2874 = vpack.c.b16 %v2010, %v2006
    %v2875 = vpack.c.b16 %v2015, %v2011
    %v2876 = vpack.c.b16 %v2016, %v2012
    %v2877 = vpack.c.b16 %v2017, %v2013
    %v2878 = vpack.c.b16 %v2018, %v2014
    %v2879 = vpack.c.b16 %v2023, %v2019
    %v2880 = vpack.c.b16 %v2024, %v2020
    %v2881 = vpack.c.b16 %v2025, %v2021
    %v2882 = vpack.c.b16 %v2026, %v2022
    %v2883 = vpack.c.b16 %v2031, %v2027
    %v2884 = vpack.c.b16 %v2032, %v2028
    %v2885 = vpack.c.b16 %v2033, %v2029
    %v2886 = vpack.c.b16 %v2034, %v2030
    %v2887 = vpack.c.b16 %v2039, %v2035
    %v2888 = vpack.c.b16 %v2040, %v2036
    %v2889 = vpack.c.b16 %v2041, %v2037
    %v2890 = vpack.c.b16 %v2042, %v2038
    %v2891 = vpack.c.b16 %v2047, %v2043
    %v2892 = vpack.c.b16 %v2048, %v2044
    %v2893 = vpack.c.b16 %v2049, %v2045
    %v2894 = vpack.c.b16 %v2050, %v2046
    %v2895 = vpack.c.b16 %v2055, %v2051
    %v2896 = vpack.c.b16 %v2056, %v2052
    %v2897 = vpack.c.b16 %v2057, %v2053
    %v2898 = vpack.c.b16 %v2058, %v2054
    %v2899 = vpack.c.b16 %v2063, %v2059
    %v2900 = vpack.c.b16 %v2064, %v2060
    %v2901 = vpack.c.b16 %v2065, %v2061
    %v2902 = vpack.c.b16 %v2066, %v2062
    %v2903 = vpack.c.b16 %v2071, %v2067
    %v2904 = vpack.c.b16 %v2072, %v2068
    %v2905 = vpack.c.b16 %v2073, %v2069
    %v2906 = vpack.c.b16 %v2074, %v2070
    %v2907 = vpack.c.b16 %v2079, %v2075
    %v2908 = vpack.c.b16 %v2080, %v2076
    %v2909 = vpack.c.b16 %v2081, %v2077
    %v2910 = vpack.c.b16 %v2082, %v2078
    %v2911 = vpack.c.b16 %v2087, %v2083
    %v2912 = vpack.c.b16 %v2088, %v2084
    %v2913 = vpack.c.b16 %v2089, %v2085
    %v2914 = vpack.c.b16 %v2090, %v2086
    %v2915 = vpack.c.b16 %v2095, %v2091
    %v2916 = vpack.c.b16 %v2096, %v2092
    %v2917 = vpack.c.b16 %v2097, %v2093
    %v2918 = vpack.c.b16 %v2098, %v2094
    %v2919 = vpack.c.b16 %v2103, %v2099
    %v2920 = vpack.c.b16 %v2104, %v2100
    %v2921 = vpack.c.b16 %v2105, %v2101
    %v2922 = vpack.c.b16 %v2106, %v2102
    %v2923 = vpack.c.b16 %v2111, %v2107
    %v2924 = vpack.c.b16 %v2112, %v2108
    %v2925 = vpack.c.b16 %v2113, %v2109
    %v2926 = vpack.c.b16 %v2114, %v2110
    %v2927 = vpack.c.b16 %v2119, %v2115
    %v2928 = vpack.c.b16 %v2120, %v2116
    %v2929 = vpack.c.b16 %v2121, %v2117
    %v2930 = vpack.c.b16 %v2122, %v2118
    %v2931 = vpack.c.b16 %v2127, %v2123
    %v2932 = vpack.c.b16 %v2128, %v2124
    %v2933 = vpack.c.b16 %v2129, %v2125
    %v2934 = vpack.c.b16 %v2130, %v2126
    %v2935 = vpack.c.b16 %v2135, %v2131
    %v2936 = vpack.c.b16 %v2136, %v2132
    %v2937 = vpack.c.b16 %v2137, %v2133
    %v2938 = vpack.c.b16 %v2138, %v2134
    %v2939 = vpack.c.b16 %v2143, %v2139
    %v2940 = vpack.c.b16 %v2144, %v2140
    %v2941 = vpack.c.b16 %v2145, %v2141
    %v2942 = vpack.c.b16 %v2146, %v2142
    %v2943 = vpack.c.b16 %v2151, %v2147
    %v2944 = vpack.c.b16 %v2152, %v2148
    %v2945 = vpack.c.b16 %v2153, %v2149
    %v2946 = vpack.c.b16 %v2154, %v2150
    %v2947 = vpack.c.b16 %v2159, %v2155
    %v2948 = vpack.c.b16 %v2160, %v2156
    %v2949 = vpack.c.b16 %v2161, %v2157
    %v2950 = vpack.c.b16 %v2162, %v2158
    %v2951 = vpack.c.b16 %v2167, %v2163
    %v2952 = vpack.c.b16 %v2168, %v2164
    %v2953 = vpack.c.b16 %v2169, %v2165
    %v2954 = vpack.c.b16 %v2170, %v2166
    %v2955 = vpack.c.b16 %v2175, %v2171
    %v2956 = vpack.c.b16 %v2176, %v2172
    %v2957 = vpack.c.b16 %v2177, %v2173
    %v2958 = vpack.c.b16 %v2178, %v2174
    %v2959 = vpack.c.b16 %v2183, %v2179
    %v2960 = vpack.c.b16 %v2184, %v2180
    %v2961 = vpack.c.b16 %v2185, %v2181
    %v2962 = vpack.c.b16 %v2186, %v2182
    %v2963 = vpack.c.b16 %v2191, %v2187
    %v2964 = vpack.c.b16 %v2192, %v2188
    %v2965 = vpack.c.b16 %v2193, %v2189
    %v2966 = vpack.c.b16 %v2194, %v2190
    %v2967 = vpack.c.b16 %v2199, %v2195
    %v2968 = vpack.c.b16 %v2200, %v2196
    %v2969 = vpack.c.b16 %v2201, %v2197
    %v2970 = vpack.c.b16 %v2202, %v2198
    %v2971 = vpack.c.b16 %v2207, %v2203
    %v2972 = vpack.c.b16 %v2208, %v2204
    %v2973 = vpack.c.b16 %v2209, %v2205
    %v2974 = vpack.c.b16 %v2210, %v2206
    %v2975 = vpack.c.b16 %v2215, %v2211
    %v2976 = vpack.c.b16 %v2216, %v2212
    %v2977 = vpack.c.b16 %v2217, %v2213
    %v2978 = vpack.c.b16 %v2218, %v2214
    %v2979 = vpack.c.b16 %v2223, %v2219
    %v2980 = vpack.c.b16 %v2224, %v2220
    %v2981 = vpack.c.b16 %v2225, %v2221
    %v2982 = vpack.c.b16 %v2226, %v2222
    %v2983 = vpack.c.b16 %v2231, %v2227
    %v2984 = vpack.c.b16 %v2232, %v2228
    %v2985 = vpack.c.b16 %v2233, %v2229
    %v2986 = vpack.c.b16 %v2234, %v2230
    %v2987 = vpack.c.b16 %v2239, %v2235
    %v2988 = vpack.c.b16 %v2240, %v2236
    %v2989 = vpack.c.b16 %v2241, %v2237
    %v2990 = vpack.c.b16 %v2242, %v2238
    %v2991 = vpack.c.b16 %v2247, %v2243
    %v2992 = vpack.c.b16 %v2248, %v2244
    %v2993 = vpack.c.b16 %v2249, %v2245
    %v2994 = vpack.c.b16 %v2250, %v2246
    %v2995 = vpack.c.b16 %v2255, %v2251
    %v2996 = vpack.c.b16 %v2256, %v2252
    %v2997 = vpack.c.b16 %v2257, %v2253
    %v2998 = vpack.c.b16 %v2258, %v2254
    %v2999 = vpack.c.b16 %v2263, %v2259
    %v3000 = vpack.c.b16 %v2264, %v2260
    %v3001 = vpack.c.b16 %v2265, %v2261
    %v3002 = vpack.c.b16 %v2266, %v2262
    %v3003 = vpack.c.b16 %v2271, %v2267
    %v3004 = vpack.c.b16 %v2272, %v2268
    %v3005 = vpack.c.b16 %v2273, %v2269
    %v3006 = vpack.c.b16 %v2274, %v2270
    %v3007 = vpack.c.b16 %v2279, %v2275
    %v3008 = vpack.c.b16 %v2280, %v2276
    %v3009 = vpack.c.b16 %v2281, %v2277
    %v3010 = vpack.c.b16 %v2282, %v2278
    %v3011 = vpack.c.b16 %v2287, %v2283
    %v3012 = vpack.c.b16 %v2288, %v2284
    %v3013 = vpack.c.b16 %v2289, %v2285
    %v3014 = vpack.c.b16 %v2290, %v2286
    %v3015 = vpack.c.b16 %v2295, %v2291
    %v3016 = vpack.c.b16 %v2296, %v2292
    %v3017 = vpack.c.b16 %v2297, %v2293
    %v3018 = vpack.c.b16 %v2298, %v2294
    %v3019 = vpack.c.b16 %v2303, %v2299
    %v3020 = vpack.c.b16 %v2304, %v2300
    %v3021 = vpack.c.b16 %v2305, %v2301
    %v3022 = vpack.c.b16 %v2306, %v2302
    %v3023 = vpack.c.b16 %v2311, %v2307
    %v3024 = vpack.c.b16 %v2312, %v2308
    %v3025 = vpack.c.b16 %v2313, %v2309
    %v3026 = vpack.c.b16 %v2314, %v2310
    %v3027 = vpack.c.b16 %v2319, %v2315
    %v3028 = vpack.c.b16 %v2320, %v2316
    %v3029 = vpack.c.b16 %v2321, %v2317
    %v3030 = vpack.c.b16 %v2322, %v2318
    %v3031 = vpack.c.b16 %v2327, %v2323
    %v3032 = vpack.c.b16 %v2328, %v2324
    %v3033 = vpack.c.b16 %v2329, %v2325
    %v3034 = vpack.c.b16 %v2330, %v2326
    %v3035 = vpack.c.b16 %v2335, %v2331
    %v3036 = vpack.c.b16 %v2336, %v2332
    %v3037 = vpack.c.b16 %v2337, %v2333
    %v3038 = vpack.c.b16 %v2338, %v2334
    %v3039 = vpack.c.b16 %v2343, %v2339
    %v3040 = vpack.c.b16 %v2344, %v2340
    %v3041 = vpack.c.b16 %v2345, %v2341
    %v3042 = vpack.c.b16 %v2346, %v2342
    %v3043 = vpack.c.b16 %v2351, %v2347
    %v3044 = vpack.c.b16 %v2352, %v2348
    %v3045 = vpack.c.b16 %v2353, %v2349
    %v3046 = vpack.c.b16 %v2354, %v2350
    %v3047 = vpack.c.b16 %v2359, %v2355
    %v3048 = vpack.c.b16 %v2360, %v2356
    %v3049 = vpack.c.b16 %v2361, %v2357
    %v3050 = vpack.c.b16 %v2362, %v2358
    %v3051 = vpack.c.b16 %v2367, %v2363
    %v3052 = vpack.c.b16 %v2368, %v2364
    %v3053 = vpack.c.b16 %v2369, %v2365
    %v3054 = vpack.c.b16 %v2370, %v2366
    %v3055 = vpack.c.b16 %v2375, %v2371
    %v3056 = vpack.c.b16 %v2376, %v2372
    %v3057 = vpack.c.b16 %v2377, %v2373
    %v3058 = vpack.c.b16 %v2378, %v2374
    %v3059 = vpack.c.b16 %v2383, %v2379
    %v3060 = vpack.c.b16 %v2384, %v2380
    %v3061 = vpack.c.b16 %v2385, %v2381
    %v3062 = vpack.c.b16 %v2386, %v2382
    %v3063 = vpack.c.b16 %v2391, %v2387
    %v3064 = vpack.c.b16 %v2392, %v2388
    %v3065 = vpack.c.b16 %v2393, %v2389
    %v3066 = vpack.c.b16 %v2394, %v2390
    %v3067 = vpack.c.b16 %v2399, %v2395
    %v3068 = vpack.c.b16 %v2400, %v2396
    %v3069 = vpack.c.b16 %v2401, %v2397
    %v3070 = vpack.c.b16 %v2402, %v2398
    %v3071 = vpack.c.b16 %v2407, %v2403
    %v3072 = vpack.c.b16 %v2408, %v2404
    %v3073 = vpack.c.b16 %v2409, %v2405
    %v3074 = vpack.c.b16 %v2410, %v2406
    %v3075 = vpack.c.b16 %v2415, %v2411
    %v3076 = vpack.c.b16 %v2416, %v2412
    %v3077 = vpack.c.b16 %v2417, %v2413
    %v3078 = vpack.c.b16 %v2418, %v2414
    %v3079 = vpack.c.b16 %v2423, %v2419
    %v3080 = vpack.c.b16 %v2424, %v2420
    %v3081 = vpack.c.b16 %v2425, %v2421
    %v3082 = vpack.c.b16 %v2426, %v2422
    %v3083 = vpack.c.b16 %v2431, %v2427
    %v3084 = vpack.c.b16 %v2432, %v2428
    %v3085 = vpack.c.b16 %v2433, %v2429
    %v3086 = vpack.c.b16 %v2434, %v2430
    %v3087 = vpack.c.b16 %v2439, %v2435
    %v3088 = vpack.c.b16 %v2440, %v2436
    %v3089 = vpack.c.b16 %v2441, %v2437
    %v3090 = vpack.c.b16 %v2442, %v2438
    %v3091 = vpack.c.b16 %v2447, %v2443
    %v3092 = vpack.c.b16 %v2448, %v2444
    %v3093 = vpack.c.b16 %v2449, %v2445
    %v3094 = vpack.c.b16 %v2450, %v2446
    %v3095 = vpack.c.b16 %v2455, %v2451
    %v3096 = vpack.c.b16 %v2456, %v2452
    %v3097 = vpack.c.b16 %v2457, %v2453
    %v3098 = vpack.c.b16 %v2458, %v2454
    %v3099 = vpack.c.b16 %v2463, %v2459
    %v3100 = vpack.c.b16 %v2464, %v2460
    %v3101 = vpack.c.b16 %v2465, %v2461
    %v3102 = vpack.c.b16 %v2466, %v2462
    %v3103 = vpack.c.b16 %v2471, %v2467
    %v3104 = vpack.c.b16 %v2472, %v2468
    %v3105 = vpack.c.b16 %v2473, %v2469
    %v3106 = vpack.c.b16 %v2474, %v2470
    %v3107 = vpack.c.b16 %v2479, %v2475
    %v3108 = vpack.c.b16 %v2480, %v2476
    %v3109 = vpack.c.b16 %v2481, %v2477
    %v3110 = vpack.c.b16 %v2482, %v2478
    %v3111 = vpack.c.b16 %v2487, %v2483
    %v3112 = vpack.c.b16 %v2488, %v2484
    %v3113 = vpack.c.b16 %v2489, %v2485
    %v3114 = vpack.c.b16 %v2490, %v2486
    %v3115 = vpack.c.b16 %v2495, %v2491
    %v3116 = vpack.c.b16 %v2496, %v2492
    %v3117 = vpack.c.b16 %v2497, %v2493
    %v3118 = vpack.c.b16 %v2498, %v2494
    %v3119 = vpack.c.b16 %v2503, %v2499
    %v3120 = vpack.c.b16 %v2504, %v2500
    %v3121 = vpack.c.b16 %v2505, %v2501
    %v3122 = vpack.c.b16 %v2506, %v2502
    %v3123 = vpack.c.b16 %v2511, %v2507
    %v3124 = vpack.c.b16 %v2512, %v2508
    %v3125 = vpack.c.b16 %v2513, %v2509
    %v3126 = vpack.c.b16 %v2514, %v2510
    %v3127 = vpack.c.b16 %v2519, %v2515
    %v3128 = vpack.c.b16 %v2520, %v2516
    %v3129 = vpack.c.b16 %v2521, %v2517
    %v3130 = vpack.c.b16 %v2522, %v2518
    %v3131 = vpack.c.b16 %v2527, %v2523
    %v3132 = vpack.c.b16 %v2528, %v2524
    %v3133 = vpack.c.b16 %v2529, %v2525
    %v3134 = vpack.c.b16 %v2530, %v2526
    %v3135 = vpack.c.b16 %v2535, %v2531
    %v3136 = vpack.c.b16 %v2536, %v2532
    %v3137 = vpack.c.b16 %v2537, %v2533
    %v3138 = vpack.c.b16 %v2538, %v2534
    %v3139 = vpack.c.b16 %v2543, %v2539
    %v3140 = vpack.c.b16 %v2544, %v2540
    %v3141 = vpack.c.b16 %v2545, %v2541
    %v3142 = vpack.c.b16 %v2546, %v2542
    %v3143 = vpack.c.b16 %v2551, %v2547
    %v3144 = vpack.c.b16 %v2552, %v2548
    %v3145 = vpack.c.b16 %v2553, %v2549
    %v3146 = vpack.c.b16 %v2554, %v2550
    %v3147 = vpack.c.b16 %v2559, %v2555
    %v3148 = vpack.c.b16 %v2560, %v2556
    %v3149 = vpack.c.b16 %v2561, %v2557
    %v3150 = vpack.c.b16 %v2562, %v2558
    %v3151 = vpack.c.b16 %v2567, %v2563
    %v3152 = vpack.c.b16 %v2568, %v2564
    %v3153 = vpack.c.b16 %v2569, %v2565
    %v3154 = vpack.c.b16 %v2570, %v2566
    %v3155 = vpack.c.b16 %v2575, %v2571
    %v3156 = vpack.c.b16 %v2576, %v2572
    %v3157 = vpack.c.b16 %v2577, %v2573
    %v3158 = vpack.c.b16 %v2578, %v2574
    %v3159 = vpack.c.b16 %v2583, %v2579
    %v3160 = vpack.c.b16 %v2584, %v2580
    %v3161 = vpack.c.b16 %v2585, %v2581
    %v3162 = vpack.c.b16 %v2586, %v2582
    %v3163 = vpack.c.b16 %v2591, %v2587
    %v3164 = vpack.c.b16 %v2592, %v2588
    %v3165 = vpack.c.b16 %v2593, %v2589
    %v3166 = vpack.c.b16 %v2594, %v2590
    %v3167 = vpack.c.b16 %v2599, %v2595
    %v3168 = vpack.c.b16 %v2600, %v2596
    %v3169 = vpack.c.b16 %v2601, %v2597
    %v3170 = vpack.c.b16 %v2602, %v2598
    %v3171 = vpack.c.b16 %v2607, %v2603
    %v3172 = vpack.c.b16 %v2608, %v2604
    %v3173 = vpack.c.b16 %v2609, %v2605
    %v3174 = vpack.c.b16 %v2610, %v2606
    %v3175 = vpack.c.b16 %v2615, %v2611
    %v3176 = vpack.c.b16 %v2616, %v2612
    %v3177 = vpack.c.b16 %v2617, %v2613
    %v3178 = vpack.c.b16 %v2618, %v2614
    %v3179 = vpack.c.b16 %v2623, %v2619
    %v3180 = vpack.c.b16 %v2624, %v2620
    %v3181 = vpack.c.b16 %v2625, %v2621
    %v3182 = vpack.c.b16 %v2626, %v2622
    %v3183 = vpack.c.b16 %v2631, %v2627
    %v3184 = vpack.c.b16 %v2632, %v2628
    %v3185 = vpack.c.b16 %v2633, %v2629
    %v3186 = vpack.c.b16 %v2634, %v2630
    %v3187 = vpack.c.b16 %v2639, %v2635
    %v3188 = vpack.c.b16 %v2640, %v2636
    %v3189 = vpack.c.b16 %v2641, %v2637
    %v3190 = vpack.c.b16 %v2642, %v2638
    %v3191 = vpack.c.b16 %v2647, %v2643
    %v3192 = vpack.c.b16 %v2648, %v2644
    %v3193 = vpack.c.b16 %v2649, %v2645
    %v3194 = vpack.c.b16 %v2650, %v2646
    %v3195 = vpack.c.b16 %v2655, %v2651
    %v3196 = vpack.c.b16 %v2656, %v2652
    %v3197 = vpack.c.b16 %v2657, %v2653
    %v3198 = vpack.c.b16 %v2658, %v2654
    %v3199 = vpack.c.b16 %v2663, %v2659
    %v3200 = vpack.c.b16 %v2664, %v2660
    %v3201 = vpack.c.b16 %v2665, %v2661
    %v3202 = vpack.c.b16 %v2666, %v2662
    %v3203 = vpack.c.b16 %v2671, %v2667
    %v3204 = vpack.c.b16 %v2672, %v2668
    %v3205 = vpack.c.b16 %v2673, %v2669
    %v3206 = vpack.c.b16 %v2674, %v2670
    %v3207 = vpack.c.b16 %v2679, %v2675
    %v3208 = vpack.c.b16 %v2680, %v2676
    %v3209 = vpack.c.b16 %v2681, %v2677
    %v3210 = vpack.c.b16 %v2682, %v2678
    %v3211 = vpack.c.b16 %v2687, %v2683
    %v3212 = vpack.c.b16 %v2688, %v2684
    %v3213 = vpack.c.b16 %v2689, %v2685
    %v3214 = vpack.c.b16 %v2690, %v2686
    %v3215 = vpack.c.b16 %v2695, %v2691
    %v3216 = vpack.c.b16 %v2696, %v2692
    %v3217 = vpack.c.b16 %v2697, %v2693
    %v3218 = vpack.c.b16 %v2698, %v2694
    %v3219 = vpack.c.b16 %v2703, %v2699
    %v3220 = vpack.c.b16 %v2704, %v2700
    %v3221 = vpack.c.b16 %v2705, %v2701
    %v3222 = vpack.c.b16 %v2706, %v2702
    %v3223 = vpack.c.b16 %v2711, %v2707
    %v3224 = vpack.c.b16 %v2712, %v2708
    %v3225 = vpack.c.b16 %v2713, %v2709
    %v3226 = vpack.c.b16 %v2714, %v2710
    %3739 = vmatprep.subr.bf16.mxu0 %v2744
    %3740 = vmatpush1.bf16.msra.mxu0 %v2743
    %3741 = vmatprep.subr.bf16.mxu0 %v2740
    %3742 = vmatpush1.bf16.msra.mxu0 %v2739
    %3743 = vmatprep.subr.bf16.mxu0 %v2736
    %3744 = vmatpush1.bf16.msra.mxu0 %v2735
    %3745 = vmatprep.subr.bf16.mxu0 %v2732
    %3746 = vmatpush1.bf16.msra.mxu0 %v2731
    %3747 = vmatprep.subr.bf16.mxu0 %v2728
    %3748 = vmatpush1.bf16.msra.mxu0 %v2727
    %3749 = vmatprep.subr.bf16.mxu0 %v2724
    %3750 = vmatpush1.bf16.msra.mxu0 %v2723
    %3751 = vmatprep.subr.bf16.mxu0 %v2720
    %3752 = vmatpush1.bf16.msra.mxu0 %v2719
    %3753 = vmatprep.subr.bf16.mxu0 %v2716
    %3754 = vmatpush1.bf16.msra.mxu0 %v2715
    %3755 = vmatprep.subr.bf16.mxu0 %v2776
    %3756 = vmatpush2.bf16.msra.mxu0 %v2775
    %3757 = vmatprep.subr.bf16.mxu0 %v2772
    %3758 = vmatpush2.bf16.msra.mxu0 %v2771
    %3759 = vmatprep.subr.bf16.mxu0 %v2768
    %3760 = vmatpush2.bf16.msra.mxu0 %v2767
    %3761 = vmatprep.subr.bf16.mxu0 %v2764
    %3762 = vmatpush2.bf16.msra.mxu0 %v2763
    %3763 = vmatprep.subr.bf16.mxu0 %v2760
    %3764 = vmatpush2.bf16.msra.mxu0 %v2759
    %3765 = vmatprep.subr.bf16.mxu0 %v2756
    %3766 = vmatpush2.bf16.msra.mxu0 %v2755
    %3767 = vmatprep.subr.bf16.mxu0 %v2752
    %3768 = vmatpush2.bf16.msra.mxu0 %v2751
    %3769 = vmatprep.subr.bf16.mxu0 %v2748
    %3770 = vmatpush2.bf16.msra.mxu0 %v2747
    %3771 = vmatprep.mubr.bf16.mxu0 %v626
    %3772 = vmatmul.mubr.bf16.gmra.mxu0 %v625
    %v3773 = vpop.f32.mrf.mxu0
    %v3774 = vadd.f32 %v1162, %v3773
    %v3775 = vpop.f32.mrf.mxu0
    %v3776 = vadd.f32 %v1166, %v3775
    %v3777 = vpop.f32.mrf.mxu0
    %v3778 = vpop.f32.mrf.mxu0
    %3779 = vdwg.mxu0
    %3780 = vmatprep.subr.bf16.mxu0 %v2808
    %3781 = vmatpush1.bf16.msra.mxu0 %v2807
    %3782 = vmatprep.subr.bf16.mxu0 %v2804
    %3783 = vmatpush1.bf16.msra.mxu0 %v2803
    %3784 = vmatprep.subr.bf16.mxu0 %v2800
    %3785 = vmatpush1.bf16.msra.mxu0 %v2799
    %3786 = vmatprep.subr.bf16.mxu0 %v2796
    %3787 = vmatpush1.bf16.msra.mxu0 %v2795
    %3788 = vmatprep.subr.bf16.mxu0 %v2792
    %3789 = vmatpush1.bf16.msra.mxu0 %v2791
    %3790 = vmatprep.subr.bf16.mxu0 %v2788
    %3791 = vmatpush1.bf16.msra.mxu0 %v2787
    %3792 = vmatprep.subr.bf16.mxu0 %v2784
    %3793 = vmatpush1.bf16.msra.mxu0 %v2783
    %3794 = vmatprep.subr.bf16.mxu0 %v2780
    %3795 = vmatpush1.bf16.msra.mxu0 %v2779
    %3796 = vmatprep.subr.bf16.mxu0 %v2840
    %3797 = vmatpush2.bf16.msra.mxu0 %v2839
    %3798 = vmatprep.subr.bf16.mxu0 %v2836
    %3799 = vmatpush2.bf16.msra.mxu0 %v2835
    %3800 = vmatprep.subr.bf16.mxu0 %v2832
    %3801 = vmatpush2.bf16.msra.mxu0 %v2831
    %3802 = vmatprep.subr.bf16.mxu0 %v2828
    %3803 = vmatpush2.bf16.msra.mxu0 %v2827
    %3804 = vmatprep.subr.bf16.mxu0 %v2824
    %3805 = vmatpush2.bf16.msra.mxu0 %v2823
    %3806 = vmatprep.subr.bf16.mxu0 %v2820
    %3807 = vmatpush2.bf16.msra.mxu0 %v2819
    %3808 = vmatprep.subr.bf16.mxu0 %v2816
    %3809 = vmatpush2.bf16.msra.mxu0 %v2815
    %3810 = vmatprep.subr.bf16.mxu0 %v2812
    %3811 = vmatpush2.bf16.msra.mxu0 %v2811
    %3812 = vmatprep.mubr.bf16.mxu0 %v628
    %3813 = vmatmul.mubr.bf16.gmra.mxu0 %v627
    %v3814 = vpop.f32.mrf.mxu0
    %v3815 = vadd.f32 %v3774, %v3814
    %v3816 = vpop.f32.mrf.mxu0
    %v3817 = vadd.f32 %v3776, %v3816
    %v3818 = vpop.f32.mrf.mxu0
    %v3819 = vpop.f32.mrf.mxu0
    %3820 = vdwg.mxu0
    %3821 = vmatprep.subr.bf16.mxu0 %v2872
    %3822 = vmatpush1.bf16.msra.mxu0 %v2871
    %3823 = vmatprep.subr.bf16.mxu0 %v2868
    %3824 = vmatpush1.bf16.msra.mxu0 %v2867
    %3825 = vmatprep.subr.bf16.mxu0 %v2864
    %3826 = vmatpush1.bf16.msra.mxu0 %v2863
    %3827 = vmatprep.subr.bf16.mxu0 %v2860
    %3828 = vmatpush1.bf16.msra.mxu0 %v2859
    %3829 = vmatprep.subr.bf16.mxu0 %v2856
    %3830 = vmatpush1.bf16.msra.mxu0 %v2855
    %3831 = vmatprep.subr.bf16.mxu0 %v2852
    %3832 = vmatpush1.bf16.msra.mxu0 %v2851
    %3833 = vmatprep.subr.bf16.mxu0 %v2848
    %3834 = vmatpush1.bf16.msra.mxu0 %v2847
    %3835 = vmatprep.subr.bf16.mxu0 %v2844
    %3836 = vmatpush1.bf16.msra.mxu0 %v2843
    %3837 = vmatprep.subr.bf16.mxu0 %v2904
    %3838 = vmatpush2.bf16.msra.mxu0 %v2903
    %3839 = vmatprep.subr.bf16.mxu0 %v2900
    %3840 = vmatpush2.bf16.msra.mxu0 %v2899
    %3841 = vmatprep.subr.bf16.mxu0 %v2896
    %3842 = vmatpush2.bf16.msra.mxu0 %v2895
    %3843 = vmatprep.subr.bf16.mxu0 %v2892
    %3844 = vmatpush2.bf16.msra.mxu0 %v2891
    %3845 = vmatprep.subr.bf16.mxu0 %v2888
    %3846 = vmatpush2.bf16.msra.mxu0 %v2887
    %3847 = vmatprep.subr.bf16.mxu0 %v2884
    %3848 = vmatpush2.bf16.msra.mxu0 %v2883
    %3849 = vmatprep.subr.bf16.mxu0 %v2880
    %3850 = vmatpush2.bf16.msra.mxu0 %v2879
    %3851 = vmatprep.subr.bf16.mxu0 %v2876
    %3852 = vmatpush2.bf16.msra.mxu0 %v2875
    %3853 = vmatprep.mubr.bf16.mxu0 %v630
    %3854 = vmatmul.mubr.bf16.gmra.mxu0 %v629
    %v3855 = vpop.f32.mrf.mxu0
    %v3856 = vadd.f32 %v3815, %v3855
    %v3857 = vpop.f32.mrf.mxu0
    %v3858 = vadd.f32 %v3817, %v3857
    %v3859 = vpop.f32.mrf.mxu0
    %v3860 = vpop.f32.mrf.mxu0
    %3861 = vdwg.mxu0
    %3862 = vmatprep.subr.bf16.mxu0 %v2936
    %3863 = vmatpush1.bf16.msra.mxu0 %v2935
    %3864 = vmatprep.subr.bf16.mxu0 %v2932
    %3865 = vmatpush1.bf16.msra.mxu0 %v2931
    %3866 = vmatprep.subr.bf16.mxu0 %v2928
    %3867 = vmatpush1.bf16.msra.mxu0 %v2927
    %3868 = vmatprep.subr.bf16.mxu0 %v2924
    %3869 = vmatpush1.bf16.msra.mxu0 %v2923
    %3870 = vmatprep.subr.bf16.mxu0 %v2920
    %3871 = vmatpush1.bf16.msra.mxu0 %v2919
    %3872 = vmatprep.subr.bf16.mxu0 %v2916
    %3873 = vmatpush1.bf16.msra.mxu0 %v2915
    %3874 = vmatprep.subr.bf16.mxu0 %v2912
    %3875 = vmatpush1.bf16.msra.mxu0 %v2911
    %3876 = vmatprep.subr.bf16.mxu0 %v2908
    %3877 = vmatpush1.bf16.msra.mxu0 %v2907
    %3878 = vmatprep.subr.bf16.mxu0 %v2968
    %3879 = vmatpush2.bf16.msra.mxu0 %v2967
    %3880 = vmatprep.subr.bf16.mxu0 %v2964
    %3881 = vmatpush2.bf16.msra.mxu0 %v2963
    %3882 = vmatprep.subr.bf16.mxu0 %v2960
    %3883 = vmatpush2.bf16.msra.mxu0 %v2959
    %3884 = vmatprep.subr.bf16.mxu0 %v2956
    %3885 = vmatpush2.bf16.msra.mxu0 %v2955
    %3886 = vmatprep.subr.bf16.mxu0 %v2952
    %3887 = vmatpush2.bf16.msra.mxu0 %v2951
    %3888 = vmatprep.subr.bf16.mxu0 %v2948
    %3889 = vmatpush2.bf16.msra.mxu0 %v2947
    %3890 = vmatprep.subr.bf16.mxu0 %v2944
    %3891 = vmatpush2.bf16.msra.mxu0 %v2943
    %3892 = vmatprep.subr.bf16.mxu0 %v2940
    %3893 = vmatpush2.bf16.msra.mxu0 %v2939
    %3894 = vmatprep.mubr.bf16.mxu0 %v632
    %3895 = vmatmul.mubr.bf16.gmra.mxu0 %v631
    %v3896 = vpop.f32.mrf.mxu0
    %v3897 = vadd.f32 %v3856, %v3896
    %v3898 = vpop.f32.mrf.mxu0
    %v3899 = vadd.f32 %v3858, %v3898
    %v3900 = vpop.f32.mrf.mxu0
    %v3901 = vpop.f32.mrf.mxu0
    %3902 = vdwg.mxu0
    %3903 = vmatprep.subr.bf16.mxu0 %v3000
    %3904 = vmatpush1.bf16.msra.mxu0 %v2999
    %3905 = vmatprep.subr.bf16.mxu0 %v2996
    %3906 = vmatpush1.bf16.msra.mxu0 %v2995
    %3907 = vmatprep.subr.bf16.mxu0 %v2992
    %3908 = vmatpush1.bf16.msra.mxu0 %v2991
    %3909 = vmatprep.subr.bf16.mxu0 %v2988
    %3910 = vmatpush1.bf16.msra.mxu0 %v2987
    %3911 = vmatprep.subr.bf16.mxu0 %v2984
    %3912 = vmatpush1.bf16.msra.mxu0 %v2983
    %3913 = vmatprep.subr.bf16.mxu0 %v2980
    %3914 = vmatpush1.bf16.msra.mxu0 %v2979
    %3915 = vmatprep.subr.bf16.mxu0 %v2976
    %3916 = vmatpush1.bf16.msra.mxu0 %v2975
    %3917 = vmatprep.subr.bf16.mxu0 %v2972
    %3918 = vmatpush1.bf16.msra.mxu0 %v2971
    %3919 = vmatprep.subr.bf16.mxu0 %v3032
    %3920 = vmatpush2.bf16.msra.mxu0 %v3031
    %3921 = vmatprep.subr.bf16.mxu0 %v3028
    %3922 = vmatpush2.bf16.msra.mxu0 %v3027
    %3923 = vmatprep.subr.bf16.mxu0 %v3024
    %3924 = vmatpush2.bf16.msra.mxu0 %v3023
    %3925 = vmatprep.subr.bf16.mxu0 %v3020
    %3926 = vmatpush2.bf16.msra.mxu0 %v3019
    %3927 = vmatprep.subr.bf16.mxu0 %v3016
    %3928 = vmatpush2.bf16.msra.mxu0 %v3015
    %3929 = vmatprep.subr.bf16.mxu0 %v3012
    %3930 = vmatpush2.bf16.msra.mxu0 %v3011
    %3931 = vmatprep.subr.bf16.mxu0 %v3008
    %3932 = vmatpush2.bf16.msra.mxu0 %v3007
    %3933 = vmatprep.subr.bf16.mxu0 %v3004
    %3934 = vmatpush2.bf16.msra.mxu0 %v3003
    %3935 = vmatprep.mubr.bf16.mxu0 %v634
    %3936 = vmatmul.mubr.bf16.gmra.mxu0 %v633
    %v3937 = vpop.f32.mrf.mxu0
    %v3938 = vadd.f32 %v3897, %v3937
    %v3939 = vpop.f32.mrf.mxu0
    %v3940 = vadd.f32 %v3899, %v3939
    %v3941 = vpop.f32.mrf.mxu0
    %v3942 = vpop.f32.mrf.mxu0
    %3943 = vdwg.mxu0
    %3944 = vmatprep.subr.bf16.mxu0 %v3064
    %3945 = vmatpush1.bf16.msra.mxu0 %v3063
    %3946 = vmatprep.subr.bf16.mxu0 %v3060
    %3947 = vmatpush1.bf16.msra.mxu0 %v3059
    %3948 = vmatprep.subr.bf16.mxu0 %v3056
    %3949 = vmatpush1.bf16.msra.mxu0 %v3055
    %3950 = vmatprep.subr.bf16.mxu0 %v3052
    %3951 = vmatpush1.bf16.msra.mxu0 %v3051
    %3952 = vmatprep.subr.bf16.mxu0 %v3048
    %3953 = vmatpush1.bf16.msra.mxu0 %v3047
    %3954 = vmatprep.subr.bf16.mxu0 %v3044
    %3955 = vmatpush1.bf16.msra.mxu0 %v3043
    %3956 = vmatprep.subr.bf16.mxu0 %v3040
    %3957 = vmatpush1.bf16.msra.mxu0 %v3039
    %3958 = vmatprep.subr.bf16.mxu0 %v3036
    %3959 = vmatpush1.bf16.msra.mxu0 %v3035
    %3960 = vmatprep.subr.bf16.mxu0 %v3096
    %3961 = vmatpush2.bf16.msra.mxu0 %v3095
    %3962 = vmatprep.subr.bf16.mxu0 %v3092
    %3963 = vmatpush2.bf16.msra.mxu0 %v3091
    %3964 = vmatprep.subr.bf16.mxu0 %v3088
    %3965 = vmatpush2.bf16.msra.mxu0 %v3087
    %3966 = vmatprep.subr.bf16.mxu0 %v3084
    %3967 = vmatpush2.bf16.msra.mxu0 %v3083
    %3968 = vmatprep.subr.bf16.mxu0 %v3080
    %3969 = vmatpush2.bf16.msra.mxu0 %v3079
    %3970 = vmatprep.subr.bf16.mxu0 %v3076
    %3971 = vmatpush2.bf16.msra.mxu0 %v3075
    %3972 = vmatprep.subr.bf16.mxu0 %v3072
    %3973 = vmatpush2.bf16.msra.mxu0 %v3071
    %3974 = vmatprep.subr.bf16.mxu0 %v3068
    %3975 = vmatpush2.bf16.msra.mxu0 %v3067
    %3976 = vmatprep.mubr.bf16.mxu0 %v636
    %3977 = vmatmul.mubr.bf16.gmra.mxu0 %v635
    %v3978 = vpop.f32.mrf.mxu0
    %v3979 = vadd.f32 %v3938, %v3978
    %v3980 = vpop.f32.mrf.mxu0
    %v3981 = vadd.f32 %v3940, %v3980
    %v3982 = vpop.f32.mrf.mxu0
    %v3983 = vpop.f32.mrf.mxu0
    %3984 = vdwg.mxu0
    %3985 = vmatprep.subr.bf16.mxu0 %v3128
    %3986 = vmatpush1.bf16.msra.mxu0 %v3127
    %3987 = vmatprep.subr.bf16.mxu0 %v3124
    %3988 = vmatpush1.bf16.msra.mxu0 %v3123
    %3989 = vmatprep.subr.bf16.mxu0 %v3120
    %3990 = vmatpush1.bf16.msra.mxu0 %v3119
    %3991 = vmatprep.subr.bf16.mxu0 %v3116
    %3992 = vmatpush1.bf16.msra.mxu0 %v3115
    %3993 = vmatprep.subr.bf16.mxu0 %v3112
    %3994 = vmatpush1.bf16.msra.mxu0 %v3111
    %3995 = vmatprep.subr.bf16.mxu0 %v3108
    %3996 = vmatpush1.bf16.msra.mxu0 %v3107
    %3997 = vmatprep.subr.bf16.mxu0 %v3104
    %3998 = vmatpush1.bf16.msra.mxu0 %v3103
    %3999 = vmatprep.subr.bf16.mxu0 %v3100
    %4000 = vmatpush1.bf16.msra.mxu0 %v3099
    %4001 = vmatprep.subr.bf16.mxu0 %v3160
    %4002 = vmatpush2.bf16.msra.mxu0 %v3159
    %4003 = vmatprep.subr.bf16.mxu0 %v3156
    %4004 = vmatpush2.bf16.msra.mxu0 %v3155
    %4005 = vmatprep.subr.bf16.mxu0 %v3152
    %4006 = vmatpush2.bf16.msra.mxu0 %v3151
    %4007 = vmatprep.subr.bf16.mxu0 %v3148
    %4008 = vmatpush2.bf16.msra.mxu0 %v3147
    %4009 = vmatprep.subr.bf16.mxu0 %v3144
    %4010 = vmatpush2.bf16.msra.mxu0 %v3143
    %4011 = vmatprep.subr.bf16.mxu0 %v3140
    %4012 = vmatpush2.bf16.msra.mxu0 %v3139
    %4013 = vmatprep.subr.bf16.mxu0 %v3136
    %4014 = vmatpush2.bf16.msra.mxu0 %v3135
    %4015 = vmatprep.subr.bf16.mxu0 %v3132
    %4016 = vmatpush2.bf16.msra.mxu0 %v3131
    %4017 = vmatprep.mubr.bf16.mxu0 %v638
    %4018 = vmatmul.mubr.bf16.gmra.mxu0 %v637
    %v4019 = vpop.f32.mrf.mxu0
    %v4020 = vadd.f32 %v3979, %v4019
    %v4021 = vpop.f32.mrf.mxu0
    %v4022 = vadd.f32 %v3981, %v4021
    %v4023 = vpop.f32.mrf.mxu0
    %v4024 = vpop.f32.mrf.mxu0
    %4025 = vdwg.mxu0
    %4026 = vmatprep.subr.bf16.mxu0 %v3192
    %4027 = vmatpush1.bf16.msra.mxu0 %v3191
    %4028 = vmatprep.subr.bf16.mxu0 %v3188
    %4029 = vmatpush1.bf16.msra.mxu0 %v3187
    %4030 = vmatprep.subr.bf16.mxu0 %v3184
    %4031 = vmatpush1.bf16.msra.mxu0 %v3183
    %4032 = vmatprep.subr.bf16.mxu0 %v3180
    %4033 = vmatpush1.bf16.msra.mxu0 %v3179
    %4034 = vmatprep.subr.bf16.mxu0 %v3176
    %4035 = vmatpush1.bf16.msra.mxu0 %v3175
    %4036 = vmatprep.subr.bf16.mxu0 %v3172
    %4037 = vmatpush1.bf16.msra.mxu0 %v3171
    %4038 = vmatprep.subr.bf16.mxu0 %v3168
    %4039 = vmatpush1.bf16.msra.mxu0 %v3167
    %4040 = vmatprep.subr.bf16.mxu0 %v3164
    %4041 = vmatpush1.bf16.msra.mxu0 %v3163
    %4042 = vmatprep.subr.bf16.mxu0 %v3224
    %4043 = vmatpush2.bf16.msra.mxu0 %v3223
    %4044 = vmatprep.subr.bf16.mxu0 %v3220
    %4045 = vmatpush2.bf16.msra.mxu0 %v3219
    %4046 = vmatprep.subr.bf16.mxu0 %v3216
    %4047 = vmatpush2.bf16.msra.mxu0 %v3215
    %4048 = vmatprep.subr.bf16.mxu0 %v3212
    %4049 = vmatpush2.bf16.msra.mxu0 %v3211
    %4050 = vmatprep.subr.bf16.mxu0 %v3208
    %4051 = vmatpush2.bf16.msra.mxu0 %v3207
    %4052 = vmatprep.subr.bf16.mxu0 %v3204
    %4053 = vmatpush2.bf16.msra.mxu0 %v3203
    %4054 = vmatprep.subr.bf16.mxu0 %v3200
    %4055 = vmatpush2.bf16.msra.mxu0 %v3199
    %4056 = vmatprep.subr.bf16.mxu0 %v3196
    %4057 = vmatpush2.bf16.msra.mxu0 %v3195
    %4058 = vmatprep.mubr.bf16.mxu0 %v640
    %4059 = vmatmul.mubr.bf16.gmra.mxu0 %v639
    %v4060 = vpop.f32.mrf.mxu0
    %v4061 = vadd.f32 %v4020, %v4060
    %v4062 = vpop.f32.mrf.mxu0
    %v4063 = vadd.f32 %v4022, %v4062
    %v4064 = vpop.f32.mrf.mxu0
    %v4065 = vpop.f32.mrf.mxu0
    %4066 = vdwg.mxu0
    %4067 = vmatprep.subr.bf16.mxu0 %v2746
    %4068 = vmatpush1.bf16.msra.mxu0 %v2745
    %4069 = vmatprep.subr.bf16.mxu0 %v2742
    %4070 = vmatpush1.bf16.msra.mxu0 %v2741
    %4071 = vmatprep.subr.bf16.mxu0 %v2738
    %4072 = vmatpush1.bf16.msra.mxu0 %v2737
    %4073 = vmatprep.subr.bf16.mxu0 %v2734
    %4074 = vmatpush1.bf16.msra.mxu0 %v2733
    %4075 = vmatprep.subr.bf16.mxu0 %v2730
    %4076 = vmatpush1.bf16.msra.mxu0 %v2729
    %4077 = vmatprep.subr.bf16.mxu0 %v2726
    %4078 = vmatpush1.bf16.msra.mxu0 %v2725
    %4079 = vmatprep.subr.bf16.mxu0 %v2722
    %4080 = vmatpush1.bf16.msra.mxu0 %v2721
    %4081 = vmatprep.subr.bf16.mxu0 %v2718
    %4082 = vmatpush1.bf16.msra.mxu0 %v2717
    %4083 = vmatprep.subr.bf16.mxu0 %v2778
    %4084 = vmatpush2.bf16.msra.mxu0 %v2777
    %4085 = vmatprep.subr.bf16.mxu0 %v2774
    %4086 = vmatpush2.bf16.msra.mxu0 %v2773
    %4087 = vmatprep.subr.bf16.mxu0 %v2770
    %4088 = vmatpush2.bf16.msra.mxu0 %v2769
    %4089 = vmatprep.subr.bf16.mxu0 %v2766
    %4090 = vmatpush2.bf16.msra.mxu0 %v2765
    %4091 = vmatprep.subr.bf16.mxu0 %v2762
    %4092 = vmatpush2.bf16.msra.mxu0 %v2761
    %4093 = vmatprep.subr.bf16.mxu0 %v2758
    %4094 = vmatpush2.bf16.msra.mxu0 %v2757
    %4095 = vmatprep.subr.bf16.mxu0 %v2754
    %4096 = vmatpush2.bf16.msra.mxu0 %v2753
    %4097 = vmatprep.subr.bf16.mxu0 %v2750
    %4098 = vmatpush2.bf16.msra.mxu0 %v2749
    %4099 = vmatprep.mubr.bf16.mxu0 %v626
    %4100 = vmatmul.mubr.bf16.gmra.mxu0 %v625
    %v4101 = vpop.f32.mrf.mxu0
    %v4102 = vadd.f32 %v1170, %v4101
    %v4103 = vpop.f32.mrf.mxu0
    %v4104 = vadd.f32 %v1174, %v4103
    %v4105 = vpop.f32.mrf.mxu0
    %v4106 = vpop.f32.mrf.mxu0
    %4107 = vdwg.mxu0
    %4108 = vmatprep.subr.bf16.mxu0 %v2810
    %4109 = vmatpush1.bf16.msra.mxu0 %v2809
    %4110 = vmatprep.subr.bf16.mxu0 %v2806
    %4111 = vmatpush1.bf16.msra.mxu0 %v2805
    %4112 = vmatprep.subr.bf16.mxu0 %v2802
    %4113 = vmatpush1.bf16.msra.mxu0 %v2801
    %4114 = vmatprep.subr.bf16.mxu0 %v2798
    %4115 = vmatpush1.bf16.msra.mxu0 %v2797
    %4116 = vmatprep.subr.bf16.mxu0 %v2794
    %4117 = vmatpush1.bf16.msra.mxu0 %v2793
    %4118 = vmatprep.subr.bf16.mxu0 %v2790
    %4119 = vmatpush1.bf16.msra.mxu0 %v2789
    %4120 = vmatprep.subr.bf16.mxu0 %v2786
    %4121 = vmatpush1.bf16.msra.mxu0 %v2785
    %4122 = vmatprep.subr.bf16.mxu0 %v2782
    %4123 = vmatpush1.bf16.msra.mxu0 %v2781
    %4124 = vmatprep.subr.bf16.mxu0 %v2842
    %4125 = vmatpush2.bf16.msra.mxu0 %v2841
    %4126 = vmatprep.subr.bf16.mxu0 %v2838
    %4127 = vmatpush2.bf16.msra.mxu0 %v2837
    %4128 = vmatprep.subr.bf16.mxu0 %v2834
    %4129 = vmatpush2.bf16.msra.mxu0 %v2833
    %4130 = vmatprep.subr.bf16.mxu0 %v2830
    %4131 = vmatpush2.bf16.msra.mxu0 %v2829
    %4132 = vmatprep.subr.bf16.mxu0 %v2826
    %4133 = vmatpush2.bf16.msra.mxu0 %v2825
    %4134 = vmatprep.subr.bf16.mxu0 %v2822
    %4135 = vmatpush2.bf16.msra.mxu0 %v2821
    %4136 = vmatprep.subr.bf16.mxu0 %v2818
    %4137 = vmatpush2.bf16.msra.mxu0 %v2817
    %4138 = vmatprep.subr.bf16.mxu0 %v2814
    %4139 = vmatpush2.bf16.msra.mxu0 %v2813
    %4140 = vmatprep.mubr.bf16.mxu0 %v628
    %4141 = vmatmul.mubr.bf16.gmra.mxu0 %v627
    %v4142 = vpop.f32.mrf.mxu0
    %v4143 = vadd.f32 %v4102, %v4142
    %v4144 = vpop.f32.mrf.mxu0
    %v4145 = vadd.f32 %v4104, %v4144
    %v4146 = vpop.f32.mrf.mxu0
    %v4147 = vpop.f32.mrf.mxu0
    %4148 = vdwg.mxu0
    %4149 = vmatprep.subr.bf16.mxu0 %v2874
    %4150 = vmatpush1.bf16.msra.mxu0 %v2873
    %4151 = vmatprep.subr.bf16.mxu0 %v2870
    %4152 = vmatpush1.bf16.msra.mxu0 %v2869
    %4153 = vmatprep.subr.bf16.mxu0 %v2866
    %4154 = vmatpush1.bf16.msra.mxu0 %v2865
    %4155 = vmatprep.subr.bf16.mxu0 %v2862
    %4156 = vmatpush1.bf16.msra.mxu0 %v2861
    %4157 = vmatprep.subr.bf16.mxu0 %v2858
    %4158 = vmatpush1.bf16.msra.mxu0 %v2857
    %4159 = vmatprep.subr.bf16.mxu0 %v2854
    %4160 = vmatpush1.bf16.msra.mxu0 %v2853
    %4161 = vmatprep.subr.bf16.mxu0 %v2850
    %4162 = vmatpush1.bf16.msra.mxu0 %v2849
    %4163 = vmatprep.subr.bf16.mxu0 %v2846
    %4164 = vmatpush1.bf16.msra.mxu0 %v2845
    %4165 = vmatprep.subr.bf16.mxu0 %v2906
    %4166 = vmatpush2.bf16.msra.mxu0 %v2905
    %4167 = vmatprep.subr.bf16.mxu0 %v2902
    %4168 = vmatpush2.bf16.msra.mxu0 %v2901
    %4169 = vmatprep.subr.bf16.mxu0 %v2898
    %4170 = vmatpush2.bf16.msra.mxu0 %v2897
    %4171 = vmatprep.subr.bf16.mxu0 %v2894
    %4172 = vmatpush2.bf16.msra.mxu0 %v2893
    %4173 = vmatprep.subr.bf16.mxu0 %v2890
    %4174 = vmatpush2.bf16.msra.mxu0 %v2889
    %4175 = vmatprep.subr.bf16.mxu0 %v2886
    %4176 = vmatpush2.bf16.msra.mxu0 %v2885
    %4177 = vmatprep.subr.bf16.mxu0 %v2882
    %4178 = vmatpush2.bf16.msra.mxu0 %v2881
    %4179 = vmatprep.subr.bf16.mxu0 %v2878
    %4180 = vmatpush2.bf16.msra.mxu0 %v2877
    %4181 = vmatprep.mubr.bf16.mxu0 %v630
    %4182 = vmatmul.mubr.bf16.gmra.mxu0 %v629
    %v4183 = vpop.f32.mrf.mxu0
    %v4184 = vadd.f32 %v4143, %v4183
    %v4185 = vpop.f32.mrf.mxu0
    %v4186 = vadd.f32 %v4145, %v4185
    %v4187 = vpop.f32.mrf.mxu0
    %v4188 = vpop.f32.mrf.mxu0
    %4189 = vdwg.mxu0
    %4190 = vmatprep.subr.bf16.mxu0 %v2938
    %4191 = vmatpush1.bf16.msra.mxu0 %v2937
    %4192 = vmatprep.subr.bf16.mxu0 %v2934
    %4193 = vmatpush1.bf16.msra.mxu0 %v2933
    %4194 = vmatprep.subr.bf16.mxu0 %v2930
    %4195 = vmatpush1.bf16.msra.mxu0 %v2929
    %4196 = vmatprep.subr.bf16.mxu0 %v2926
    %4197 = vmatpush1.bf16.msra.mxu0 %v2925
    %4198 = vmatprep.subr.bf16.mxu0 %v2922
    %4199 = vmatpush1.bf16.msra.mxu0 %v2921
    %4200 = vmatprep.subr.bf16.mxu0 %v2918
    %4201 = vmatpush1.bf16.msra.mxu0 %v2917
    %4202 = vmatprep.subr.bf16.mxu0 %v2914
    %4203 = vmatpush1.bf16.msra.mxu0 %v2913
    %4204 = vmatprep.subr.bf16.mxu0 %v2910
    %4205 = vmatpush1.bf16.msra.mxu0 %v2909
    %4206 = vmatprep.subr.bf16.mxu0 %v2970
    %4207 = vmatpush2.bf16.msra.mxu0 %v2969
    %4208 = vmatprep.subr.bf16.mxu0 %v2966
    %4209 = vmatpush2.bf16.msra.mxu0 %v2965
    %4210 = vmatprep.subr.bf16.mxu0 %v2962
    %4211 = vmatpush2.bf16.msra.mxu0 %v2961
    %4212 = vmatprep.subr.bf16.mxu0 %v2958
    %4213 = vmatpush2.bf16.msra.mxu0 %v2957
    %4214 = vmatprep.subr.bf16.mxu0 %v2954
    %4215 = vmatpush2.bf16.msra.mxu0 %v2953
    %4216 = vmatprep.subr.bf16.mxu0 %v2950
    %4217 = vmatpush2.bf16.msra.mxu0 %v2949
    %4218 = vmatprep.subr.bf16.mxu0 %v2946
    %4219 = vmatpush2.bf16.msra.mxu0 %v2945
    %4220 = vmatprep.subr.bf16.mxu0 %v2942
    %4221 = vmatpush2.bf16.msra.mxu0 %v2941
    %4222 = vmatprep.mubr.bf16.mxu0 %v632
    %4223 = vmatmul.mubr.bf16.gmra.mxu0 %v631
    %v4224 = vpop.f32.mrf.mxu0
    %v4225 = vadd.f32 %v4184, %v4224
    %v4226 = vpop.f32.mrf.mxu0
    %v4227 = vadd.f32 %v4186, %v4226
    %v4228 = vpop.f32.mrf.mxu0
    %v4229 = vpop.f32.mrf.mxu0
    %4230 = vdwg.mxu0
    %4231 = vmatprep.subr.bf16.mxu0 %v3002
    %4232 = vmatpush1.bf16.msra.mxu0 %v3001
    %4233 = vmatprep.subr.bf16.mxu0 %v2998
    %4234 = vmatpush1.bf16.msra.mxu0 %v2997
    %4235 = vmatprep.subr.bf16.mxu0 %v2994
    %4236 = vmatpush1.bf16.msra.mxu0 %v2993
    %4237 = vmatprep.subr.bf16.mxu0 %v2990
    %4238 = vmatpush1.bf16.msra.mxu0 %v2989
    %4239 = vmatprep.subr.bf16.mxu0 %v2986
    %4240 = vmatpush1.bf16.msra.mxu0 %v2985
    %4241 = vmatprep.subr.bf16.mxu0 %v2982
    %4242 = vmatpush1.bf16.msra.mxu0 %v2981
    %4243 = vmatprep.subr.bf16.mxu0 %v2978
    %4244 = vmatpush1.bf16.msra.mxu0 %v2977
    %4245 = vmatprep.subr.bf16.mxu0 %v2974
    %4246 = vmatpush1.bf16.msra.mxu0 %v2973
    %4247 = vmatprep.subr.bf16.mxu0 %v3034
    %4248 = vmatpush2.bf16.msra.mxu0 %v3033
    %4249 = vmatprep.subr.bf16.mxu0 %v3030
    %4250 = vmatpush2.bf16.msra.mxu0 %v3029
    %4251 = vmatprep.subr.bf16.mxu0 %v3026
    %4252 = vmatpush2.bf16.msra.mxu0 %v3025
    %4253 = vmatprep.subr.bf16.mxu0 %v3022
    %4254 = vmatpush2.bf16.msra.mxu0 %v3021
    %4255 = vmatprep.subr.bf16.mxu0 %v3018
    %4256 = vmatpush2.bf16.msra.mxu0 %v3017
    %4257 = vmatprep.subr.bf16.mxu0 %v3014
    %4258 = vmatpush2.bf16.msra.mxu0 %v3013
    %4259 = vmatprep.subr.bf16.mxu0 %v3010
    %4260 = vmatpush2.bf16.msra.mxu0 %v3009
    %4261 = vmatprep.subr.bf16.mxu0 %v3006
    %4262 = vmatpush2.bf16.msra.mxu0 %v3005
    %4263 = vmatprep.mubr.bf16.mxu0 %v634
    %4264 = vmatmul.mubr.bf16.gmra.mxu0 %v633
    %v4265 = vpop.f32.mrf.mxu0
    %v4266 = vadd.f32 %v4225, %v4265
    %v4267 = vpop.f32.mrf.mxu0
    %v4268 = vadd.f32 %v4227, %v4267
    %v4269 = vpop.f32.mrf.mxu0
    %v4270 = vpop.f32.mrf.mxu0
    %4271 = vdwg.mxu0
    %4272 = vmatprep.subr.bf16.mxu0 %v3066
    %4273 = vmatpush1.bf16.msra.mxu0 %v3065
    %4274 = vmatprep.subr.bf16.mxu0 %v3062
    %4275 = vmatpush1.bf16.msra.mxu0 %v3061
    %4276 = vmatprep.subr.bf16.mxu0 %v3058
    %4277 = vmatpush1.bf16.msra.mxu0 %v3057
    %4278 = vmatprep.subr.bf16.mxu0 %v3054
    %4279 = vmatpush1.bf16.msra.mxu0 %v3053
    %4280 = vmatprep.subr.bf16.mxu0 %v3050
    %4281 = vmatpush1.bf16.msra.mxu0 %v3049
    %4282 = vmatprep.subr.bf16.mxu0 %v3046
    %4283 = vmatpush1.bf16.msra.mxu0 %v3045
    %4284 = vmatprep.subr.bf16.mxu0 %v3042
    %4285 = vmatpush1.bf16.msra.mxu0 %v3041
    %4286 = vmatprep.subr.bf16.mxu0 %v3038
    %4287 = vmatpush1.bf16.msra.mxu0 %v3037
    %4288 = vmatprep.subr.bf16.mxu0 %v3098
    %4289 = vmatpush2.bf16.msra.mxu0 %v3097
    %4290 = vmatprep.subr.bf16.mxu0 %v3094
    %4291 = vmatpush2.bf16.msra.mxu0 %v3093
    %4292 = vmatprep.subr.bf16.mxu0 %v3090
    %4293 = vmatpush2.bf16.msra.mxu0 %v3089
    %4294 = vmatprep.subr.bf16.mxu0 %v3086
    %4295 = vmatpush2.bf16.msra.mxu0 %v3085
    %4296 = vmatprep.subr.bf16.mxu0 %v3082
    %4297 = vmatpush2.bf16.msra.mxu0 %v3081
    %4298 = vmatprep.subr.bf16.mxu0 %v3078
    %4299 = vmatpush2.bf16.msra.mxu0 %v3077
    %4300 = vmatprep.subr.bf16.mxu0 %v3074
    %4301 = vmatpush2.bf16.msra.mxu0 %v3073
    %4302 = vmatprep.subr.bf16.mxu0 %v3070
    %4303 = vmatpush2.bf16.msra.mxu0 %v3069
    %4304 = vmatprep.mubr.bf16.mxu0 %v636
    %4305 = vmatmul.mubr.bf16.gmra.mxu0 %v635
    %v4306 = vpop.f32.mrf.mxu0
    %v4307 = vadd.f32 %v4266, %v4306
    %v4308 = vpop.f32.mrf.mxu0
    %v4309 = vadd.f32 %v4268, %v4308
    %v4310 = vpop.f32.mrf.mxu0
    %v4311 = vpop.f32.mrf.mxu0
    %4312 = vdwg.mxu0
    %4313 = vmatprep.subr.bf16.mxu0 %v3130
    %4314 = vmatpush1.bf16.msra.mxu0 %v3129
    %4315 = vmatprep.subr.bf16.mxu0 %v3126
    %4316 = vmatpush1.bf16.msra.mxu0 %v3125
    %4317 = vmatprep.subr.bf16.mxu0 %v3122
    %4318 = vmatpush1.bf16.msra.mxu0 %v3121
    %4319 = vmatprep.subr.bf16.mxu0 %v3118
    %4320 = vmatpush1.bf16.msra.mxu0 %v3117
    %4321 = vmatprep.subr.bf16.mxu0 %v3114
    %4322 = vmatpush1.bf16.msra.mxu0 %v3113
    %4323 = vmatprep.subr.bf16.mxu0 %v3110
    %4324 = vmatpush1.bf16.msra.mxu0 %v3109
    %4325 = vmatprep.subr.bf16.mxu0 %v3106
    %4326 = vmatpush1.bf16.msra.mxu0 %v3105
    %4327 = vmatprep.subr.bf16.mxu0 %v3102
    %4328 = vmatpush1.bf16.msra.mxu0 %v3101
    %4329 = vmatprep.subr.bf16.mxu0 %v3162
    %4330 = vmatpush2.bf16.msra.mxu0 %v3161
    %4331 = vmatprep.subr.bf16.mxu0 %v3158
    %4332 = vmatpush2.bf16.msra.mxu0 %v3157
    %4333 = vmatprep.subr.bf16.mxu0 %v3154
    %4334 = vmatpush2.bf16.msra.mxu0 %v3153
    %4335 = vmatprep.subr.bf16.mxu0 %v3150
    %4336 = vmatpush2.bf16.msra.mxu0 %v3149
    %4337 = vmatprep.subr.bf16.mxu0 %v3146
    %4338 = vmatpush2.bf16.msra.mxu0 %v3145
    %4339 = vmatprep.subr.bf16.mxu0 %v3142
    %4340 = vmatpush2.bf16.msra.mxu0 %v3141
    %4341 = vmatprep.subr.bf16.mxu0 %v3138
    %4342 = vmatpush2.bf16.msra.mxu0 %v3137
    %4343 = vmatprep.subr.bf16.mxu0 %v3134
    %4344 = vmatpush2.bf16.msra.mxu0 %v3133
    %4345 = vmatprep.mubr.bf16.mxu0 %v638
    %4346 = vmatmul.mubr.bf16.gmra.mxu0 %v637
    %v4347 = vpop.f32.mrf.mxu0
    %v4348 = vadd.f32 %v4307, %v4347
    %v4349 = vpop.f32.mrf.mxu0
    %v4350 = vadd.f32 %v4309, %v4349
    %v4351 = vpop.f32.mrf.mxu0
    %v4352 = vpop.f32.mrf.mxu0
    %4353 = vdwg.mxu0
    %4354 = vmatprep.subr.bf16.mxu0 %v3194
    %4355 = vmatpush1.bf16.msra.mxu0 %v3193
    %4356 = vmatprep.subr.bf16.mxu0 %v3190
    %4357 = vmatpush1.bf16.msra.mxu0 %v3189
    %4358 = vmatprep.subr.bf16.mxu0 %v3186
    %4359 = vmatpush1.bf16.msra.mxu0 %v3185
    %4360 = vmatprep.subr.bf16.mxu0 %v3182
    %4361 = vmatpush1.bf16.msra.mxu0 %v3181
    %4362 = vmatprep.subr.bf16.mxu0 %v3178
    %4363 = vmatpush1.bf16.msra.mxu0 %v3177
    %4364 = vmatprep.subr.bf16.mxu0 %v3174
    %4365 = vmatpush1.bf16.msra.mxu0 %v3173
    %4366 = vmatprep.subr.bf16.mxu0 %v3170
    %4367 = vmatpush1.bf16.msra.mxu0 %v3169
    %4368 = vmatprep.subr.bf16.mxu0 %v3166
    %4369 = vmatpush1.bf16.msra.mxu0 %v3165
    %4370 = vmatprep.subr.bf16.mxu0 %v3226
    %4371 = vmatpush2.bf16.msra.mxu0 %v3225
    %4372 = vmatprep.subr.bf16.mxu0 %v3222
    %4373 = vmatpush2.bf16.msra.mxu0 %v3221
    %4374 = vmatprep.subr.bf16.mxu0 %v3218
    %4375 = vmatpush2.bf16.msra.mxu0 %v3217
    %4376 = vmatprep.subr.bf16.mxu0 %v3214
    %4377 = vmatpush2.bf16.msra.mxu0 %v3213
    %4378 = vmatprep.subr.bf16.mxu0 %v3210
    %4379 = vmatpush2.bf16.msra.mxu0 %v3209
    %4380 = vmatprep.subr.bf16.mxu0 %v3206
    %4381 = vmatpush2.bf16.msra.mxu0 %v3205
    %4382 = vmatprep.subr.bf16.mxu0 %v3202
    %4383 = vmatpush2.bf16.msra.mxu0 %v3201
    %4384 = vmatprep.subr.bf16.mxu0 %v3198
    %4385 = vmatpush2.bf16.msra.mxu0 %v3197
    %4386 = vmatprep.mubr.bf16.mxu0 %v640
    %4387 = vmatmul.mubr.bf16.gmra.mxu0 %v639
    %v4388 = vpop.f32.mrf.mxu0
    %v4389 = vadd.f32 %v4348, %v4388
    %v4390 = vpop.f32.mrf.mxu0
    %v4391 = vadd.f32 %v4350, %v4390
    %v4392 = vpop.f32.mrf.mxu0
    %v4393 = vpop.f32.mrf.mxu0
    %4394 = vdwg.mxu0
    %v4395 = vmax.f32 %v4061, 0.0
    %v4396 = vmax.f32 %v4063, 0.0
    %v4397 = vmax.f32 %v4389, 0.0
    %v4398 = vmax.f32 %v4391, 0.0
    %v4399 = vpack.c.bf16 %v4395, %v4395
    %v4400 = vpack.c.bf16 %v4396, %v4396
    %v4401 = vpack.c.bf16 %v4397, %v4397
    %v4402 = vpack.c.bf16 %v4398, %v4398
    %v4403 = vld [vmem:[#allocation10] sm:$0xf]
    %v4404 = vld [vmem:[#allocation10 + $0x4] sm:$0xf]
    %v4405 = vld [vmem:[#allocation10 + $0x8] sm:$0xf]
    %v4406 = vld [vmem:[#allocation10 + $0xc] sm:$0xf]
    %v4407 = vld [vmem:[#allocation10 + $0x10] sm:$0xf]
    %v4408 = vld [vmem:[#allocation10 + $0x14] sm:$0xf]
    %v4409 = vld [vmem:[#allocation10 + $0x18] sm:$0xf]
    %v4410 = vld [vmem:[#allocation10 + $0x1c] sm:$0xf]
    %v4411 = vld [vmem:[#allocation10 + $0x20] sm:$0xf]
    %v4412 = vld [vmem:[#allocation10 + $0x24] sm:$0xf]
    %v4413 = vld [vmem:[#allocation10 + $0x28] sm:$0xf]
    %v4414 = vld [vmem:[#allocation10 + $0x2c] sm:$0xf]
    %v4415 = vld [vmem:[#allocation10 + $0x30] sm:$0xf]
    %v4416 = vld [vmem:[#allocation10 + $0x34] sm:$0xf]
    %v4417 = vld [vmem:[#allocation10 + $0x38] sm:$0xf]
    %v4418 = vld [vmem:[#allocation10 + $0x3c] sm:$0xf]
    %v4419 = vld [vmem:[#allocation10 + $0x40] sm:$0xf]
    %v4420 = vld [vmem:[#allocation10 + $0x44] sm:$0xf]
    %v4421 = vld [vmem:[#allocation10 + $0x48] sm:$0xf]
    %v4422 = vld [vmem:[#allocation10 + $0x4c] sm:$0xf]
    %v4423 = vld [vmem:[#allocation10 + $0x50] sm:$0xf]
    %v4424 = vld [vmem:[#allocation10 + $0x54] sm:$0xf]
    %v4425 = vld [vmem:[#allocation10 + $0x58] sm:$0xf]
    %v4426 = vld [vmem:[#allocation10 + $0x5c] sm:$0xf]
    %v4427 = vld [vmem:[#allocation10 + $0x60] sm:$0xf]
    %v4428 = vld [vmem:[#allocation10 + $0x64] sm:$0xf]
    %v4429 = vld [vmem:[#allocation10 + $0x68] sm:$0xf]
    %v4430 = vld [vmem:[#allocation10 + $0x6c] sm:$0xf]
    %v4431 = vld [vmem:[#allocation10 + $0x70] sm:$0xf]
    %v4432 = vld [vmem:[#allocation10 + $0x74] sm:$0xf]
    %v4433 = vld [vmem:[#allocation10 + $0x78] sm:$0xf]
    %v4434 = vld [vmem:[#allocation10 + $0x7c] sm:$0xf]
    %v4435 = vld [vmem:[#allocation10 + $0x80] sm:$0xf]
    %v4436 = vld [vmem:[#allocation10 + $0x84] sm:$0xf]
    %v4437 = vld [vmem:[#allocation10 + $0x88] sm:$0xf]
    %v4438 = vld [vmem:[#allocation10 + $0x8c] sm:$0xf]
    %v4439 = vld [vmem:[#allocation10 + $0x90] sm:$0xf]
    %v4440 = vld [vmem:[#allocation10 + $0x94] sm:$0xf]
    %v4441 = vld [vmem:[#allocation10 + $0x98] sm:$0xf]
    %v4442 = vld [vmem:[#allocation10 + $0x9c] sm:$0xf]
    %v4443 = vld [vmem:[#allocation10 + $0xa0] sm:$0xf]
    %v4444 = vld [vmem:[#allocation10 + $0xa4] sm:$0xf]
    %v4445 = vld [vmem:[#allocation10 + $0xa8] sm:$0xf]
    %v4446 = vld [vmem:[#allocation10 + $0xac] sm:$0xf]
    %v4447 = vld [vmem:[#allocation10 + $0xb0] sm:$0xf]
    %v4448 = vld [vmem:[#allocation10 + $0xb4] sm:$0xf]
    %v4449 = vld [vmem:[#allocation10 + $0xb8] sm:$0xf]
    %v4450 = vld [vmem:[#allocation10 + $0xbc] sm:$0xf]
    %v4451 = vld [vmem:[#allocation10 + $0xc0] sm:$0xf]
    %v4452 = vld [vmem:[#allocation10 + $0xc4] sm:$0xf]
    %v4453 = vld [vmem:[#allocation10 + $0xc8] sm:$0xf]
    %v4454 = vld [vmem:[#allocation10 + $0xcc] sm:$0xf]
    %v4455 = vld [vmem:[#allocation10 + $0xd0] sm:$0xf]
    %v4456 = vld [vmem:[#allocation10 + $0xd4] sm:$0xf]
    %v4457 = vld [vmem:[#allocation10 + $0xd8] sm:$0xf]
    %v4458 = vld [vmem:[#allocation10 + $0xdc] sm:$0xf]
    %v4459 = vld [vmem:[#allocation10 + $0xe0] sm:$0xf]
    %v4460 = vld [vmem:[#allocation10 + $0xe4] sm:$0xf]
    %v4461 = vld [vmem:[#allocation10 + $0xe8] sm:$0xf]
    %v4462 = vld [vmem:[#allocation10 + $0xec] sm:$0xf]
    %v4463 = vld [vmem:[#allocation10 + $0xf0] sm:$0xf]
    %v4464 = vld [vmem:[#allocation10 + $0xf4] sm:$0xf]
    %v4465 = vld [vmem:[#allocation10 + $0xf8] sm:$0xf]
    %v4466 = vld [vmem:[#allocation10 + $0xfc] sm:$0xf]
    %v4467 = vld [vmem:[#allocation11] sm:$0x1]
    %v4469 = vlaneseq
    %v4470 = vshrl.u32 %v4469, 7
    %v4471 = vsub.s32 0, %v4470
    %v4472 = vrot.slane %v4467, %v4471
    %v4538 = vunpack.c.l.b16 %v4403
    %v4539 = vunpack.c.l.b16 %v4404
    %v4540 = vunpack.c.l.b16 %v4405
    %v4541 = vunpack.c.l.b16 %v4406
    %v4542 = vunpack.c.l.b16 %v4407
    %v4543 = vunpack.c.l.b16 %v4408
    %v4544 = vunpack.c.l.b16 %v4409
    %v4545 = vunpack.c.l.b16 %v4410
    %v4546 = vunpack.c.l.b16 %v4411
    %v4547 = vunpack.c.l.b16 %v4412
    %v4548 = vunpack.c.l.b16 %v4413
    %v4549 = vunpack.c.l.b16 %v4414
    %v4550 = vunpack.c.l.b16 %v4415
    %v4551 = vunpack.c.l.b16 %v4416
    %v4552 = vunpack.c.l.b16 %v4417
    %v4553 = vunpack.c.l.b16 %v4418
    %v4554 = vunpack.c.l.b16 %v4419
    %v4555 = vunpack.c.l.b16 %v4420
    %v4556 = vunpack.c.l.b16 %v4421
    %v4557 = vunpack.c.l.b16 %v4422
    %v4558 = vunpack.c.l.b16 %v4423
    %v4559 = vunpack.c.l.b16 %v4424
    %v4560 = vunpack.c.l.b16 %v4425
    %v4561 = vunpack.c.l.b16 %v4426
    %v4562 = vunpack.c.l.b16 %v4427
    %v4563 = vunpack.c.l.b16 %v4428
    %v4564 = vunpack.c.l.b16 %v4429
    %v4565 = vunpack.c.l.b16 %v4430
    %v4566 = vunpack.c.l.b16 %v4431
    %v4567 = vunpack.c.l.b16 %v4432
    %v4568 = vunpack.c.l.b16 %v4433
    %v4569 = vunpack.c.l.b16 %v4434
    %v4570 = vunpack.c.l.b16 %v4435
    %v4571 = vunpack.c.l.b16 %v4436
    %v4572 = vunpack.c.l.b16 %v4437
    %v4573 = vunpack.c.l.b16 %v4438
    %v4574 = vunpack.c.l.b16 %v4439
    %v4575 = vunpack.c.l.b16 %v4440
    %v4576 = vunpack.c.l.b16 %v4441
    %v4577 = vunpack.c.l.b16 %v4442
    %v4578 = vunpack.c.l.b16 %v4443
    %v4579 = vunpack.c.l.b16 %v4444
    %v4580 = vunpack.c.l.b16 %v4445
    %v4581 = vunpack.c.l.b16 %v4446
    %v4582 = vunpack.c.l.b16 %v4447
    %v4583 = vunpack.c.l.b16 %v4448
    %v4584 = vunpack.c.l.b16 %v4449
    %v4585 = vunpack.c.l.b16 %v4450
    %v4586 = vunpack.c.l.b16 %v4451
    %v4587 = vunpack.c.l.b16 %v4452
    %v4588 = vunpack.c.l.b16 %v4453
    %v4589 = vunpack.c.l.b16 %v4454
    %v4590 = vunpack.c.l.b16 %v4455
    %v4591 = vunpack.c.l.b16 %v4456
    %v4592 = vunpack.c.l.b16 %v4457
    %v4593 = vunpack.c.l.b16 %v4458
    %v4594 = vunpack.c.l.b16 %v4459
    %v4595 = vunpack.c.l.b16 %v4460
    %v4596 = vunpack.c.l.b16 %v4461
    %v4597 = vunpack.c.l.b16 %v4462
    %v4598 = vunpack.c.l.b16 %v4463
    %v4599 = vunpack.c.l.b16 %v4464
    %v4600 = vunpack.c.l.b16 %v4465
    %v4601 = vunpack.c.l.b16 %v4466
    %v4602 = vpack.c.b16 %v4539, %v4538
    %v4603 = vpack.c.b16 %v4541, %v4540
    %v4604 = vpack.c.b16 %v4543, %v4542
    %v4605 = vpack.c.b16 %v4545, %v4544
    %v4606 = vpack.c.b16 %v4547, %v4546
    %v4607 = vpack.c.b16 %v4549, %v4548
    %v4608 = vpack.c.b16 %v4551, %v4550
    %v4609 = vpack.c.b16 %v4553, %v4552
    %v4610 = vpack.c.b16 %v4555, %v4554
    %v4611 = vpack.c.b16 %v4557, %v4556
    %v4612 = vpack.c.b16 %v4559, %v4558
    %v4613 = vpack.c.b16 %v4561, %v4560
    %v4614 = vpack.c.b16 %v4563, %v4562
    %v4615 = vpack.c.b16 %v4565, %v4564
    %v4616 = vpack.c.b16 %v4567, %v4566
    %v4617 = vpack.c.b16 %v4569, %v4568
    %v4618 = vpack.c.b16 %v4571, %v4570
    %v4619 = vpack.c.b16 %v4573, %v4572
    %v4620 = vpack.c.b16 %v4575, %v4574
    %v4621 = vpack.c.b16 %v4577, %v4576
    %v4622 = vpack.c.b16 %v4579, %v4578
    %v4623 = vpack.c.b16 %v4581, %v4580
    %v4624 = vpack.c.b16 %v4583, %v4582
    %v4625 = vpack.c.b16 %v4585, %v4584
    %v4626 = vpack.c.b16 %v4587, %v4586
    %v4627 = vpack.c.b16 %v4589, %v4588
    %v4628 = vpack.c.b16 %v4591, %v4590
    %v4629 = vpack.c.b16 %v4593, %v4592
    %v4630 = vpack.c.b16 %v4595, %v4594
    %v4631 = vpack.c.b16 %v4597, %v4596
    %v4632 = vpack.c.b16 %v4599, %v4598
    %v4633 = vpack.c.b16 %v4601, %v4600
    %4666 = vmatprep.subr.bf16.mxu0 0
    %4667 = vmatpush1.bf16.msra.mxu0 %v4609
    %4668 = vmatprep.subr.bf16.mxu0 0
    %4669 = vmatpush1.bf16.msra.mxu0 %v4608
    %4670 = vmatprep.subr.bf16.mxu0 0
    %4671 = vmatpush1.bf16.msra.mxu0 %v4607
    %4672 = vmatprep.subr.bf16.mxu0 0
    %4673 = vmatpush1.bf16.msra.mxu0 %v4606
    %4674 = vmatprep.subr.bf16.mxu0 0
    %4675 = vmatpush1.bf16.msra.mxu0 %v4605
    %4676 = vmatprep.subr.bf16.mxu0 0
    %4677 = vmatpush1.bf16.msra.mxu0 %v4604
    %4678 = vmatprep.subr.bf16.mxu0 0
    %4679 = vmatpush1.bf16.msra.mxu0 %v4603
    %4680 = vmatprep.subr.bf16.mxu0 0
    %4681 = vmatpush1.bf16.msra.mxu0 %v4602
    %4682 = vmatprep.subr.bf16.mxu0 0
    %4683 = vmatpush2.bf16.msra.mxu0 %v4617
    %4684 = vmatprep.subr.bf16.mxu0 0
    %4685 = vmatpush2.bf16.msra.mxu0 %v4616
    %4686 = vmatprep.subr.bf16.mxu0 0
    %4687 = vmatpush2.bf16.msra.mxu0 %v4615
    %4688 = vmatprep.subr.bf16.mxu0 0
    %4689 = vmatpush2.bf16.msra.mxu0 %v4614
    %4690 = vmatprep.subr.bf16.mxu0 0
    %4691 = vmatpush2.bf16.msra.mxu0 %v4613
    %4692 = vmatprep.subr.bf16.mxu0 0
    %4693 = vmatpush2.bf16.msra.mxu0 %v4612
    %4694 = vmatprep.subr.bf16.mxu0 0
    %4695 = vmatpush2.bf16.msra.mxu0 %v4611
    %4696 = vmatprep.subr.bf16.mxu0 0
    %4697 = vmatpush2.bf16.msra.mxu0 %v4610
    %4698 = vmatprep.mubr.bf16.mxu0 %v4400
    %4699 = vmatmul.mubr.bf16.gmra.mxu0 %v4399
    %v4700 = vpop.f32.mrf.mxu0
    %v4701 = vadd.f32 %v4472, %v4700
    %v4702 = vpop.f32.mrf.mxu0
    %v4703 = vpop.f32.mrf.mxu0
    %v4704 = vpop.f32.mrf.mxu0
    %4705 = vdwg.mxu0
    %4706 = vmatprep.subr.bf16.mxu0 0
    %4707 = vmatpush1.bf16.msra.mxu0 %v4625
    %4708 = vmatprep.subr.bf16.mxu0 0
    %4709 = vmatpush1.bf16.msra.mxu0 %v4624
    %4710 = vmatprep.subr.bf16.mxu0 0
    %4711 = vmatpush1.bf16.msra.mxu0 %v4623
    %4712 = vmatprep.subr.bf16.mxu0 0
    %4713 = vmatpush1.bf16.msra.mxu0 %v4622
    %4714 = vmatprep.subr.bf16.mxu0 0
    %4715 = vmatpush1.bf16.msra.mxu0 %v4621
    %4716 = vmatprep.subr.bf16.mxu0 0
    %4717 = vmatpush1.bf16.msra.mxu0 %v4620
    %4718 = vmatprep.subr.bf16.mxu0 0
    %4719 = vmatpush1.bf16.msra.mxu0 %v4619
    %4720 = vmatprep.subr.bf16.mxu0 0
    %4721 = vmatpush1.bf16.msra.mxu0 %v4618
    %4722 = vmatprep.subr.bf16.mxu0 0
    %4723 = vmatpush2.bf16.msra.mxu0 %v4633
    %4724 = vmatprep.subr.bf16.mxu0 0
    %4725 = vmatpush2.bf16.msra.mxu0 %v4632
    %4726 = vmatprep.subr.bf16.mxu0 0
    %4727 = vmatpush2.bf16.msra.mxu0 %v4631
    %4728 = vmatprep.subr.bf16.mxu0 0
    %4729 = vmatpush2.bf16.msra.mxu0 %v4630
    %4730 = vmatprep.subr.bf16.mxu0 0
    %4731 = vmatpush2.bf16.msra.mxu0 %v4629
    %4732 = vmatprep.subr.bf16.mxu0 0
    %4733 = vmatpush2.bf16.msra.mxu0 %v4628
    %4734 = vmatprep.subr.bf16.mxu0 0
    %4735 = vmatpush2.bf16.msra.mxu0 %v4627
    %4736 = vmatprep.subr.bf16.mxu0 0
    %4737 = vmatpush2.bf16.msra.mxu0 %v4626
    %4738 = vmatprep.mubr.bf16.mxu0 %v4402
    %4739 = vmatmul.mubr.bf16.gmra.mxu0 %v4401
    %v4740 = vpop.f32.mrf.mxu0
    %v4741 = vadd.f32 %v4701, %v4740
    %v4742 = vpop.f32.mrf.mxu0
    %v4743 = vpop.f32.mrf.mxu0
    %v4744 = vpop.f32.mrf.mxu0
    %4745 = vdwg.mxu0
    %v4746 = vmax.f32 %v4741, 0.0
    %v4747 = vpack.c.bf16 %v4746, %v4746
    %v4748 = vld [vmem:[#allocation13] sm:$0xf]
    %v4749 = vld [vmem:[#allocation13 + $0x4] sm:$0xf]
    %v4750 = vld [vmem:[#allocation13 + $0x8] sm:$0xf]
    %v4751 = vld [vmem:[#allocation13 + $0xc] sm:$0xf]
    %v4752 = vld [vmem:[#allocation13 + $0x10] sm:$0xf]
    %v4753 = vld [vmem:[#allocation13 + $0x14] sm:$0xf]
    %v4754 = vld [vmem:[#allocation13 + $0x18] sm:$0xf]
    %v4755 = vld [vmem:[#allocation13 + $0x1c] sm:$0xf]
    %v4756 = vld [vmem:[#allocation13 + $0x20] sm:$0xf]
    %v4757 = vld [vmem:[#allocation13 + $0x24] sm:$0xf]
    %v4758 = vld [vmem:[#allocation13 + $0x28] sm:$0xf]
    %v4759 = vld [vmem:[#allocation13 + $0x2c] sm:$0xf]
    %v4760 = vld [vmem:[#allocation13 + $0x30] sm:$0xf]
    %v4761 = vld [vmem:[#allocation13 + $0x34] sm:$0xf]
    %v4762 = vld [vmem:[#allocation13 + $0x38] sm:$0xf]
    %v4763 = vld [vmem:[#allocation13 + $0x3c] sm:$0xf]
    %v4764 = vld [vmem:[#allocation14] sm:$0x1]
    %v4766 = vlaneseq
    %v4767 = vshrl.u32 %v4766, 7
    %v4768 = vsub.s32 0, %v4767
    %v4769 = vrot.slane %v4764, %v4768
    %v4787 = vunpack.c.l.b16 %v4748
    %v4788 = vunpack.c.l.b16 %v4749
    %v4789 = vunpack.c.l.b16 %v4750
    %v4790 = vunpack.c.l.b16 %v4751
    %v4791 = vunpack.c.l.b16 %v4752
    %v4792 = vunpack.c.l.b16 %v4753
    %v4793 = vunpack.c.l.b16 %v4754
    %v4794 = vunpack.c.l.b16 %v4755
    %v4795 = vunpack.c.l.b16 %v4756
    %v4796 = vunpack.c.l.b16 %v4757
    %v4797 = vunpack.c.l.b16 %v4758
    %v4798 = vunpack.c.l.b16 %v4759
    %v4799 = vunpack.c.l.b16 %v4760
    %v4800 = vunpack.c.l.b16 %v4761
    %v4801 = vunpack.c.l.b16 %v4762
    %v4802 = vunpack.c.l.b16 %v4763
    %v4803 = vpack.c.b16 %v4788, %v4787
    %v4804 = vpack.c.b16 %v4790, %v4789
    %v4805 = vpack.c.b16 %v4792, %v4791
    %v4806 = vpack.c.b16 %v4794, %v4793
    %v4807 = vpack.c.b16 %v4796, %v4795
    %v4808 = vpack.c.b16 %v4798, %v4797
    %v4809 = vpack.c.b16 %v4800, %v4799
    %v4810 = vpack.c.b16 %v4802, %v4801
    %4819 = vmatprep.subr.bf16.mxu0 0
    %4820 = vmatpush1.bf16.msra.mxu0 %v4810
    %4821 = vmatprep.subr.bf16.mxu0 0
    %4822 = vmatpush1.bf16.msra.mxu0 %v4809
    %4823 = vmatprep.subr.bf16.mxu0 0
    %4824 = vmatpush1.bf16.msra.mxu0 %v4808
    %4825 = vmatprep.subr.bf16.mxu0 0
    %4826 = vmatpush1.bf16.msra.mxu0 %v4807
    %4827 = vmatprep.subr.bf16.mxu0 0
    %4828 = vmatpush1.bf16.msra.mxu0 %v4806
    %4829 = vmatprep.subr.bf16.mxu0 0
    %4830 = vmatpush1.bf16.msra.mxu0 %v4805
    %4831 = vmatprep.subr.bf16.mxu0 0
    %4832 = vmatpush1.bf16.msra.mxu0 %v4804
    %4833 = vmatprep.subr.bf16.mxu0 0
    %4834 = vmatpush1.bf16.msra.mxu0 %v4803
    %4835 = vmatprep.subr.bf16.mxu0 0
    %4836 = vmatpush2.bf16.msra.mxu0 0
    %4837 = vmatprep.subr.bf16.mxu0 0
    %4838 = vmatpush2.bf16.msra.mxu0 0
    %4839 = vmatprep.subr.bf16.mxu0 0
    %4840 = vmatpush2.bf16.msra.mxu0 0
    %4841 = vmatprep.subr.bf16.mxu0 0
    %4842 = vmatpush2.bf16.msra.mxu0 0
    %4843 = vmatprep.subr.bf16.mxu0 0
    %4844 = vmatpush2.bf16.msra.mxu0 0
    %4845 = vmatprep.subr.bf16.mxu0 0
    %4846 = vmatpush2.bf16.msra.mxu0 0
    %4847 = vmatprep.subr.bf16.mxu0 0
    %4848 = vmatpush2.bf16.msra.mxu0 0
    %4849 = vmatprep.subr.bf16.mxu0 0
    %4850 = vmatpush2.bf16.msra.mxu0 0
    %4851 = vmatprep.mubr.bf16.mxu0 0
    %4852 = vmatmul.mubr.bf16.gmra.mxu0 %v4747
    %v4853 = vpop.f32.mrf.mxu0
    %v4854 = vadd.f32 %v4769, %v4853
    %v4855 = vpop.f32.mrf.mxu0
    %v4856 = vpop.f32.mrf.mxu0
    %v4857 = vpop.f32.mrf.mxu0
    %4858 = vdwg.mxu0
    %4859 = vst [vmem:[#allocation16] sm:$0x3] %v4854
    // Predicated region
    $region70: #{dqn_forward.1} parent=1 // pred_check
      _
    $region71: #{dqn_forward.1} parent=1 // pred_check_branch
      %4861 = sbr.rel (0) target = $region73
    $region72: #{dqn_forward.1} parent=1 // pred_region
      %s4863 = ssub.s32 32, 32
      %4864 = vsyncadd [#allocation7], %s4863
      %s4866 = sshll.u32 [#allocation16], 4
      %s4867 = int_to_ptr.vmem [resolvable:$true] %s4866
      %4869 = dma.vmem_to_hbm [thread:$0]  %s4867, 32, %s11, [#allocation7]
    $region73: #{dqn_forward.1} parent=1 // pred_fallthru
      _
    // Predicated region
    $region74: #{dqn_forward.1} parent=1 // pred_check
      _
    $region75: #{dqn_forward.1} parent=1 // pred_check_branch
      %4871 = sbr.rel (0) target = $region77
    $region76: #{dqn_forward.1} parent=1 // pred_region
      %4872 = dma.done [#allocation7], 32
    $region77: #{dqn_forward.1} parent=1 // pred_fallthru
      _
    %4873 = vsyncpa [#allocation6], 1
    %4874 = vsyncpa [#allocation9], 1
    %4875 = vsyncpa [#allocation12], 1
    %4876 = vsyncpa [#allocation15], 1
    %4877 = vsyncpa [#allocation7], 1
  %4878 = vsyncmov [#allocation4]
  %s4879 = vpop.sfrf %4878
  %p4880 = scmp.eq.s32.totalorder %s4879, 0
  %p4881 = pneg %p4880
  %4883 = shalt.err (%p4881)

</llo_original>
